<compile_context>
chip_gen: v7x
topology: tpu7x:2x2x1
jax: 0.10.0
libtpu: 0.0.40
codegen_flags: <defaults>
</compile_context>

<pallas_src>
import functools

import jax
import jax.numpy as jnp
import numpy as np
from jax import lax
from jax.experimental import pallas as pl
from jax.experimental.pallas import tpu as pltpu


# ----------------------------------------------------------------------------
# Packed-weight layout (single f32 array of shape (rows, 4*H1)).
# Section starts are 8-aligned; emb_dim-wide layers are zero-padded on the
# right to the common lane width 4*H1 (padding never read by the gate slices).
# ----------------------------------------------------------------------------
def _pack_layout(emb_dim):
    H1 = 2 * emb_dim
    E = emb_dim
    G = 4 * H1

    def up8(n):
        return ((n + 7) // 8) * 8

    off = {}
    r = 0

    def add(name, nrows):
        nonlocal r
        off[name] = r
        r = up8(r + nrows)

    add("e1_wih", 1)
    add("e1_whh", H1)
    add("e1_b", 1)
    add("e2_wih", H1)
    add("e2_whh", E)
    add("e2_b", 1)
    add("d1_wih", E)
    add("d1_whh", E)
    add("d1_b", 1)
    add("d2_wih", E)
    add("d2_whh", H1)
    add("d2_b", 1)
    add("lin", 1)
    return off, r, G


# ----------------------------------------------------------------------------
# In-kernel batched LSTM cell (PyTorch semantics, gate order i, f, g, o).
# x_side = x_t @ W_ih^T + (b_ih + b_hh), precomputed / hoisted where possible.
# h, c: (Bt, H);  x_side, gates: (Bt, >=4H);  whh: (H, >=4H).
# ----------------------------------------------------------------------------
def _lstm_step(x_side, h, c, whh, H):
    gates = x_side + jnp.dot(h, whh, preferred_element_type=jnp.float32)
    s = jax.nn.sigmoid(gates)                 # i, f, o in a single EUP pass
    g = jnp.tanh(gates[:, 2 * H:3 * H])       # tanh only on the g block
    i = s[:, 0:H]
    f = s[:, H:2 * H]
    o = s[:, 3 * H:4 * H]
    c_new = f * c + i * g
    h_new = o * jnp.tanh(c_new)
    return h_new, c_new


# ----------------------------------------------------------------------------
# Pallas kernel: full encoder + decoder forward pass for one batch tile (Bt series)
# ----------------------------------------------------------------------------
def _autoencoder_rnn_kernel(x_ref, w_ref, out_ref, enc_ref, xg_ref, hseq_ref,
                            *, emb_dim):
    off, _, _ = _pack_layout(emb_dim)
    H1 = 2 * emb_dim
    E = emb_dim
    Bt, S = x_ref.shape
    unroll = max(1, min(S, 8))            # partial unroll: overlap without code blowup

    # ---- unpack the single packed weight array (one-time static slices) -----
    e1_wih = w_ref[off["e1_wih"]:off["e1_wih"] + 1, :]       # (1, 4H1)
    e1_whh = w_ref[off["e1_whh"]:off["e1_whh"] + H1, :]      # (H1, 4H1)
    e1_b = w_ref[off["e1_b"]:off["e1_b"] + 1, :]             # (1, 4H1)
    e2_wih = w_ref[off["e2_wih"]:off["e2_wih"] + H1, :]      # (H1, 4E | zero pad)
    e2_whh = w_ref[off["e2_whh"]:off["e2_whh"] + E, :]       # (E,  4E | zero pad)
    e2_b = w_ref[off["e2_b"]:off["e2_b"] + 1, :]
    d1_wih = w_ref[off["d1_wih"]:off["d1_wih"] + E, :]       # (E,  4E | zero pad)
    d1_whh = w_ref[off["d1_whh"]:off["d1_whh"] + E, :]
    d1_b = w_ref[off["d1_b"]:off["d1_b"] + 1, :]
    d2_wih = w_ref[off["d2_wih"]:off["d2_wih"] + E, :]       # (E,  4H1)
    d2_whh = w_ref[off["d2_whh"]:off["d2_whh"] + H1, :]      # (H1, 4H1)
    d2_b = w_ref[off["d2_b"]:off["d2_b"] + 1, :]

    z_h1 = jnp.zeros((Bt, H1), jnp.float32)
    z_e = jnp.zeros((Bt, E), jnp.float32)

    # --------------------------- Encoder ------------------------------------
    # rnn1 input projection for ALL (t, b): input_size == 1, so this is a single
    # broadcast multiply; the per-step read xg_ref[t] does not depend on the
    # recurrent carry and therefore sits off the serial critical path.
    xv = x_ref[...]                                          # (Bt, S)
    xg_ref[...] = (jnp.transpose(xv)[:, :, None] * e1_wih[None, :, :]
                   + e1_b[None, :, :])                       # (S, Bt, 4H1)

    def enc_body(t, carry):
        h1, c1, h2, c2 = carry
        h1, c1 = _lstm_step(xg_ref[t], h1, c1, e1_whh, H1)
        xp2 = jnp.dot(h1, e2_wih, preferred_element_type=jnp.float32) + e2_b
        h2, c2 = _lstm_step(xp2, h2, c2, e2_whh, E)
        return (h1, c1, h2, c2)

    _, _, enc_h, _ = lax.fori_loop(0, S, enc_body, (z_h1, z_h1, z_e, z_e),
                                   unroll=unroll)
    enc_ref[...] = enc_h                                     # hidden_n -> (Bt, E)

    # --------------------------- Decoder ------------------------------------
    # Decoder input is the repeated embedding -> rnn1's input projection is
    # loop-invariant; hoist it out of the recurrence.
    xp_d1 = jnp.dot(enc_h, d1_wih, preferred_element_type=jnp.float32) + d1_b

    def dec_body(t, carry):
        h1, c1, h2, c2 = carry
        h1, c1 = _lstm_step(xp_d1, h1, c1, d1_whh, E)
        xp2 = jnp.dot(h1, d2_wih, preferred_element_type=jnp.float32) + d2_b
        h2, c2 = _lstm_step(xp2, h2, c2, d2_whh, H1)
        hseq_ref[t] = h2                                     # (Bt, H1) slab for step t
        return (h1, c1, h2, c2)

    lax.fori_loop(0, S, dec_body, (z_e, z_e, z_h1, z_h1), unroll=unroll)

    # ---- Output linear, emitted as ONE lane-dense (Bt, S) store --------------
    lin = off["lin"]
    lw = w_ref[lin:lin + 1, 0:H1]                            # (1, H1)
    lb = w_ref[lin:lin + 1, H1:H1 + 1]                       # (1, 1)
    hs = hseq_ref[...]                                       # (S, Bt, H1)
    y = jnp.sum(hs * lw[None, :, :], axis=-1)                # (S, Bt): VPU mul + lane reduce
    out_ref[...] = jnp.transpose(y) + lb                     # (Bt, S)


# ----------------------------------------------------------------------------
# Wrapper: batch of independent series, tiled over a "parallel" grid axis.
# ----------------------------------------------------------------------------
def autoencoder_rnn_forward(x, w_packed, *, seq_len, emb_dim, batch_tile=8):
    """x: (B, seq_len) or (seq_len,) f32; w_packed: packed weights.

    Returns (out (B, seq_len), enc (B, emb_dim)).  For a 1-D input this is the
    module's (torch.transpose(out, 0, 1), enc_out) with n_features == 1.
    """
    H1 = 2 * emb_dim
    x = jnp.asarray(x, jnp.float32)
    single = (x.ndim == 1)
    xb = x[None, :] if single else x
    B = xb.shape[0]
    Bt = batch_tile                          # 8 fills the vreg sublanes; >=2 tiles lets
    Bp = ((B + Bt - 1) // Bt) * Bt           # v7x split tiles across its two TCs.
    if Bp != B:
        xb = jnp.concatenate([xb, jnp.zeros((Bp - B, seq_len), jnp.float32)], axis=0)

    rows, G = w_packed.shape
    kernel = functools.partial(_autoencoder_rnn_kernel, emb_dim=emb_dim)

    out, enc = pl.pallas_call(
        kernel,
        out_shape=(jax.ShapeDtypeStruct((Bp, seq_len), jnp.float32),
                   jax.ShapeDtypeStruct((Bp, emb_dim), jnp.float32)),
        grid=(Bp // Bt,),
        in_specs=[pl.BlockSpec((Bt, seq_len), lambda b: (b, 0)),
                  pl.BlockSpec((rows, G), lambda b: (0, 0))],
        out_specs=(pl.BlockSpec((Bt, seq_len), lambda b: (b, 0)),
                   pl.BlockSpec((Bt, emb_dim), lambda b: (b, 0))),
        scratch_shapes=[pltpu.VMEM((seq_len, Bt, 4 * H1), jnp.float32),  # x @ Wih + b
                        pltpu.VMEM((seq_len, Bt, H1), jnp.float32)],     # decoder hseq
        compiler_params=pltpu.CompilerParams(
            dimension_semantics=("parallel",)),   # batch tiles -> v7x megacore
    )(xb, w_packed)
    return out[:B], enc[:B]


# ----------------------------------------------------------------------------
# Deterministic parameter init (PyTorch-style U(-1/sqrt(H), 1/sqrt(H)))
# ----------------------------------------------------------------------------
def _init_lstm_params(key, input_size, hidden_size):
    k = 1.0 / float(np.sqrt(hidden_size))
    k1, k2, k3, k4 = jax.random.split(key, 4)
    wih = jax.random.uniform(k1, (4 * hidden_size, input_size), jnp.float32, -k, k)
    whh = jax.random.uniform(k2, (4 * hidden_size, hidden_size), jnp.float32, -k, k)
    bih = jax.random.uniform(k3, (4 * hidden_size,), jnp.float32, -k, k)
    bhh = jax.random.uniform(k4, (4 * hidden_size,), jnp.float32, -k, k)
    # Kernel-friendly form: transposed weights, fused bias as (1, 4H).
    return wih.T, whh.T, (bih + bhh)[None, :]


def make_params(key, seq_len, n_features, emb_dim):
    assert n_features == 1, "module only shape-checks for n_features == 1"
    H1 = 2 * emb_dim
    ks = jax.random.split(key, 5)
    e1 = _init_lstm_params(ks[0], 1, H1)              # encoder rnn1
    e2 = _init_lstm_params(ks[1], H1, emb_dim)        # encoder rnn2
    d1 = _init_lstm_params(ks[2], emb_dim, emb_dim)   # decoder rnn1
    d2 = _init_lstm_params(ks[3], emb_dim, H1)        # decoder rnn2
    kl1, kl2 = jax.random.split(ks[4])
    k = 1.0 / float(np.sqrt(H1))
    lin_w = jax.random.uniform(kl1, (n_features, H1), jnp.float32, -k, k)
    lin_b = jax.random.uniform(kl2, (n_features,), jnp.float32, -k, k)
    return (*e1, *e2, *d1, *d2, lin_w.T, lin_b[None, :])


def pack_params(params, emb_dim):
    """Pack the 14 per-layer tensors into one (rows, 4*H1) f32 array."""
    (e1_wih, e1_whh, e1_b, e2_wih, e2_whh, e2_b,
     d1_wih, d1_whh, d1_b, d2_wih, d2_whh, d2_b, lin_w, lin_b) = params
    off, rows, G = _pack_layout(emb_dim)
    H1 = 2 * emb_dim
    W = jnp.zeros((rows, G), jnp.float32)

    def put(W, name, a):
        a = jnp.asarray(a, jnp.float32)
        r0 = off[name]
        return W.at[r0:r0 + a.shape[0], 0:a.shape[1]].set(a)

    W = put(W, "e1_wih", e1_wih)
    W = put(W, "e1_whh", e1_whh)
    W = put(W, "e1_b", e1_b)
    W = put(W, "e2_wih", e2_wih)
    W = put(W, "e2_whh", e2_whh)
    W = put(W, "e2_b", e2_b)
    W = put(W, "d1_wih", d1_wih)
    W = put(W, "d1_whh", d1_whh)
    W = put(W, "d1_b", d1_b)
    W = put(W, "d2_wih", d2_wih)
    W = put(W, "d2_whh", d2_whh)
    W = put(W, "d2_b", d2_b)
    lin_row = jnp.concatenate([lin_w.reshape(1, H1), lin_b.reshape(1, 1)], axis=1)
    W = W.at[off["lin"]:off["lin"] + 1, 0:H1 + 1].set(lin_row)
    return W


# ----------------------------------------------------------------------------
# Pure-JAX reference (same math, python loop) for verification — single series.
# ----------------------------------------------------------------------------
def _ref_lstm_cell(x_t, h, c, wih_t, whh_t, b, H):
    gates = x_t @ wih_t + h @ whh_t + b
    i = jax.nn.sigmoid(gates[:, 0 * H:1 * H])
    f = jax.nn.sigmoid(gates[:, 1 * H:2 * H])
    g = jnp.tanh(gates[:, 2 * H:3 * H])
    o = jax.nn.sigmoid(gates[:, 3 * H:4 * H])
    c_new = f * c + i * g
    return o * jnp.tanh(c_new), c_new


def reference_forward(x, params, *, seq_len, emb_dim):
    (e1_wih, e1_whh, e1_b, e2_wih, e2_whh, e2_b,
     d1_wih, d1_whh, d1_b, d2_wih, d2_whh, d2_b, lin_w, lin_b) = params
    H1 = 2 * emb_dim
    E = emb_dim
    x2 = x.reshape(seq_len, 1)

    h1 = jnp.zeros((1, H1)); c1 = jnp.zeros((1, H1))
    h2 = jnp.zeros((1, E)); c2 = jnp.zeros((1, E))
    for t in range(seq_len):
        h1, c1 = _ref_lstm_cell(x2[t:t + 1, :], h1, c1, e1_wih, e1_whh, e1_b, H1)
        h2, c2 = _ref_lstm_cell(h1, h2, c2, e2_wih, e2_whh, e2_b, E)
    enc = h2

    hd1 = jnp.zeros((1, E)); cd1 = jnp.zeros((1, E))
    hd2 = jnp.zeros((1, H1)); cd2 = jnp.zeros((1, H1))
    hs = []
    for _ in range(seq_len):
        hd1, cd1 = _ref_lstm_cell(enc, hd1, cd1, d1_wih, d1_whh, d1_b, E)
        hd2, cd2 = _ref_lstm_cell(hd1, hd2, cd2, d2_wih, d2_whh, d2_b, H1)
        hs.append(hd2)
    hseq = jnp.concatenate(hs, axis=0)                        # (seq_len, H1)
    out = hseq @ lin_w + lin_b                                # (seq_len, 1)
    return out.T, enc


# ----------------------------------------------------------------------------
if __name__ == "__main__":
    seq_len = 8
    n_features = 1        # required by the module's LSTM shape contract
    emb_dim = 4           # hidden_dim = 8
    batch = 16            # 2 batch tiles of 8 -> exercises the "parallel" grid axis

    key = jax.random.PRNGKey(0)
    kx, kp = jax.random.split(key)
    x = jax.random.normal(kx, (batch, seq_len), jnp.float32)
    params = make_params(kp, seq_len, n_features, emb_dim)
    w_packed = pack_params(params, emb_dim)

    fwd = jax.jit(functools.partial(autoencoder_rnn_forward,
                                    seq_len=seq_len, emb_dim=emb_dim))
    out, enc = fwd(x, w_packed)
    jax.block_until_ready((out, enc))
    assert out.shape == (batch, seq_len)
    assert enc.shape == (batch, emb_dim)

    # Batched check against the per-series pure-JAX reference.
    ref = jax.jit(jax.vmap(lambda xb: reference_forward(
        xb, params, seq_len=seq_len, emb_dim=emb_dim)))
    ref_out, ref_enc = ref(x)                                 # (B,1,S), (B,1,E)
    np.testing.assert_allclose(np.asarray(out), np.asarray(ref_out[:, 0, :]),
                               rtol=1e-3, atol=1e-3)
    np.testing.assert_allclose(np.asarray(enc), np.asarray(ref_enc[:, 0, :]),
                               rtol=1e-3, atol=1e-3)

    # Single-series call reproduces the module's exact output contract.
    out1, enc1 = fwd(x[0], w_packed)
    jax.block_until_ready((out1, enc1))
    assert out1.shape == (n_features, seq_len)
    assert enc1.shape == (n_features, emb_dim)
    np.testing.assert_allclose(np.asarray(out1[0]), np.asarray(ref_out[0, 0, :]),
                               rtol=1e-3, atol=1e-3)

    print("KERNEL_OK")
</pallas_src>

<mosaic_0001>
module attributes {stable_mosaic.version = 11 : i64} {
  func.func @_autoencoder_rnn_kernel(%arg0: i32, %arg1: memref<8x8xf32, #tpu.memory_space<vmem>>, %arg2: memref<104x32xf32, #tpu.memory_space<vmem>>, %arg3: memref<8x8xf32, #tpu.memory_space<vmem>>, %arg4: memref<8x4xf32, #tpu.memory_space<vmem>>, %arg5: memref<8x8x32xf32, #tpu.memory_space<vmem>>, %arg6: memref<8x8x8xf32, #tpu.memory_space<vmem>>) attributes {dimension_semantics = [#tpu.dimension_semantics<parallel>], iteration_bounds = array<i64: 2>, scalar_prefetch = 0 : i64, scratch_operands = 2 : i64, tpu.core_type = #tpu.core_type<tc>, window_params = [{transform_indices = @transform_0, window_bounds = array<i64: 8, 8>}, {pipeline_mode = #tpu.pipeline_mode<synchronous>, transform_indices = @transform_1, window_bounds = array<i64: 104, 32>}, {transform_indices = @transform_2, window_bounds = array<i64: 8, 8>}, {transform_indices = @transform_3, window_bounds = array<i64: 8, 4>}]} {
    %c0 = arith.constant 0 : index
    %c0_0 = arith.constant 0 : index
    %0 = vector.load %arg2[%c0, %c0_0] : memref<104x32xf32, #tpu.memory_space<vmem>>, vector<1x32xf32>
    %c8 = arith.constant 8 : index
    %c0_1 = arith.constant 0 : index
    %1 = vector.load %arg2[%c8, %c0_1] : memref<104x32xf32, #tpu.memory_space<vmem>>, vector<8x32xf32>
    %c16 = arith.constant 16 : index
    %c0_2 = arith.constant 0 : index
    %2 = vector.load %arg2[%c16, %c0_2] : memref<104x32xf32, #tpu.memory_space<vmem>>, vector<1x32xf32>
    %c24 = arith.constant 24 : index
    %c0_3 = arith.constant 0 : index
    %3 = vector.load %arg2[%c24, %c0_3] : memref<104x32xf32, #tpu.memory_space<vmem>>, vector<8x32xf32>
    %c32 = arith.constant 32 : index
    %c0_4 = arith.constant 0 : index
    %4 = vector.load %arg2[%c32, %c0_4] : memref<104x32xf32, #tpu.memory_space<vmem>>, vector<4x32xf32>
    %c40 = arith.constant 40 : index
    %c0_5 = arith.constant 0 : index
    %5 = vector.load %arg2[%c40, %c0_5] : memref<104x32xf32, #tpu.memory_space<vmem>>, vector<1x32xf32>
    %c48 = arith.constant 48 : index
    %c0_6 = arith.constant 0 : index
    %6 = vector.load %arg2[%c48, %c0_6] : memref<104x32xf32, #tpu.memory_space<vmem>>, vector<4x32xf32>
    %c56 = arith.constant 56 : index
    %c0_7 = arith.constant 0 : index
    %7 = vector.load %arg2[%c56, %c0_7] : memref<104x32xf32, #tpu.memory_space<vmem>>, vector<4x32xf32>
    %c64 = arith.constant 64 : index
    %c0_8 = arith.constant 0 : index
    %8 = vector.load %arg2[%c64, %c0_8] : memref<104x32xf32, #tpu.memory_space<vmem>>, vector<1x32xf32>
    %c72 = arith.constant 72 : index
    %c0_9 = arith.constant 0 : index
    %9 = vector.load %arg2[%c72, %c0_9] : memref<104x32xf32, #tpu.memory_space<vmem>>, vector<4x32xf32>
    %c80 = arith.constant 80 : index
    %c0_10 = arith.constant 0 : index
    %10 = vector.load %arg2[%c80, %c0_10] : memref<104x32xf32, #tpu.memory_space<vmem>>, vector<8x32xf32>
    %c88 = arith.constant 88 : index
    %c0_11 = arith.constant 0 : index
    %11 = vector.load %arg2[%c88, %c0_11] : memref<104x32xf32, #tpu.memory_space<vmem>>, vector<1x32xf32>
    %cst = arith.constant 0.000000e+00 : f32
    %12 = vector.broadcast %cst : f32 to vector<8x8xf32>
    %cst_12 = arith.constant 0.000000e+00 : f32
    %13 = vector.broadcast %cst_12 : f32 to vector<8x4xf32>
    %c0_13 = arith.constant 0 : index
    %c0_14 = arith.constant 0 : index
    %14 = vector.load %arg1[%c0_13, %c0_14] : memref<8x8xf32, #tpu.memory_space<vmem>>, vector<8x8xf32>
    %15 = tpu.transpose %14, [1, 0] : vector<8x8xf32> -> vector<8x8xf32>
    %16 = vector.shape_cast %15 : vector<8x8xf32> to vector<8x8x1xf32>
    %17 = vector.shape_cast %0 : vector<1x32xf32> to vector<1x1x32xf32>
    %18 = vector.broadcast %16 : vector<8x8x1xf32> to vector<8x8x32xf32>
    %19 = vector.broadcast %17 : vector<1x1x32xf32> to vector<8x8x32xf32>
    %20 = arith.mulf %18, %19 : vector<8x8x32xf32>
    %21 = vector.shape_cast %2 : vector<1x32xf32> to vector<1x1x32xf32>
    %22 = vector.broadcast %21 : vector<1x1x32xf32> to vector<8x8x32xf32>
    %23 = arith.addf %20, %22 : vector<8x8x32xf32>
    %c0_15 = arith.constant 0 : index
    %c0_16 = arith.constant 0 : index
    %c0_17 = arith.constant 0 : index
    %24 = vector.load %arg5[%c0_15, %c0_16, %c0_17] : memref<8x8x32xf32, #tpu.memory_space<vmem>>, vector<8x8x32xf32>
    tpu.vector_store %arg5[%c0_15, %c0_16, %c0_17], %23 {strides = array<i32>} : memref<8x8x32xf32, #tpu.memory_space<vmem>>, vector<8x8x32xf32>,
    %c0_i32 = arith.constant 0 : i32
    %25 = arith.index_cast %c0_i32 : i32 to index
    %c0_18 = arith.constant 0 : index
    %c0_19 = arith.constant 0 : index
    %26 = vector.load %arg5[%25, %c0_18, %c0_19] : memref<8x8x32xf32, #tpu.memory_space<vmem>>, vector<1x8x32xf32>
    %27 = vector.shape_cast %26 : vector<1x8x32xf32> to vector<8x32xf32>
    %cst_20 = arith.constant dense<0.000000e+00> : vector<8x32xf32>
    %28 = tpu.matmul %12, %1, %cst_20 {dimension_numbers = #tpu.dot_dimension_numbers<[1], [0], [0], [1], [0, 0, 1, 1], [], []>} : vector<8x8xf32>, vector<8x32xf32>, vector<8x32xf32> -> vector<8x32xf32>
    %29 = arith.addf %27, %28 : vector<8x32xf32>
    %30 = arith.negf %29 : vector<8x32xf32>
    %31 = math.exp %30 : vector<8x32xf32>
    %cst_21 = arith.constant 1.000000e+00 : f32
    %32 = vector.broadcast %cst_21 : f32 to vector<8x32xf32>
    %33 = arith.addf %32, %31 : vector<8x32xf32>
    %34 = arith.divf %32, %33 : vector<8x32xf32>
    %35 = vector.extract_strided_slice %29 {offsets = [0, 16], sizes = [8, 8], strides = [1, 1]} : vector<8x32xf32> to vector<8x8xf32>
    %36 = math.tanh %35 : vector<8x8xf32>
    %37 = vector.extract_strided_slice %34 {offsets = [0, 0], sizes = [8, 8], strides = [1, 1]} : vector<8x32xf32> to vector<8x8xf32>
    %38 = vector.extract_strided_slice %34 {offsets = [0, 8], sizes = [8, 8], strides = [1, 1]} : vector<8x32xf32> to vector<8x8xf32>
    %39 = vector.extract_strided_slice %34 {offsets = [0, 24], sizes = [8, 8], strides = [1, 1]} : vector<8x32xf32> to vector<8x8xf32>
    %40 = arith.mulf %38, %12 : vector<8x8xf32>
    %41 = arith.mulf %37, %36 : vector<8x8xf32>
    %42 = arith.addf %40, %41 : vector<8x8xf32>
    %43 = math.tanh %42 : vector<8x8xf32>
    %44 = arith.mulf %39, %43 : vector<8x8xf32>
    %cst_22 = arith.constant dense<0.000000e+00> : vector<8x32xf32>
    %45 = tpu.matmul %44, %3, %cst_22 {dimension_numbers = #tpu.dot_dimension_numbers<[1], [0], [0], [1], [0, 0, 1, 1], [], []>} : vector<8x8xf32>, vector<8x32xf32>, vector<8x32xf32> -> vector<8x32xf32>
    %46 = vector.broadcast %5 : vector<1x32xf32> to vector<8x32xf32>
    %47 = arith.addf %45, %46 : vector<8x32xf32>
    %cst_23 = arith.constant dense<0.000000e+00> : vector<8x32xf32>
    %48 = tpu.matmul %13, %4, %cst_23 {dimension_numbers = #tpu.dot_dimension_numbers<[1], [0], [0], [1], [0, 0, 1, 1], [], []>} : vector<8x4xf32>, vector<4x32xf32>, vector<8x32xf32> -> vector<8x32xf32>
    %49 = arith.addf %47, %48 : vector<8x32xf32>
    %50 = arith.negf %49 : vector<8x32xf32>
    %51 = math.exp %50 : vector<8x32xf32>
    %cst_24 = arith.constant 1.000000e+00 : f32
    %52 = vector.broadcast %cst_24 : f32 to vector<8x32xf32>
    %53 = arith.addf %52, %51 : vector<8x32xf32>
    %54 = arith.divf %52, %53 : vector<8x32xf32>
    %55 = vector.extract_strided_slice %49 {offsets = [0, 8], sizes = [8, 4], strides = [1, 1]} : vector<8x32xf32> to vector<8x4xf32>
    %56 = math.tanh %55 : vector<8x4xf32>
    %57 = vector.extract_strided_slice %54 {offsets = [0, 0], sizes = [8, 4], strides = [1, 1]} : vector<8x32xf32> to vector<8x4xf32>
    %58 = vector.extract_strided_slice %54 {offsets = [0, 4], sizes = [8, 4], strides = [1, 1]} : vector<8x32xf32> to vector<8x4xf32>
    %59 = vector.extract_strided_slice %54 {offsets = [0, 12], sizes = [8, 4], strides = [1, 1]} : vector<8x32xf32> to vector<8x4xf32>
    %60 = arith.mulf %58, %13 : vector<8x4xf32>
    %61 = arith.mulf %57, %56 : vector<8x4xf32>
    %62 = arith.addf %60, %61 : vector<8x4xf32>
    %63 = math.tanh %62 : vector<8x4xf32>
    %64 = arith.mulf %59, %63 : vector<8x4xf32>
    %c1_i32 = arith.constant 1 : i32
    %65 = arith.index_cast %c1_i32 : i32 to index
    %c0_25 = arith.constant 0 : index
    %c0_26 = arith.constant 0 : index
    %66 = vector.load %arg5[%65, %c0_25, %c0_26] : memref<8x8x32xf32, #tpu.memory_space<vmem>>, vector<1x8x32xf32>
    %67 = vector.shape_cast %66 : vector<1x8x32xf32> to vector<8x32xf32>
    %cst_27 = arith.constant dense<0.000000e+00> : vector<8x32xf32>
    %68 = tpu.matmul %44, %1, %cst_27 {dimension_numbers = #tpu.dot_dimension_numbers<[1], [0], [0], [1], [0, 0, 1, 1], [], []>} : vector<8x8xf32>, vector<8x32xf32>, vector<8x32xf32> -> vector<8x32xf32>
    %69 = arith.addf %67, %68 : vector<8x32xf32>
    %70 = arith.negf %69 : vector<8x32xf32>
    %71 = math.exp %70 : vector<8x32xf32>
    %cst_28 = arith.constant 1.000000e+00 : f32
    %72 = vector.broadcast %cst_28 : f32 to vector<8x32xf32>
    %73 = arith.addf %72, %71 : vector<8x32xf32>
    %74 = arith.divf %72, %73 : vector<8x32xf32>
    %75 = vector.extract_strided_slice %69 {offsets = [0, 16], sizes = [8, 8], strides = [1, 1]} : vector<8x32xf32> to vector<8x8xf32>
    %76 = math.tanh %75 : vector<8x8xf32>
    %77 = vector.extract_strided_slice %74 {offsets = [0, 0], sizes = [8, 8], strides = [1, 1]} : vector<8x32xf32> to vector<8x8xf32>
    %78 = vector.extract_strided_slice %74 {offsets = [0, 8], sizes = [8, 8], strides = [1, 1]} : vector<8x32xf32> to vector<8x8xf32>
    %79 = vector.extract_strided_slice %74 {offsets = [0, 24], sizes = [8, 8], strides = [1, 1]} : vector<8x32xf32> to vector<8x8xf32>
    %80 = arith.mulf %78, %42 : vector<8x8xf32>
    %81 = arith.mulf %77, %76 : vector<8x8xf32>
    %82 = arith.addf %80, %81 : vector<8x8xf32>
    %83 = math.tanh %82 : vector<8x8xf32>
    %84 = arith.mulf %79, %83 : vector<8x8xf32>
    %cst_29 = arith.constant dense<0.000000e+00> : vector<8x32xf32>
    %85 = tpu.matmul %84, %3, %cst_29 {dimension_numbers = #tpu.dot_dimension_numbers<[1], [0], [0], [1], [0, 0, 1, 1], [], []>} : vector<8x8xf32>, vector<8x32xf32>, vector<8x32xf32> -> vector<8x32xf32>
    %86 = vector.broadcast %5 : vector<1x32xf32> to vector<8x32xf32>
    %87 = arith.addf %85, %86 : vector<8x32xf32>
    %cst_30 = arith.constant dense<0.000000e+00> : vector<8x32xf32>
    %88 = tpu.matmul %64, %4, %cst_30 {dimension_numbers = #tpu.dot_dimension_numbers<[1], [0], [0], [1], [0, 0, 1, 1], [], []>} : vector<8x4xf32>, vector<4x32xf32>, vector<8x32xf32> -> vector<8x32xf32>
    %89 = arith.addf %87, %88 : vector<8x32xf32>
    %90 = arith.negf %89 : vector<8x32xf32>
    %91 = math.exp %90 : vector<8x32xf32>
    %cst_31 = arith.constant 1.000000e+00 : f32
    %92 = vector.broadcast %cst_31 : f32 to vector<8x32xf32>
    %93 = arith.addf %92, %91 : vector<8x32xf32>
    %94 = arith.divf %92, %93 : vector<8x32xf32>
    %95 = vector.extract_strided_slice %89 {offsets = [0, 8], sizes = [8, 4], strides = [1, 1]} : vector<8x32xf32> to vector<8x4xf32>
    %96 = math.tanh %95 : vector<8x4xf32>
    %97 = vector.extract_strided_slice %94 {offsets = [0, 0], sizes = [8, 4], strides = [1, 1]} : vector<8x32xf32> to vector<8x4xf32>
    %98 = vector.extract_strided_slice %94 {offsets = [0, 4], sizes = [8, 4], strides = [1, 1]} : vector<8x32xf32> to vector<8x4xf32>
    %99 = vector.extract_strided_slice %94 {offsets = [0, 12], sizes = [8, 4], strides = [1, 1]} : vector<8x32xf32> to vector<8x4xf32>
    %100 = arith.mulf %98, %62 : vector<8x4xf32>
    %101 = arith.mulf %97, %96 : vector<8x4xf32>
    %102 = arith.addf %100, %101 : vector<8x4xf32>
    %103 = math.tanh %102 : vector<8x4xf32>
    %104 = arith.mulf %99, %103 : vector<8x4xf32>
    %c2_i32 = arith.constant 2 : i32
    %105 = arith.index_cast %c2_i32 : i32 to index
    %c0_32 = arith.constant 0 : index
    %c0_33 = arith.constant 0 : index
    %106 = vector.load %arg5[%105, %c0_32, %c0_33] : memref<8x8x32xf32, #tpu.memory_space<vmem>>, vector<1x8x32xf32>
    %107 = vector.shape_cast %106 : vector<1x8x32xf32> to vector<8x32xf32>
    %cst_34 = arith.constant dense<0.000000e+00> : vector<8x32xf32>
    %108 = tpu.matmul %84, %1, %cst_34 {dimension_numbers = #tpu.dot_dimension_numbers<[1], [0], [0], [1], [0, 0, 1, 1], [], []>} : vector<8x8xf32>, vector<8x32xf32>, vector<8x32xf32> -> vector<8x32xf32>
    %109 = arith.addf %107, %108 : vector<8x32xf32>
    %110 = arith.negf %109 : vector<8x32xf32>
    %111 = math.exp %110 : vector<8x32xf32>
    %cst_35 = arith.constant 1.000000e+00 : f32
    %112 = vector.broadcast %cst_35 : f32 to vector<8x32xf32>
    %113 = arith.addf %112, %111 : vector<8x32xf32>
    %114 = arith.divf %112, %113 : vector<8x32xf32>
    %115 = vector.extract_strided_slice %109 {offsets = [0, 16], sizes = [8, 8], strides = [1, 1]} : vector<8x32xf32> to vector<8x8xf32>
    %116 = math.tanh %115 : vector<8x8xf32>
    %117 = vector.extract_strided_slice %114 {offsets = [0, 0], sizes = [8, 8], strides = [1, 1]} : vector<8x32xf32> to vector<8x8xf32>
    %118 = vector.extract_strided_slice %114 {offsets = [0, 8], sizes = [8, 8], strides = [1, 1]} : vector<8x32xf32> to vector<8x8xf32>
    %119 = vector.extract_strided_slice %114 {offsets = [0, 24], sizes = [8, 8], strides = [1, 1]} : vector<8x32xf32> to vector<8x8xf32>
    %120 = arith.mulf %118, %82 : vector<8x8xf32>
    %121 = arith.mulf %117, %116 : vector<8x8xf32>
    %122 = arith.addf %120, %121 : vector<8x8xf32>
    %123 = math.tanh %122 : vector<8x8xf32>
    %124 = arith.mulf %119, %123 : vector<8x8xf32>
    %cst_36 = arith.constant dense<0.000000e+00> : vector<8x32xf32>
    %125 = tpu.matmul %124, %3, %cst_36 {dimension_numbers = #tpu.dot_dimension_numbers<[1], [0], [0], [1], [0, 0, 1, 1], [], []>} : vector<8x8xf32>, vector<8x32xf32>, vector<8x32xf32> -> vector<8x32xf32>
    %126 = vector.broadcast %5 : vector<1x32xf32> to vector<8x32xf32>
    %127 = arith.addf %125, %126 : vector<8x32xf32>
    %cst_37 = arith.constant dense<0.000000e+00> : vector<8x32xf32>
    %128 = tpu.matmul %104, %4, %cst_37 {dimension_numbers = #tpu.dot_dimension_numbers<[1], [0], [0], [1], [0, 0, 1, 1], [], []>} : vector<8x4xf32>, vector<4x32xf32>, vector<8x32xf32> -> vector<8x32xf32>
    %129 = arith.addf %127, %128 : vector<8x32xf32>
    %130 = arith.negf %129 : vector<8x32xf32>
    %131 = math.exp %130 : vector<8x32xf32>
    %cst_38 = arith.constant 1.000000e+00 : f32
    %132 = vector.broadcast %cst_38 : f32 to vector<8x32xf32>
    %133 = arith.addf %132, %131 : vector<8x32xf32>
    %134 = arith.divf %132, %133 : vector<8x32xf32>
    %135 = vector.extract_strided_slice %129 {offsets = [0, 8], sizes = [8, 4], strides = [1, 1]} : vector<8x32xf32> to vector<8x4xf32>
    %136 = math.tanh %135 : vector<8x4xf32>
    %137 = vector.extract_strided_slice %134 {offsets = [0, 0], sizes = [8, 4], strides = [1, 1]} : vector<8x32xf32> to vector<8x4xf32>
    %138 = vector.extract_strided_slice %134 {offsets = [0, 4], sizes = [8, 4], strides = [1, 1]} : vector<8x32xf32> to vector<8x4xf32>
    %139 = vector.extract_strided_slice %134 {offsets = [0, 12], sizes = [8, 4], strides = [1, 1]} : vector<8x32xf32> to vector<8x4xf32>
    %140 = arith.mulf %138, %102 : vector<8x4xf32>
    %141 = arith.mulf %137, %136 : vector<8x4xf32>
    %142 = arith.addf %140, %141 : vector<8x4xf32>
    %143 = math.tanh %142 : vector<8x4xf32>
    %144 = arith.mulf %139, %143 : vector<8x4xf32>
    %c3_i32 = arith.constant 3 : i32
    %145 = arith.index_cast %c3_i32 : i32 to index
    %c0_39 = arith.constant 0 : index
    %c0_40 = arith.constant 0 : index
    %146 = vector.load %arg5[%145, %c0_39, %c0_40] : memref<8x8x32xf32, #tpu.memory_space<vmem>>, vector<1x8x32xf32>
    %147 = vector.shape_cast %146 : vector<1x8x32xf32> to vector<8x32xf32>
    %cst_41 = arith.constant dense<0.000000e+00> : vector<8x32xf32>
    %148 = tpu.matmul %124, %1, %cst_41 {dimension_numbers = #tpu.dot_dimension_numbers<[1], [0], [0], [1], [0, 0, 1, 1], [], []>} : vector<8x8xf32>, vector<8x32xf32>, vector<8x32xf32> -> vector<8x32xf32>
    %149 = arith.addf %147, %148 : vector<8x32xf32>
    %150 = arith.negf %149 : vector<8x32xf32>
    %151 = math.exp %150 : vector<8x32xf32>
    %cst_42 = arith.constant 1.000000e+00 : f32
    %152 = vector.broadcast %cst_42 : f32 to vector<8x32xf32>
    %153 = arith.addf %152, %151 : vector<8x32xf32>
    %154 = arith.divf %152, %153 : vector<8x32xf32>
    %155 = vector.extract_strided_slice %149 {offsets = [0, 16], sizes = [8, 8], strides = [1, 1]} : vector<8x32xf32> to vector<8x8xf32>
    %156 = math.tanh %155 : vector<8x8xf32>
    %157 = vector.extract_strided_slice %154 {offsets = [0, 0], sizes = [8, 8], strides = [1, 1]} : vector<8x32xf32> to vector<8x8xf32>
    %158 = vector.extract_strided_slice %154 {offsets = [0, 8], sizes = [8, 8], strides = [1, 1]} : vector<8x32xf32> to vector<8x8xf32>
    %159 = vector.extract_strided_slice %154 {offsets = [0, 24], sizes = [8, 8], strides = [1, 1]} : vector<8x32xf32> to vector<8x8xf32>
    %160 = arith.mulf %158, %122 : vector<8x8xf32>
    %161 = arith.mulf %157, %156 : vector<8x8xf32>
    %162 = arith.addf %160, %161 : vector<8x8xf32>
    %163 = math.tanh %162 : vector<8x8xf32>
    %164 = arith.mulf %159, %163 : vector<8x8xf32>
    %cst_43 = arith.constant dense<0.000000e+00> : vector<8x32xf32>
    %165 = tpu.matmul %164, %3, %cst_43 {dimension_numbers = #tpu.dot_dimension_numbers<[1], [0], [0], [1], [0, 0, 1, 1], [], []>} : vector<8x8xf32>, vector<8x32xf32>, vector<8x32xf32> -> vector<8x32xf32>
    %166 = vector.broadcast %5 : vector<1x32xf32> to vector<8x32xf32>
    %167 = arith.addf %165, %166 : vector<8x32xf32>
    %cst_44 = arith.constant dense<0.000000e+00> : vector<8x32xf32>
    %168 = tpu.matmul %144, %4, %cst_44 {dimension_numbers = #tpu.dot_dimension_numbers<[1], [0], [0], [1], [0, 0, 1, 1], [], []>} : vector<8x4xf32>, vector<4x32xf32>, vector<8x32xf32> -> vector<8x32xf32>
    %169 = arith.addf %167, %168 : vector<8x32xf32>
    %170 = arith.negf %169 : vector<8x32xf32>
    %171 = math.exp %170 : vector<8x32xf32>
    %cst_45 = arith.constant 1.000000e+00 : f32
    %172 = vector.broadcast %cst_45 : f32 to vector<8x32xf32>
    %173 = arith.addf %172, %171 : vector<8x32xf32>
    %174 = arith.divf %172, %173 : vector<8x32xf32>
    %175 = vector.extract_strided_slice %169 {offsets = [0, 8], sizes = [8, 4], strides = [1, 1]} : vector<8x32xf32> to vector<8x4xf32>
    %176 = math.tanh %175 : vector<8x4xf32>
    %177 = vector.extract_strided_slice %174 {offsets = [0, 0], sizes = [8, 4], strides = [1, 1]} : vector<8x32xf32> to vector<8x4xf32>
    %178 = vector.extract_strided_slice %174 {offsets = [0, 4], sizes = [8, 4], strides = [1, 1]} : vector<8x32xf32> to vector<8x4xf32>
    %179 = vector.extract_strided_slice %174 {offsets = [0, 12], sizes = [8, 4], strides = [1, 1]} : vector<8x32xf32> to vector<8x4xf32>
    %180 = arith.mulf %178, %142 : vector<8x4xf32>
    %181 = arith.mulf %177, %176 : vector<8x4xf32>
    %182 = arith.addf %180, %181 : vector<8x4xf32>
    %183 = math.tanh %182 : vector<8x4xf32>
    %184 = arith.mulf %179, %183 : vector<8x4xf32>
    %c4_i32 = arith.constant 4 : i32
    %185 = arith.index_cast %c4_i32 : i32 to index
    %c0_46 = arith.constant 0 : index
    %c0_47 = arith.constant 0 : index
    %186 = vector.load %arg5[%185, %c0_46, %c0_47] : memref<8x8x32xf32, #tpu.memory_space<vmem>>, vector<1x8x32xf32>
    %187 = vector.shape_cast %186 : vector<1x8x32xf32> to vector<8x32xf32>
    %cst_48 = arith.constant dense<0.000000e+00> : vector<8x32xf32>
    %188 = tpu.matmul %164, %1, %cst_48 {dimension_numbers = #tpu.dot_dimension_numbers<[1], [0], [0], [1], [0, 0, 1, 1], [], []>} : vector<8x8xf32>, vector<8x32xf32>, vector<8x32xf32> -> vector<8x32xf32>
    %189 = arith.addf %187, %188 : vector<8x32xf32>
    %190 = arith.negf %189 : vector<8x32xf32>
    %191 = math.exp %190 : vector<8x32xf32>
    %cst_49 = arith.constant 1.000000e+00 : f32
    %192 = vector.broadcast %cst_49 : f32 to vector<8x32xf32>
    %193 = arith.addf %192, %191 : vector<8x32xf32>
    %194 = arith.divf %192, %193 : vector<8x32xf32>
    %195 = vector.extract_strided_slice %189 {offsets = [0, 16], sizes = [8, 8], strides = [1, 1]} : vector<8x32xf32> to vector<8x8xf32>
    %196 = math.tanh %195 : vector<8x8xf32>
    %197 = vector.extract_strided_slice %194 {offsets = [0, 0], sizes = [8, 8], strides = [1, 1]} : vector<8x32xf32> to vector<8x8xf32>
    %198 = vector.extract_strided_slice %194 {offsets = [0, 8], sizes = [8, 8], strides = [1, 1]} : vector<8x32xf32> to vector<8x8xf32>
    %199 = vector.extract_strided_slice %194 {offsets = [0, 24], sizes = [8, 8], strides = [1, 1]} : vector<8x32xf32> to vector<8x8xf32>
    %200 = arith.mulf %198, %162 : vector<8x8xf32>
    %201 = arith.mulf %197, %196 : vector<8x8xf32>
    %202 = arith.addf %200, %201 : vector<8x8xf32>
    %203 = math.tanh %202 : vector<8x8xf32>
    %204 = arith.mulf %199, %203 : vector<8x8xf32>
    %cst_50 = arith.constant dense<0.000000e+00> : vector<8x32xf32>
    %205 = tpu.matmul %204, %3, %cst_50 {dimension_numbers = #tpu.dot_dimension_numbers<[1], [0], [0], [1], [0, 0, 1, 1], [], []>} : vector<8x8xf32>, vector<8x32xf32>, vector<8x32xf32> -> vector<8x32xf32>
    %206 = vector.broadcast %5 : vector<1x32xf32> to vector<8x32xf32>
    %207 = arith.addf %205, %206 : vector<8x32xf32>
    %cst_51 = arith.constant dense<0.000000e+00> : vector<8x32xf32>
    %208 = tpu.matmul %184, %4, %cst_51 {dimension_numbers = #tpu.dot_dimension_numbers<[1], [0], [0], [1], [0, 0, 1, 1], [], []>} : vector<8x4xf32>, vector<4x32xf32>, vector<8x32xf32> -> vector<8x32xf32>
    %209 = arith.addf %207, %208 : vector<8x32xf32>
    %210 = arith.negf %209 : vector<8x32xf32>
    %211 = math.exp %210 : vector<8x32xf32>
    %cst_52 = arith.constant 1.000000e+00 : f32
    %212 = vector.broadcast %cst_52 : f32 to vector<8x32xf32>
    %213 = arith.addf %212, %211 : vector<8x32xf32>
    %214 = arith.divf %212, %213 : vector<8x32xf32>
    %215 = vector.extract_strided_slice %209 {offsets = [0, 8], sizes = [8, 4], strides = [1, 1]} : vector<8x32xf32> to vector<8x4xf32>
    %216 = math.tanh %215 : vector<8x4xf32>
    %217 = vector.extract_strided_slice %214 {offsets = [0, 0], sizes = [8, 4], strides = [1, 1]} : vector<8x32xf32> to vector<8x4xf32>
    %218 = vector.extract_strided_slice %214 {offsets = [0, 4], sizes = [8, 4], strides = [1, 1]} : vector<8x32xf32> to vector<8x4xf32>
    %219 = vector.extract_strided_slice %214 {offsets = [0, 12], sizes = [8, 4], strides = [1, 1]} : vector<8x32xf32> to vector<8x4xf32>
    %220 = arith.mulf %218, %182 : vector<8x4xf32>
    %221 = arith.mulf %217, %216 : vector<8x4xf32>
    %222 = arith.addf %220, %221 : vector<8x4xf32>
    %223 = math.tanh %222 : vector<8x4xf32>
    %224 = arith.mulf %219, %223 : vector<8x4xf32>
    %c5_i32 = arith.constant 5 : i32
    %225 = arith.index_cast %c5_i32 : i32 to index
    %c0_53 = arith.constant 0 : index
    %c0_54 = arith.constant 0 : index
    %226 = vector.load %arg5[%225, %c0_53, %c0_54] : memref<8x8x32xf32, #tpu.memory_space<vmem>>, vector<1x8x32xf32>
    %227 = vector.shape_cast %226 : vector<1x8x32xf32> to vector<8x32xf32>
    %cst_55 = arith.constant dense<0.000000e+00> : vector<8x32xf32>
    %228 = tpu.matmul %204, %1, %cst_55 {dimension_numbers = #tpu.dot_dimension_numbers<[1], [0], [0], [1], [0, 0, 1, 1], [], []>} : vector<8x8xf32>, vector<8x32xf32>, vector<8x32xf32> -> vector<8x32xf32>
    %229 = arith.addf %227, %228 : vector<8x32xf32>
    %230 = arith.negf %229 : vector<8x32xf32>
    %231 = math.exp %230 : vector<8x32xf32>
    %cst_56 = arith.constant 1.000000e+00 : f32
    %232 = vector.broadcast %cst_56 : f32 to vector<8x32xf32>
    %233 = arith.addf %232, %231 : vector<8x32xf32>
    %234 = arith.divf %232, %233 : vector<8x32xf32>
    %235 = vector.extract_strided_slice %229 {offsets = [0, 16], sizes = [8, 8], strides = [1, 1]} : vector<8x32xf32> to vector<8x8xf32>
    %236 = math.tanh %235 : vector<8x8xf32>
    %237 = vector.extract_strided_slice %234 {offsets = [0, 0], sizes = [8, 8], strides = [1, 1]} : vector<8x32xf32> to vector<8x8xf32>
    %238 = vector.extract_strided_slice %234 {offsets = [0, 8], sizes = [8, 8], strides = [1, 1]} : vector<8x32xf32> to vector<8x8xf32>
    %239 = vector.extract_strided_slice %234 {offsets = [0, 24], sizes = [8, 8], strides = [1, 1]} : vector<8x32xf32> to vector<8x8xf32>
    %240 = arith.mulf %238, %202 : vector<8x8xf32>
    %241 = arith.mulf %237, %236 : vector<8x8xf32>
    %242 = arith.addf %240, %241 : vector<8x8xf32>
    %243 = math.tanh %242 : vector<8x8xf32>
    %244 = arith.mulf %239, %243 : vector<8x8xf32>
    %cst_57 = arith.constant dense<0.000000e+00> : vector<8x32xf32>
    %245 = tpu.matmul %244, %3, %cst_57 {dimension_numbers = #tpu.dot_dimension_numbers<[1], [0], [0], [1], [0, 0, 1, 1], [], []>} : vector<8x8xf32>, vector<8x32xf32>, vector<8x32xf32> -> vector<8x32xf32>
    %246 = vector.broadcast %5 : vector<1x32xf32> to vector<8x32xf32>
    %247 = arith.addf %245, %246 : vector<8x32xf32>
    %cst_58 = arith.constant dense<0.000000e+00> : vector<8x32xf32>
    %248 = tpu.matmul %224, %4, %cst_58 {dimension_numbers = #tpu.dot_dimension_numbers<[1], [0], [0], [1], [0, 0, 1, 1], [], []>} : vector<8x4xf32>, vector<4x32xf32>, vector<8x32xf32> -> vector<8x32xf32>
    %249 = arith.addf %247, %248 : vector<8x32xf32>
    %250 = arith.negf %249 : vector<8x32xf32>
    %251 = math.exp %250 : vector<8x32xf32>
    %cst_59 = arith.constant 1.000000e+00 : f32
    %252 = vector.broadcast %cst_59 : f32 to vector<8x32xf32>
    %253 = arith.addf %252, %251 : vector<8x32xf32>
    %254 = arith.divf %252, %253 : vector<8x32xf32>
    %255 = vector.extract_strided_slice %249 {offsets = [0, 8], sizes = [8, 4], strides = [1, 1]} : vector<8x32xf32> to vector<8x4xf32>
    %256 = math.tanh %255 : vector<8x4xf32>
    %257 = vector.extract_strided_slice %254 {offsets = [0, 0], sizes = [8, 4], strides = [1, 1]} : vector<8x32xf32> to vector<8x4xf32>
    %258 = vector.extract_strided_slice %254 {offsets = [0, 4], sizes = [8, 4], strides = [1, 1]} : vector<8x32xf32> to vector<8x4xf32>
    %259 = vector.extract_strided_slice %254 {offsets = [0, 12], sizes = [8, 4], strides = [1, 1]} : vector<8x32xf32> to vector<8x4xf32>
    %260 = arith.mulf %258, %222 : vector<8x4xf32>
    %261 = arith.mulf %257, %256 : vector<8x4xf32>
    %262 = arith.addf %260, %261 : vector<8x4xf32>
    %263 = math.tanh %262 : vector<8x4xf32>
    %264 = arith.mulf %259, %263 : vector<8x4xf32>
    %c6_i32 = arith.constant 6 : i32
    %265 = arith.index_cast %c6_i32 : i32 to index
    %c0_60 = arith.constant 0 : index
    %c0_61 = arith.constant 0 : index
    %266 = vector.load %arg5[%265, %c0_60, %c0_61] : memref<8x8x32xf32, #tpu.memory_space<vmem>>, vector<1x8x32xf32>
    %267 = vector.shape_cast %266 : vector<1x8x32xf32> to vector<8x32xf32>
    %cst_62 = arith.constant dense<0.000000e+00> : vector<8x32xf32>
    %268 = tpu.matmul %244, %1, %cst_62 {dimension_numbers = #tpu.dot_dimension_numbers<[1], [0], [0], [1], [0, 0, 1, 1], [], []>} : vector<8x8xf32>, vector<8x32xf32>, vector<8x32xf32> -> vector<8x32xf32>
    %269 = arith.addf %267, %268 : vector<8x32xf32>
    %270 = arith.negf %269 : vector<8x32xf32>
    %271 = math.exp %270 : vector<8x32xf32>
    %cst_63 = arith.constant 1.000000e+00 : f32
    %272 = vector.broadcast %cst_63 : f32 to vector<8x32xf32>
    %273 = arith.addf %272, %271 : vector<8x32xf32>
    %274 = arith.divf %272, %273 : vector<8x32xf32>
    %275 = vector.extract_strided_slice %269 {offsets = [0, 16], sizes = [8, 8], strides = [1, 1]} : vector<8x32xf32> to vector<8x8xf32>
    %276 = math.tanh %275 : vector<8x8xf32>
    %277 = vector.extract_strided_slice %274 {offsets = [0, 0], sizes = [8, 8], strides = [1, 1]} : vector<8x32xf32> to vector<8x8xf32>
    %278 = vector.extract_strided_slice %274 {offsets = [0, 8], sizes = [8, 8], strides = [1, 1]} : vector<8x32xf32> to vector<8x8xf32>
    %279 = vector.extract_strided_slice %274 {offsets = [0, 24], sizes = [8, 8], strides = [1, 1]} : vector<8x32xf32> to vector<8x8xf32>
    %280 = arith.mulf %278, %242 : vector<8x8xf32>
    %281 = arith.mulf %277, %276 : vector<8x8xf32>
    %282 = arith.addf %280, %281 : vector<8x8xf32>
    %283 = math.tanh %282 : vector<8x8xf32>
    %284 = arith.mulf %279, %283 : vector<8x8xf32>
    %cst_64 = arith.constant dense<0.000000e+00> : vector<8x32xf32>
    %285 = tpu.matmul %284, %3, %cst_64 {dimension_numbers = #tpu.dot_dimension_numbers<[1], [0], [0], [1], [0, 0, 1, 1], [], []>} : vector<8x8xf32>, vector<8x32xf32>, vector<8x32xf32> -> vector<8x32xf32>
    %286 = vector.broadcast %5 : vector<1x32xf32> to vector<8x32xf32>
    %287 = arith.addf %285, %286 : vector<8x32xf32>
    %cst_65 = arith.constant dense<0.000000e+00> : vector<8x32xf32>
    %288 = tpu.matmul %264, %4, %cst_65 {dimension_numbers = #tpu.dot_dimension_numbers<[1], [0], [0], [1], [0, 0, 1, 1], [], []>} : vector<8x4xf32>, vector<4x32xf32>, vector<8x32xf32> -> vector<8x32xf32>
    %289 = arith.addf %287, %288 : vector<8x32xf32>
    %290 = arith.negf %289 : vector<8x32xf32>
    %291 = math.exp %290 : vector<8x32xf32>
    %cst_66 = arith.constant 1.000000e+00 : f32
    %292 = vector.broadcast %cst_66 : f32 to vector<8x32xf32>
    %293 = arith.addf %292, %291 : vector<8x32xf32>
    %294 = arith.divf %292, %293 : vector<8x32xf32>
    %295 = vector.extract_strided_slice %289 {offsets = [0, 8], sizes = [8, 4], strides = [1, 1]} : vector<8x32xf32> to vector<8x4xf32>
    %296 = math.tanh %295 : vector<8x4xf32>
    %297 = vector.extract_strided_slice %294 {offsets = [0, 0], sizes = [8, 4], strides = [1, 1]} : vector<8x32xf32> to vector<8x4xf32>
    %298 = vector.extract_strided_slice %294 {offsets = [0, 4], sizes = [8, 4], strides = [1, 1]} : vector<8x32xf32> to vector<8x4xf32>
    %299 = vector.extract_strided_slice %294 {offsets = [0, 12], sizes = [8, 4], strides = [1, 1]} : vector<8x32xf32> to vector<8x4xf32>
    %300 = arith.mulf %298, %262 : vector<8x4xf32>
    %301 = arith.mulf %297, %296 : vector<8x4xf32>
    %302 = arith.addf %300, %301 : vector<8x4xf32>
    %303 = math.tanh %302 : vector<8x4xf32>
    %304 = arith.mulf %299, %303 : vector<8x4xf32>
    %c7_i32 = arith.constant 7 : i32
    %305 = arith.index_cast %c7_i32 : i32 to index
    %c0_67 = arith.constant 0 : index
    %c0_68 = arith.constant 0 : index
    %306 = vector.load %arg5[%305, %c0_67, %c0_68] : memref<8x8x32xf32, #tpu.memory_space<vmem>>, vector<1x8x32xf32>
    %307 = vector.shape_cast %306 : vector<1x8x32xf32> to vector<8x32xf32>
    %cst_69 = arith.constant dense<0.000000e+00> : vector<8x32xf32>
    %308 = tpu.matmul %284, %1, %cst_69 {dimension_numbers = #tpu.dot_dimension_numbers<[1], [0], [0], [1], [0, 0, 1, 1], [], []>} : vector<8x8xf32>, vector<8x32xf32>, vector<8x32xf32> -> vector<8x32xf32>
    %309 = arith.addf %307, %308 : vector<8x32xf32>
    %310 = arith.negf %309 : vector<8x32xf32>
    %311 = math.exp %310 : vector<8x32xf32>
    %cst_70 = arith.constant 1.000000e+00 : f32
    %312 = vector.broadcast %cst_70 : f32 to vector<8x32xf32>
    %313 = arith.addf %312, %311 : vector<8x32xf32>
    %314 = arith.divf %312, %313 : vector<8x32xf32>
    %315 = vector.extract_strided_slice %309 {offsets = [0, 16], sizes = [8, 8], strides = [1, 1]} : vector<8x32xf32> to vector<8x8xf32>
    %316 = math.tanh %315 : vector<8x8xf32>
    %317 = vector.extract_strided_slice %314 {offsets = [0, 0], sizes = [8, 8], strides = [1, 1]} : vector<8x32xf32> to vector<8x8xf32>
    %318 = vector.extract_strided_slice %314 {offsets = [0, 8], sizes = [8, 8], strides = [1, 1]} : vector<8x32xf32> to vector<8x8xf32>
    %319 = vector.extract_strided_slice %314 {offsets = [0, 24], sizes = [8, 8], strides = [1, 1]} : vector<8x32xf32> to vector<8x8xf32>
    %320 = arith.mulf %318, %282 : vector<8x8xf32>
    %321 = arith.mulf %317, %316 : vector<8x8xf32>
    %322 = arith.addf %320, %321 : vector<8x8xf32>
    %323 = math.tanh %322 : vector<8x8xf32>
    %324 = arith.mulf %319, %323 : vector<8x8xf32>
    %cst_71 = arith.constant dense<0.000000e+00> : vector<8x32xf32>
    %325 = tpu.matmul %324, %3, %cst_71 {dimension_numbers = #tpu.dot_dimension_numbers<[1], [0], [0], [1], [0, 0, 1, 1], [], []>} : vector<8x8xf32>, vector<8x32xf32>, vector<8x32xf32> -> vector<8x32xf32>
    %326 = vector.broadcast %5 : vector<1x32xf32> to vector<8x32xf32>
    %327 = arith.addf %325, %326 : vector<8x32xf32>
    %cst_72 = arith.constant dense<0.000000e+00> : vector<8x32xf32>
    %328 = tpu.matmul %304, %4, %cst_72 {dimension_numbers = #tpu.dot_dimension_numbers<[1], [0], [0], [1], [0, 0, 1, 1], [], []>} : vector<8x4xf32>, vector<4x32xf32>, vector<8x32xf32> -> vector<8x32xf32>
    %329 = arith.addf %327, %328 : vector<8x32xf32>
    %330 = arith.negf %329 : vector<8x32xf32>
    %331 = math.exp %330 : vector<8x32xf32>
    %cst_73 = arith.constant 1.000000e+00 : f32
    %332 = vector.broadcast %cst_73 : f32 to vector<8x32xf32>
    %333 = arith.addf %332, %331 : vector<8x32xf32>
    %334 = arith.divf %332, %333 : vector<8x32xf32>
    %335 = vector.extract_strided_slice %329 {offsets = [0, 8], sizes = [8, 4], strides = [1, 1]} : vector<8x32xf32> to vector<8x4xf32>
    %336 = math.tanh %335 : vector<8x4xf32>
    %337 = vector.extract_strided_slice %334 {offsets = [0, 0], sizes = [8, 4], strides = [1, 1]} : vector<8x32xf32> to vector<8x4xf32>
    %338 = vector.extract_strided_slice %334 {offsets = [0, 4], sizes = [8, 4], strides = [1, 1]} : vector<8x32xf32> to vector<8x4xf32>
    %339 = vector.extract_strided_slice %334 {offsets = [0, 12], sizes = [8, 4], strides = [1, 1]} : vector<8x32xf32> to vector<8x4xf32>
    %340 = arith.mulf %338, %302 : vector<8x4xf32>
    %341 = arith.mulf %337, %336 : vector<8x4xf32>
    %342 = arith.addf %340, %341 : vector<8x4xf32>
    %343 = math.tanh %342 : vector<8x4xf32>
    %344 = arith.mulf %339, %343 : vector<8x4xf32>
    %c8_i32 = arith.constant 8 : i32
    %c0_74 = arith.constant 0 : index
    %c0_75 = arith.constant 0 : index
    %345 = vector.load %arg4[%c0_74, %c0_75] : memref<8x4xf32, #tpu.memory_space<vmem>>, vector<8x4xf32>
    tpu.vector_store %arg4[%c0_74, %c0_75], %344 {strides = array<i32>} : memref<8x4xf32, #tpu.memory_space<vmem>>, vector<8x4xf32>,
    %cst_76 = arith.constant dense<0.000000e+00> : vector<8x32xf32>
    %346 = tpu.matmul %344, %6, %cst_76 {dimension_numbers = #tpu.dot_dimension_numbers<[1], [0], [0], [1], [0, 0, 1, 1], [], []>} : vector<8x4xf32>, vector<4x32xf32>, vector<8x32xf32> -> vector<8x32xf32>
    %347 = vector.broadcast %8 : vector<1x32xf32> to vector<8x32xf32>
    %348 = arith.addf %346, %347 : vector<8x32xf32>
    %c0_i32_77 = arith.constant 0 : i32
    %cst_78 = arith.constant dense<0.000000e+00> : vector<8x32xf32>
    %349 = tpu.matmul %13, %7, %cst_78 {dimension_numbers = #tpu.dot_dimension_numbers<[1], [0], [0], [1], [0, 0, 1, 1], [], []>} : vector<8x4xf32>, vector<4x32xf32>, vector<8x32xf32> -> vector<8x32xf32>
    %350 = arith.addf %348, %349 : vector<8x32xf32>
    %351 = arith.negf %350 : vector<8x32xf32>
    %352 = math.exp %351 : vector<8x32xf32>
    %cst_79 = arith.constant 1.000000e+00 : f32
    %353 = vector.broadcast %cst_79 : f32 to vector<8x32xf32>
    %354 = arith.addf %353, %352 : vector<8x32xf32>
    %355 = arith.divf %353, %354 : vector<8x32xf32>
    %356 = vector.extract_strided_slice %350 {offsets = [0, 8], sizes = [8, 4], strides = [1, 1]} : vector<8x32xf32> to vector<8x4xf32>
    %357 = math.tanh %356 : vector<8x4xf32>
    %358 = vector.extract_strided_slice %355 {offsets = [0, 0], sizes = [8, 4], strides = [1, 1]} : vector<8x32xf32> to vector<8x4xf32>
    %359 = vector.extract_strided_slice %355 {offsets = [0, 4], sizes = [8, 4], strides = [1, 1]} : vector<8x32xf32> to vector<8x4xf32>
    %360 = vector.extract_strided_slice %355 {offsets = [0, 12], sizes = [8, 4], strides = [1, 1]} : vector<8x32xf32> to vector<8x4xf32>
    %361 = arith.mulf %359, %13 : vector<8x4xf32>
    %362 = arith.mulf %358, %357 : vector<8x4xf32>
    %363 = arith.addf %361, %362 : vector<8x4xf32>
    %364 = math.tanh %363 : vector<8x4xf32>
    %365 = arith.mulf %360, %364 : vector<8x4xf32>
    %cst_80 = arith.constant dense<0.000000e+00> : vector<8x32xf32>
    %366 = tpu.matmul %365, %9, %cst_80 {dimension_numbers = #tpu.dot_dimension_numbers<[1], [0], [0], [1], [0, 0, 1, 1], [], []>} : vector<8x4xf32>, vector<4x32xf32>, vector<8x32xf32> -> vector<8x32xf32>
    %367 = vector.broadcast %11 : vector<1x32xf32> to vector<8x32xf32>
    %368 = arith.addf %366, %367 : vector<8x32xf32>
    %cst_81 = arith.constant dense<0.000000e+00> : vector<8x32xf32>
    %369 = tpu.matmul %12, %10, %cst_81 {dimension_numbers = #tpu.dot_dimension_numbers<[1], [0], [0], [1], [0, 0, 1, 1], [], []>} : vector<8x8xf32>, vector<8x32xf32>, vector<8x32xf32> -> vector<8x32xf32>
    %370 = arith.addf %368, %369 : vector<8x32xf32>
    %371 = arith.negf %370 : vector<8x32xf32>
    %372 = math.exp %371 : vector<8x32xf32>
    %cst_82 = arith.constant 1.000000e+00 : f32
    %373 = vector.broadcast %cst_82 : f32 to vector<8x32xf32>
    %374 = arith.addf %373, %372 : vector<8x32xf32>
    %375 = arith.divf %373, %374 : vector<8x32xf32>
    %376 = vector.extract_strided_slice %370 {offsets = [0, 16], sizes = [8, 8], strides = [1, 1]} : vector<8x32xf32> to vector<8x8xf32>
    %377 = math.tanh %376 : vector<8x8xf32>
    %378 = vector.extract_strided_slice %375 {offsets = [0, 0], sizes = [8, 8], strides = [1, 1]} : vector<8x32xf32> to vector<8x8xf32>
    %379 = vector.extract_strided_slice %375 {offsets = [0, 8], sizes = [8, 8], strides = [1, 1]} : vector<8x32xf32> to vector<8x8xf32>
    %380 = vector.extract_strided_slice %375 {offsets = [0, 24], sizes = [8, 8], strides = [1, 1]} : vector<8x32xf32> to vector<8x8xf32>
    %381 = arith.mulf %379, %12 : vector<8x8xf32>
    %382 = arith.mulf %378, %377 : vector<8x8xf32>
    %383 = arith.addf %381, %382 : vector<8x8xf32>
    %384 = math.tanh %383 : vector<8x8xf32>
    %385 = arith.mulf %380, %384 : vector<8x8xf32>
    %386 = arith.index_cast %c0_i32_77 : i32 to index
    %c0_83 = arith.constant 0 : index
    %c0_84 = arith.constant 0 : index
    %387 = vector.load %arg6[%386, %c0_83, %c0_84] : memref<8x8x8xf32, #tpu.memory_space<vmem>>, vector<1x8x8xf32>
    %388 = vector.shape_cast %387 : vector<1x8x8xf32> to vector<8x8xf32>
    %389 = vector.shape_cast %385 : vector<8x8xf32> to vector<1x8x8xf32>
    tpu.vector_store %arg6[%386, %c0_83, %c0_84], %389 {strides = array<i32>} : memref<8x8x8xf32, #tpu.memory_space<vmem>>, vector<1x8x8xf32>,
    %c1_i32_85 = arith.constant 1 : i32
    %cst_86 = arith.constant dense<0.000000e+00> : vector<8x32xf32>
    %390 = tpu.matmul %365, %7, %cst_86 {dimension_numbers = #tpu.dot_dimension_numbers<[1], [0], [0], [1], [0, 0, 1, 1], [], []>} : vector<8x4xf32>, vector<4x32xf32>, vector<8x32xf32> -> vector<8x32xf32>
    %391 = arith.addf %348, %390 : vector<8x32xf32>
    %392 = arith.negf %391 : vector<8x32xf32>
    %393 = math.exp %392 : vector<8x32xf32>
    %cst_87 = arith.constant 1.000000e+00 : f32
    %394 = vector.broadcast %cst_87 : f32 to vector<8x32xf32>
    %395 = arith.addf %394, %393 : vector<8x32xf32>
    %396 = arith.divf %394, %395 : vector<8x32xf32>
    %397 = vector.extract_strided_slice %391 {offsets = [0, 8], sizes = [8, 4], strides = [1, 1]} : vector<8x32xf32> to vector<8x4xf32>
    %398 = math.tanh %397 : vector<8x4xf32>
    %399 = vector.extract_strided_slice %396 {offsets = [0, 0], sizes = [8, 4], strides = [1, 1]} : vector<8x32xf32> to vector<8x4xf32>
    %400 = vector.extract_strided_slice %396 {offsets = [0, 4], sizes = [8, 4], strides = [1, 1]} : vector<8x32xf32> to vector<8x4xf32>
    %401 = vector.extract_strided_slice %396 {offsets = [0, 12], sizes = [8, 4], strides = [1, 1]} : vector<8x32xf32> to vector<8x4xf32>
    %402 = arith.mulf %400, %363 : vector<8x4xf32>
    %403 = arith.mulf %399, %398 : vector<8x4xf32>
    %404 = arith.addf %402, %403 : vector<8x4xf32>
    %405 = math.tanh %404 : vector<8x4xf32>
    %406 = arith.mulf %401, %405 : vector<8x4xf32>
    %cst_88 = arith.constant dense<0.000000e+00> : vector<8x32xf32>
    %407 = tpu.matmul %406, %9, %cst_88 {dimension_numbers = #tpu.dot_dimension_numbers<[1], [0], [0], [1], [0, 0, 1, 1], [], []>} : vector<8x4xf32>, vector<4x32xf32>, vector<8x32xf32> -> vector<8x32xf32>
    %408 = vector.broadcast %11 : vector<1x32xf32> to vector<8x32xf32>
    %409 = arith.addf %407, %408 : vector<8x32xf32>
    %cst_89 = arith.constant dense<0.000000e+00> : vector<8x32xf32>
    %410 = tpu.matmul %385, %10, %cst_89 {dimension_numbers = #tpu.dot_dimension_numbers<[1], [0], [0], [1], [0, 0, 1, 1], [], []>} : vector<8x8xf32>, vector<8x32xf32>, vector<8x32xf32> -> vector<8x32xf32>
    %411 = arith.addf %409, %410 : vector<8x32xf32>
    %412 = arith.negf %411 : vector<8x32xf32>
    %413 = math.exp %412 : vector<8x32xf32>
    %cst_90 = arith.constant 1.000000e+00 : f32
    %414 = vector.broadcast %cst_90 : f32 to vector<8x32xf32>
    %415 = arith.addf %414, %413 : vector<8x32xf32>
    %416 = arith.divf %414, %415 : vector<8x32xf32>
    %417 = vector.extract_strided_slice %411 {offsets = [0, 16], sizes = [8, 8], strides = [1, 1]} : vector<8x32xf32> to vector<8x8xf32>
    %418 = math.tanh %417 : vector<8x8xf32>
    %419 = vector.extract_strided_slice %416 {offsets = [0, 0], sizes = [8, 8], strides = [1, 1]} : vector<8x32xf32> to vector<8x8xf32>
    %420 = vector.extract_strided_slice %416 {offsets = [0, 8], sizes = [8, 8], strides = [1, 1]} : vector<8x32xf32> to vector<8x8xf32>
    %421 = vector.extract_strided_slice %416 {offsets = [0, 24], sizes = [8, 8], strides = [1, 1]} : vector<8x32xf32> to vector<8x8xf32>
    %422 = arith.mulf %420, %383 : vector<8x8xf32>
    %423 = arith.mulf %419, %418 : vector<8x8xf32>
    %424 = arith.addf %422, %423 : vector<8x8xf32>
    %425 = math.tanh %424 : vector<8x8xf32>
    %426 = arith.mulf %421, %425 : vector<8x8xf32>
    %427 = arith.index_cast %c1_i32_85 : i32 to index
    %c0_91 = arith.constant 0 : index
    %c0_92 = arith.constant 0 : index
    %428 = vector.load %arg6[%427, %c0_91, %c0_92] : memref<8x8x8xf32, #tpu.memory_space<vmem>>, vector<1x8x8xf32>
    %429 = vector.shape_cast %428 : vector<1x8x8xf32> to vector<8x8xf32>
    %430 = vector.shape_cast %426 : vector<8x8xf32> to vector<1x8x8xf32>
    tpu.vector_store %arg6[%427, %c0_91, %c0_92], %430 {strides = array<i32>} : memref<8x8x8xf32, #tpu.memory_space<vmem>>, vector<1x8x8xf32>,
    %c2_i32_93 = arith.constant 2 : i32
    %cst_94 = arith.constant dense<0.000000e+00> : vector<8x32xf32>
    %431 = tpu.matmul %406, %7, %cst_94 {dimension_numbers = #tpu.dot_dimension_numbers<[1], [0], [0], [1], [0, 0, 1, 1], [], []>} : vector<8x4xf32>, vector<4x32xf32>, vector<8x32xf32> -> vector<8x32xf32>
    %432 = arith.addf %348, %431 : vector<8x32xf32>
    %433 = arith.negf %432 : vector<8x32xf32>
    %434 = math.exp %433 : vector<8x32xf32>
    %cst_95 = arith.constant 1.000000e+00 : f32
    %435 = vector.broadcast %cst_95 : f32 to vector<8x32xf32>
    %436 = arith.addf %435, %434 : vector<8x32xf32>
    %437 = arith.divf %435, %436 : vector<8x32xf32>
    %438 = vector.extract_strided_slice %432 {offsets = [0, 8], sizes = [8, 4], strides = [1, 1]} : vector<8x32xf32> to vector<8x4xf32>
    %439 = math.tanh %438 : vector<8x4xf32>
    %440 = vector.extract_strided_slice %437 {offsets = [0, 0], sizes = [8, 4], strides = [1, 1]} : vector<8x32xf32> to vector<8x4xf32>
    %441 = vector.extract_strided_slice %437 {offsets = [0, 4], sizes = [8, 4], strides = [1, 1]} : vector<8x32xf32> to vector<8x4xf32>
    %442 = vector.extract_strided_slice %437 {offsets = [0, 12], sizes = [8, 4], strides = [1, 1]} : vector<8x32xf32> to vector<8x4xf32>
    %443 = arith.mulf %441, %404 : vector<8x4xf32>
    %444 = arith.mulf %440, %439 : vector<8x4xf32>
    %445 = arith.addf %443, %444 : vector<8x4xf32>
    %446 = math.tanh %445 : vector<8x4xf32>
    %447 = arith.mulf %442, %446 : vector<8x4xf32>
    %cst_96 = arith.constant dense<0.000000e+00> : vector<8x32xf32>
    %448 = tpu.matmul %447, %9, %cst_96 {dimension_numbers = #tpu.dot_dimension_numbers<[1], [0], [0], [1], [0, 0, 1, 1], [], []>} : vector<8x4xf32>, vector<4x32xf32>, vector<8x32xf32> -> vector<8x32xf32>
    %449 = vector.broadcast %11 : vector<1x32xf32> to vector<8x32xf32>
    %450 = arith.addf %448, %449 : vector<8x32xf32>
    %cst_97 = arith.constant dense<0.000000e+00> : vector<8x32xf32>
    %451 = tpu.matmul %426, %10, %cst_97 {dimension_numbers = #tpu.dot_dimension_numbers<[1], [0], [0], [1], [0, 0, 1, 1], [], []>} : vector<8x8xf32>, vector<8x32xf32>, vector<8x32xf32> -> vector<8x32xf32>
    %452 = arith.addf %450, %451 : vector<8x32xf32>
    %453 = arith.negf %452 : vector<8x32xf32>
    %454 = math.exp %453 : vector<8x32xf32>
    %cst_98 = arith.constant 1.000000e+00 : f32
    %455 = vector.broadcast %cst_98 : f32 to vector<8x32xf32>
    %456 = arith.addf %455, %454 : vector<8x32xf32>
    %457 = arith.divf %455, %456 : vector<8x32xf32>
    %458 = vector.extract_strided_slice %452 {offsets = [0, 16], sizes = [8, 8], strides = [1, 1]} : vector<8x32xf32> to vector<8x8xf32>
    %459 = math.tanh %458 : vector<8x8xf32>
    %460 = vector.extract_strided_slice %457 {offsets = [0, 0], sizes = [8, 8], strides = [1, 1]} : vector<8x32xf32> to vector<8x8xf32>
    %461 = vector.extract_strided_slice %457 {offsets = [0, 8], sizes = [8, 8], strides = [1, 1]} : vector<8x32xf32> to vector<8x8xf32>
    %462 = vector.extract_strided_slice %457 {offsets = [0, 24], sizes = [8, 8], strides = [1, 1]} : vector<8x32xf32> to vector<8x8xf32>
    %463 = arith.mulf %461, %424 : vector<8x8xf32>
    %464 = arith.mulf %460, %459 : vector<8x8xf32>
    %465 = arith.addf %463, %464 : vector<8x8xf32>
    %466 = math.tanh %465 : vector<8x8xf32>
    %467 = arith.mulf %462, %466 : vector<8x8xf32>
    %468 = arith.index_cast %c2_i32_93 : i32 to index
    %c0_99 = arith.constant 0 : index
    %c0_100 = arith.constant 0 : index
    %469 = vector.load %arg6[%468, %c0_99, %c0_100] : memref<8x8x8xf32, #tpu.memory_space<vmem>>, vector<1x8x8xf32>
    %470 = vector.shape_cast %469 : vector<1x8x8xf32> to vector<8x8xf32>
    %471 = vector.shape_cast %467 : vector<8x8xf32> to vector<1x8x8xf32>
    tpu.vector_store %arg6[%468, %c0_99, %c0_100], %471 {strides = array<i32>} : memref<8x8x8xf32, #tpu.memory_space<vmem>>, vector<1x8x8xf32>,
    %c3_i32_101 = arith.constant 3 : i32
    %cst_102 = arith.constant dense<0.000000e+00> : vector<8x32xf32>
    %472 = tpu.matmul %447, %7, %cst_102 {dimension_numbers = #tpu.dot_dimension_numbers<[1], [0], [0], [1], [0, 0, 1, 1], [], []>} : vector<8x4xf32>, vector<4x32xf32>, vector<8x32xf32> -> vector<8x32xf32>
    %473 = arith.addf %348, %472 : vector<8x32xf32>
    %474 = arith.negf %473 : vector<8x32xf32>
    %475 = math.exp %474 : vector<8x32xf32>
    %cst_103 = arith.constant 1.000000e+00 : f32
    %476 = vector.broadcast %cst_103 : f32 to vector<8x32xf32>
    %477 = arith.addf %476, %475 : vector<8x32xf32>
    %478 = arith.divf %476, %477 : vector<8x32xf32>
    %479 = vector.extract_strided_slice %473 {offsets = [0, 8], sizes = [8, 4], strides = [1, 1]} : vector<8x32xf32> to vector<8x4xf32>
    %480 = math.tanh %479 : vector<8x4xf32>
    %481 = vector.extract_strided_slice %478 {offsets = [0, 0], sizes = [8, 4], strides = [1, 1]} : vector<8x32xf32> to vector<8x4xf32>
    %482 = vector.extract_strided_slice %478 {offsets = [0, 4], sizes = [8, 4], strides = [1, 1]} : vector<8x32xf32> to vector<8x4xf32>
    %483 = vector.extract_strided_slice %478 {offsets = [0, 12], sizes = [8, 4], strides = [1, 1]} : vector<8x32xf32> to vector<8x4xf32>
    %484 = arith.mulf %482, %445 : vector<8x4xf32>
    %485 = arith.mulf %481, %480 : vector<8x4xf32>
    %486 = arith.addf %484, %485 : vector<8x4xf32>
    %487 = math.tanh %486 : vector<8x4xf32>
    %488 = arith.mulf %483, %487 : vector<8x4xf32>
    %cst_104 = arith.constant dense<0.000000e+00> : vector<8x32xf32>
    %489 = tpu.matmul %488, %9, %cst_104 {dimension_numbers = #tpu.dot_dimension_numbers<[1], [0], [0], [1], [0, 0, 1, 1], [], []>} : vector<8x4xf32>, vector<4x32xf32>, vector<8x32xf32> -> vector<8x32xf32>
    %490 = vector.broadcast %11 : vector<1x32xf32> to vector<8x32xf32>
    %491 = arith.addf %489, %490 : vector<8x32xf32>
    %cst_105 = arith.constant dense<0.000000e+00> : vector<8x32xf32>
    %492 = tpu.matmul %467, %10, %cst_105 {dimension_numbers = #tpu.dot_dimension_numbers<[1], [0], [0], [1], [0, 0, 1, 1], [], []>} : vector<8x8xf32>, vector<8x32xf32>, vector<8x32xf32> -> vector<8x32xf32>
    %493 = arith.addf %491, %492 : vector<8x32xf32>
    %494 = arith.negf %493 : vector<8x32xf32>
    %495 = math.exp %494 : vector<8x32xf32>
    %cst_106 = arith.constant 1.000000e+00 : f32
    %496 = vector.broadcast %cst_106 : f32 to vector<8x32xf32>
    %497 = arith.addf %496, %495 : vector<8x32xf32>
    %498 = arith.divf %496, %497 : vector<8x32xf32>
    %499 = vector.extract_strided_slice %493 {offsets = [0, 16], sizes = [8, 8], strides = [1, 1]} : vector<8x32xf32> to vector<8x8xf32>
    %500 = math.tanh %499 : vector<8x8xf32>
    %501 = vector.extract_strided_slice %498 {offsets = [0, 0], sizes = [8, 8], strides = [1, 1]} : vector<8x32xf32> to vector<8x8xf32>
    %502 = vector.extract_strided_slice %498 {offsets = [0, 8], sizes = [8, 8], strides = [1, 1]} : vector<8x32xf32> to vector<8x8xf32>
    %503 = vector.extract_strided_slice %498 {offsets = [0, 24], sizes = [8, 8], strides = [1, 1]} : vector<8x32xf32> to vector<8x8xf32>
    %504 = arith.mulf %502, %465 : vector<8x8xf32>
    %505 = arith.mulf %501, %500 : vector<8x8xf32>
    %506 = arith.addf %504, %505 : vector<8x8xf32>
    %507 = math.tanh %506 : vector<8x8xf32>
    %508 = arith.mulf %503, %507 : vector<8x8xf32>
    %509 = arith.index_cast %c3_i32_101 : i32 to index
    %c0_107 = arith.constant 0 : index
    %c0_108 = arith.constant 0 : index
    %510 = vector.load %arg6[%509, %c0_107, %c0_108] : memref<8x8x8xf32, #tpu.memory_space<vmem>>, vector<1x8x8xf32>
    %511 = vector.shape_cast %510 : vector<1x8x8xf32> to vector<8x8xf32>
    %512 = vector.shape_cast %508 : vector<8x8xf32> to vector<1x8x8xf32>
    tpu.vector_store %arg6[%509, %c0_107, %c0_108], %512 {strides = array<i32>} : memref<8x8x8xf32, #tpu.memory_space<vmem>>, vector<1x8x8xf32>,
    %c4_i32_109 = arith.constant 4 : i32
    %cst_110 = arith.constant dense<0.000000e+00> : vector<8x32xf32>
    %513 = tpu.matmul %488, %7, %cst_110 {dimension_numbers = #tpu.dot_dimension_numbers<[1], [0], [0], [1], [0, 0, 1, 1], [], []>} : vector<8x4xf32>, vector<4x32xf32>, vector<8x32xf32> -> vector<8x32xf32>
    %514 = arith.addf %348, %513 : vector<8x32xf32>
    %515 = arith.negf %514 : vector<8x32xf32>
    %516 = math.exp %515 : vector<8x32xf32>
    %cst_111 = arith.constant 1.000000e+00 : f32
    %517 = vector.broadcast %cst_111 : f32 to vector<8x32xf32>
    %518 = arith.addf %517, %516 : vector<8x32xf32>
    %519 = arith.divf %517, %518 : vector<8x32xf32>
    %520 = vector.extract_strided_slice %514 {offsets = [0, 8], sizes = [8, 4], strides = [1, 1]} : vector<8x32xf32> to vector<8x4xf32>
    %521 = math.tanh %520 : vector<8x4xf32>
    %522 = vector.extract_strided_slice %519 {offsets = [0, 0], sizes = [8, 4], strides = [1, 1]} : vector<8x32xf32> to vector<8x4xf32>
    %523 = vector.extract_strided_slice %519 {offsets = [0, 4], sizes = [8, 4], strides = [1, 1]} : vector<8x32xf32> to vector<8x4xf32>
    %524 = vector.extract_strided_slice %519 {offsets = [0, 12], sizes = [8, 4], strides = [1, 1]} : vector<8x32xf32> to vector<8x4xf32>
    %525 = arith.mulf %523, %486 : vector<8x4xf32>
    %526 = arith.mulf %522, %521 : vector<8x4xf32>
    %527 = arith.addf %525, %526 : vector<8x4xf32>
    %528 = math.tanh %527 : vector<8x4xf32>
    %529 = arith.mulf %524, %528 : vector<8x4xf32>
    %cst_112 = arith.constant dense<0.000000e+00> : vector<8x32xf32>
    %530 = tpu.matmul %529, %9, %cst_112 {dimension_numbers = #tpu.dot_dimension_numbers<[1], [0], [0], [1], [0, 0, 1, 1], [], []>} : vector<8x4xf32>, vector<4x32xf32>, vector<8x32xf32> -> vector<8x32xf32>
    %531 = vector.broadcast %11 : vector<1x32xf32> to vector<8x32xf32>
    %532 = arith.addf %530, %531 : vector<8x32xf32>
    %cst_113 = arith.constant dense<0.000000e+00> : vector<8x32xf32>
    %533 = tpu.matmul %508, %10, %cst_113 {dimension_numbers = #tpu.dot_dimension_numbers<[1], [0], [0], [1], [0, 0, 1, 1], [], []>} : vector<8x8xf32>, vector<8x32xf32>, vector<8x32xf32> -> vector<8x32xf32>
    %534 = arith.addf %532, %533 : vector<8x32xf32>
    %535 = arith.negf %534 : vector<8x32xf32>
    %536 = math.exp %535 : vector<8x32xf32>
    %cst_114 = arith.constant 1.000000e+00 : f32
    %537 = vector.broadcast %cst_114 : f32 to vector<8x32xf32>
    %538 = arith.addf %537, %536 : vector<8x32xf32>
    %539 = arith.divf %537, %538 : vector<8x32xf32>
    %540 = vector.extract_strided_slice %534 {offsets = [0, 16], sizes = [8, 8], strides = [1, 1]} : vector<8x32xf32> to vector<8x8xf32>
    %541 = math.tanh %540 : vector<8x8xf32>
    %542 = vector.extract_strided_slice %539 {offsets = [0, 0], sizes = [8, 8], strides = [1, 1]} : vector<8x32xf32> to vector<8x8xf32>
    %543 = vector.extract_strided_slice %539 {offsets = [0, 8], sizes = [8, 8], strides = [1, 1]} : vector<8x32xf32> to vector<8x8xf32>
    %544 = vector.extract_strided_slice %539 {offsets = [0, 24], sizes = [8, 8], strides = [1, 1]} : vector<8x32xf32> to vector<8x8xf32>
    %545 = arith.mulf %543, %506 : vector<8x8xf32>
    %546 = arith.mulf %542, %541 : vector<8x8xf32>
    %547 = arith.addf %545, %546 : vector<8x8xf32>
    %548 = math.tanh %547 : vector<8x8xf32>
    %549 = arith.mulf %544, %548 : vector<8x8xf32>
    %550 = arith.index_cast %c4_i32_109 : i32 to index
    %c0_115 = arith.constant 0 : index
    %c0_116 = arith.constant 0 : index
    %551 = vector.load %arg6[%550, %c0_115, %c0_116] : memref<8x8x8xf32, #tpu.memory_space<vmem>>, vector<1x8x8xf32>
    %552 = vector.shape_cast %551 : vector<1x8x8xf32> to vector<8x8xf32>
    %553 = vector.shape_cast %549 : vector<8x8xf32> to vector<1x8x8xf32>
    tpu.vector_store %arg6[%550, %c0_115, %c0_116], %553 {strides = array<i32>} : memref<8x8x8xf32, #tpu.memory_space<vmem>>, vector<1x8x8xf32>,
    %c5_i32_117 = arith.constant 5 : i32
    %cst_118 = arith.constant dense<0.000000e+00> : vector<8x32xf32>
    %554 = tpu.matmul %529, %7, %cst_118 {dimension_numbers = #tpu.dot_dimension_numbers<[1], [0], [0], [1], [0, 0, 1, 1], [], []>} : vector<8x4xf32>, vector<4x32xf32>, vector<8x32xf32> -> vector<8x32xf32>
    %555 = arith.addf %348, %554 : vector<8x32xf32>
    %556 = arith.negf %555 : vector<8x32xf32>
    %557 = math.exp %556 : vector<8x32xf32>
    %cst_119 = arith.constant 1.000000e+00 : f32
    %558 = vector.broadcast %cst_119 : f32 to vector<8x32xf32>
    %559 = arith.addf %558, %557 : vector<8x32xf32>
    %560 = arith.divf %558, %559 : vector<8x32xf32>
    %561 = vector.extract_strided_slice %555 {offsets = [0, 8], sizes = [8, 4], strides = [1, 1]} : vector<8x32xf32> to vector<8x4xf32>
    %562 = math.tanh %561 : vector<8x4xf32>
    %563 = vector.extract_strided_slice %560 {offsets = [0, 0], sizes = [8, 4], strides = [1, 1]} : vector<8x32xf32> to vector<8x4xf32>
    %564 = vector.extract_strided_slice %560 {offsets = [0, 4], sizes = [8, 4], strides = [1, 1]} : vector<8x32xf32> to vector<8x4xf32>
    %565 = vector.extract_strided_slice %560 {offsets = [0, 12], sizes = [8, 4], strides = [1, 1]} : vector<8x32xf32> to vector<8x4xf32>
    %566 = arith.mulf %564, %527 : vector<8x4xf32>
    %567 = arith.mulf %563, %562 : vector<8x4xf32>
    %568 = arith.addf %566, %567 : vector<8x4xf32>
    %569 = math.tanh %568 : vector<8x4xf32>
    %570 = arith.mulf %565, %569 : vector<8x4xf32>
    %cst_120 = arith.constant dense<0.000000e+00> : vector<8x32xf32>
    %571 = tpu.matmul %570, %9, %cst_120 {dimension_numbers = #tpu.dot_dimension_numbers<[1], [0], [0], [1], [0, 0, 1, 1], [], []>} : vector<8x4xf32>, vector<4x32xf32>, vector<8x32xf32> -> vector<8x32xf32>
    %572 = vector.broadcast %11 : vector<1x32xf32> to vector<8x32xf32>
    %573 = arith.addf %571, %572 : vector<8x32xf32>
    %cst_121 = arith.constant dense<0.000000e+00> : vector<8x32xf32>
    %574 = tpu.matmul %549, %10, %cst_121 {dimension_numbers = #tpu.dot_dimension_numbers<[1], [0], [0], [1], [0, 0, 1, 1], [], []>} : vector<8x8xf32>, vector<8x32xf32>, vector<8x32xf32> -> vector<8x32xf32>
    %575 = arith.addf %573, %574 : vector<8x32xf32>
    %576 = arith.negf %575 : vector<8x32xf32>
    %577 = math.exp %576 : vector<8x32xf32>
    %cst_122 = arith.constant 1.000000e+00 : f32
    %578 = vector.broadcast %cst_122 : f32 to vector<8x32xf32>
    %579 = arith.addf %578, %577 : vector<8x32xf32>
    %580 = arith.divf %578, %579 : vector<8x32xf32>
    %581 = vector.extract_strided_slice %575 {offsets = [0, 16], sizes = [8, 8], strides = [1, 1]} : vector<8x32xf32> to vector<8x8xf32>
    %582 = math.tanh %581 : vector<8x8xf32>
    %583 = vector.extract_strided_slice %580 {offsets = [0, 0], sizes = [8, 8], strides = [1, 1]} : vector<8x32xf32> to vector<8x8xf32>
    %584 = vector.extract_strided_slice %580 {offsets = [0, 8], sizes = [8, 8], strides = [1, 1]} : vector<8x32xf32> to vector<8x8xf32>
    %585 = vector.extract_strided_slice %580 {offsets = [0, 24], sizes = [8, 8], strides = [1, 1]} : vector<8x32xf32> to vector<8x8xf32>
    %586 = arith.mulf %584, %547 : vector<8x8xf32>
    %587 = arith.mulf %583, %582 : vector<8x8xf32>
    %588 = arith.addf %586, %587 : vector<8x8xf32>
    %589 = math.tanh %588 : vector<8x8xf32>
    %590 = arith.mulf %585, %589 : vector<8x8xf32>
    %591 = arith.index_cast %c5_i32_117 : i32 to index
    %c0_123 = arith.constant 0 : index
    %c0_124 = arith.constant 0 : index
    %592 = vector.load %arg6[%591, %c0_123, %c0_124] : memref<8x8x8xf32, #tpu.memory_space<vmem>>, vector<1x8x8xf32>
    %593 = vector.shape_cast %592 : vector<1x8x8xf32> to vector<8x8xf32>
    %594 = vector.shape_cast %590 : vector<8x8xf32> to vector<1x8x8xf32>
    tpu.vector_store %arg6[%591, %c0_123, %c0_124], %594 {strides = array<i32>} : memref<8x8x8xf32, #tpu.memory_space<vmem>>, vector<1x8x8xf32>,
    %c6_i32_125 = arith.constant 6 : i32
    %cst_126 = arith.constant dense<0.000000e+00> : vector<8x32xf32>
    %595 = tpu.matmul %570, %7, %cst_126 {dimension_numbers = #tpu.dot_dimension_numbers<[1], [0], [0], [1], [0, 0, 1, 1], [], []>} : vector<8x4xf32>, vector<4x32xf32>, vector<8x32xf32> -> vector<8x32xf32>
    %596 = arith.addf %348, %595 : vector<8x32xf32>
    %597 = arith.negf %596 : vector<8x32xf32>
    %598 = math.exp %597 : vector<8x32xf32>
    %cst_127 = arith.constant 1.000000e+00 : f32
    %599 = vector.broadcast %cst_127 : f32 to vector<8x32xf32>
    %600 = arith.addf %599, %598 : vector<8x32xf32>
    %601 = arith.divf %599, %600 : vector<8x32xf32>
    %602 = vector.extract_strided_slice %596 {offsets = [0, 8], sizes = [8, 4], strides = [1, 1]} : vector<8x32xf32> to vector<8x4xf32>
    %603 = math.tanh %602 : vector<8x4xf32>
    %604 = vector.extract_strided_slice %601 {offsets = [0, 0], sizes = [8, 4], strides = [1, 1]} : vector<8x32xf32> to vector<8x4xf32>
    %605 = vector.extract_strided_slice %601 {offsets = [0, 4], sizes = [8, 4], strides = [1, 1]} : vector<8x32xf32> to vector<8x4xf32>
    %606 = vector.extract_strided_slice %601 {offsets = [0, 12], sizes = [8, 4], strides = [1, 1]} : vector<8x32xf32> to vector<8x4xf32>
    %607 = arith.mulf %605, %568 : vector<8x4xf32>
    %608 = arith.mulf %604, %603 : vector<8x4xf32>
    %609 = arith.addf %607, %608 : vector<8x4xf32>
    %610 = math.tanh %609 : vector<8x4xf32>
    %611 = arith.mulf %606, %610 : vector<8x4xf32>
    %cst_128 = arith.constant dense<0.000000e+00> : vector<8x32xf32>
    %612 = tpu.matmul %611, %9, %cst_128 {dimension_numbers = #tpu.dot_dimension_numbers<[1], [0], [0], [1], [0, 0, 1, 1], [], []>} : vector<8x4xf32>, vector<4x32xf32>, vector<8x32xf32> -> vector<8x32xf32>
    %613 = vector.broadcast %11 : vector<1x32xf32> to vector<8x32xf32>
    %614 = arith.addf %612, %613 : vector<8x32xf32>
    %cst_129 = arith.constant dense<0.000000e+00> : vector<8x32xf32>
    %615 = tpu.matmul %590, %10, %cst_129 {dimension_numbers = #tpu.dot_dimension_numbers<[1], [0], [0], [1], [0, 0, 1, 1], [], []>} : vector<8x8xf32>, vector<8x32xf32>, vector<8x32xf32> -> vector<8x32xf32>
    %616 = arith.addf %614, %615 : vector<8x32xf32>
    %617 = arith.negf %616 : vector<8x32xf32>
    %618 = math.exp %617 : vector<8x32xf32>
    %cst_130 = arith.constant 1.000000e+00 : f32
    %619 = vector.broadcast %cst_130 : f32 to vector<8x32xf32>
    %620 = arith.addf %619, %618 : vector<8x32xf32>
    %621 = arith.divf %619, %620 : vector<8x32xf32>
    %622 = vector.extract_strided_slice %616 {offsets = [0, 16], sizes = [8, 8], strides = [1, 1]} : vector<8x32xf32> to vector<8x8xf32>
    %623 = math.tanh %622 : vector<8x8xf32>
    %624 = vector.extract_strided_slice %621 {offsets = [0, 0], sizes = [8, 8], strides = [1, 1]} : vector<8x32xf32> to vector<8x8xf32>
    %625 = vector.extract_strided_slice %621 {offsets = [0, 8], sizes = [8, 8], strides = [1, 1]} : vector<8x32xf32> to vector<8x8xf32>
    %626 = vector.extract_strided_slice %621 {offsets = [0, 24], sizes = [8, 8], strides = [1, 1]} : vector<8x32xf32> to vector<8x8xf32>
    %627 = arith.mulf %625, %588 : vector<8x8xf32>
    %628 = arith.mulf %624, %623 : vector<8x8xf32>
    %629 = arith.addf %627, %628 : vector<8x8xf32>
    %630 = math.tanh %629 : vector<8x8xf32>
    %631 = arith.mulf %626, %630 : vector<8x8xf32>
    %632 = arith.index_cast %c6_i32_125 : i32 to index
    %c0_131 = arith.constant 0 : index
    %c0_132 = arith.constant 0 : index
    %633 = vector.load %arg6[%632, %c0_131, %c0_132] : memref<8x8x8xf32, #tpu.memory_space<vmem>>, vector<1x8x8xf32>
    %634 = vector.shape_cast %633 : vector<1x8x8xf32> to vector<8x8xf32>
    %635 = vector.shape_cast %631 : vector<8x8xf32> to vector<1x8x8xf32>
    tpu.vector_store %arg6[%632, %c0_131, %c0_132], %635 {strides = array<i32>} : memref<8x8x8xf32, #tpu.memory_space<vmem>>, vector<1x8x8xf32>,
    %c7_i32_133 = arith.constant 7 : i32
    %cst_134 = arith.constant dense<0.000000e+00> : vector<8x32xf32>
    %636 = tpu.matmul %611, %7, %cst_134 {dimension_numbers = #tpu.dot_dimension_numbers<[1], [0], [0], [1], [0, 0, 1, 1], [], []>} : vector<8x4xf32>, vector<4x32xf32>, vector<8x32xf32> -> vector<8x32xf32>
    %637 = arith.addf %348, %636 : vector<8x32xf32>
    %638 = arith.negf %637 : vector<8x32xf32>
    %639 = math.exp %638 : vector<8x32xf32>
    %cst_135 = arith.constant 1.000000e+00 : f32
    %640 = vector.broadcast %cst_135 : f32 to vector<8x32xf32>
    %641 = arith.addf %640, %639 : vector<8x32xf32>
    %642 = arith.divf %640, %641 : vector<8x32xf32>
    %643 = vector.extract_strided_slice %637 {offsets = [0, 8], sizes = [8, 4], strides = [1, 1]} : vector<8x32xf32> to vector<8x4xf32>
    %644 = math.tanh %643 : vector<8x4xf32>
    %645 = vector.extract_strided_slice %642 {offsets = [0, 0], sizes = [8, 4], strides = [1, 1]} : vector<8x32xf32> to vector<8x4xf32>
    %646 = vector.extract_strided_slice %642 {offsets = [0, 4], sizes = [8, 4], strides = [1, 1]} : vector<8x32xf32> to vector<8x4xf32>
    %647 = vector.extract_strided_slice %642 {offsets = [0, 12], sizes = [8, 4], strides = [1, 1]} : vector<8x32xf32> to vector<8x4xf32>
    %648 = arith.mulf %646, %609 : vector<8x4xf32>
    %649 = arith.mulf %645, %644 : vector<8x4xf32>
    %650 = arith.addf %648, %649 : vector<8x4xf32>
    %651 = math.tanh %650 : vector<8x4xf32>
    %652 = arith.mulf %647, %651 : vector<8x4xf32>
    %cst_136 = arith.constant dense<0.000000e+00> : vector<8x32xf32>
    %653 = tpu.matmul %652, %9, %cst_136 {dimension_numbers = #tpu.dot_dimension_numbers<[1], [0], [0], [1], [0, 0, 1, 1], [], []>} : vector<8x4xf32>, vector<4x32xf32>, vector<8x32xf32> -> vector<8x32xf32>
    %654 = vector.broadcast %11 : vector<1x32xf32> to vector<8x32xf32>
    %655 = arith.addf %653, %654 : vector<8x32xf32>
    %cst_137 = arith.constant dense<0.000000e+00> : vector<8x32xf32>
    %656 = tpu.matmul %631, %10, %cst_137 {dimension_numbers = #tpu.dot_dimension_numbers<[1], [0], [0], [1], [0, 0, 1, 1], [], []>} : vector<8x8xf32>, vector<8x32xf32>, vector<8x32xf32> -> vector<8x32xf32>
    %657 = arith.addf %655, %656 : vector<8x32xf32>
    %658 = arith.negf %657 : vector<8x32xf32>
    %659 = math.exp %658 : vector<8x32xf32>
    %cst_138 = arith.constant 1.000000e+00 : f32
    %660 = vector.broadcast %cst_138 : f32 to vector<8x32xf32>
    %661 = arith.addf %660, %659 : vector<8x32xf32>
    %662 = arith.divf %660, %661 : vector<8x32xf32>
    %663 = vector.extract_strided_slice %657 {offsets = [0, 16], sizes = [8, 8], strides = [1, 1]} : vector<8x32xf32> to vector<8x8xf32>
    %664 = math.tanh %663 : vector<8x8xf32>
    %665 = vector.extract_strided_slice %662 {offsets = [0, 0], sizes = [8, 8], strides = [1, 1]} : vector<8x32xf32> to vector<8x8xf32>
    %666 = vector.extract_strided_slice %662 {offsets = [0, 8], sizes = [8, 8], strides = [1, 1]} : vector<8x32xf32> to vector<8x8xf32>
    %667 = vector.extract_strided_slice %662 {offsets = [0, 24], sizes = [8, 8], strides = [1, 1]} : vector<8x32xf32> to vector<8x8xf32>
    %668 = arith.mulf %666, %629 : vector<8x8xf32>
    %669 = arith.mulf %665, %664 : vector<8x8xf32>
    %670 = arith.addf %668, %669 : vector<8x8xf32>
    %671 = math.tanh %670 : vector<8x8xf32>
    %672 = arith.mulf %667, %671 : vector<8x8xf32>
    %673 = arith.index_cast %c7_i32_133 : i32 to index
    %c0_139 = arith.constant 0 : index
    %c0_140 = arith.constant 0 : index
    %674 = vector.load %arg6[%673, %c0_139, %c0_140] : memref<8x8x8xf32, #tpu.memory_space<vmem>>, vector<1x8x8xf32>
    %675 = vector.shape_cast %674 : vector<1x8x8xf32> to vector<8x8xf32>
    %676 = vector.shape_cast %672 : vector<8x8xf32> to vector<1x8x8xf32>
    tpu.vector_store %arg6[%673, %c0_139, %c0_140], %676 {strides = array<i32>} : memref<8x8x8xf32, #tpu.memory_space<vmem>>, vector<1x8x8xf32>,
    %c8_i32_141 = arith.constant 8 : i32
    %c96 = arith.constant 96 : index
    %c0_142 = arith.constant 0 : index
    %677 = vector.load %arg2[%c96, %c0_142] : memref<104x32xf32, #tpu.memory_space<vmem>>, vector<1x8xf32>
    %c96_143 = arith.constant 96 : index
    %c8_144 = arith.constant 8 : index
    %678 = vector.load %arg2[%c96_143, %c8_144] : memref<104x32xf32, #tpu.memory_space<vmem>>, vector<1x1xf32>
    %c0_145 = arith.constant 0 : index
    %c0_146 = arith.constant 0 : index
    %c0_147 = arith.constant 0 : index
    %679 = vector.load %arg6[%c0_145, %c0_146, %c0_147] : memref<8x8x8xf32, #tpu.memory_space<vmem>>, vector<8x8x8xf32>
    %680 = vector.shape_cast %677 : vector<1x8xf32> to vector<1x1x8xf32>
    %681 = vector.broadcast %680 : vector<1x1x8xf32> to vector<8x8x8xf32>
    %682 = arith.mulf %679, %681 : vector<8x8x8xf32>
    %cst_148 = arith.constant dense<0.000000e+00> : vector<8x8xf32>
    %683 = vector.multi_reduction <add>, %682, %cst_148 [2] : vector<8x8x8xf32> to vector<8x8xf32>
    %684 = tpu.transpose %683, [1, 0] : vector<8x8xf32> -> vector<8x8xf32>
    %685 = vector.broadcast %678 : vector<1x1xf32> to vector<8x8xf32>
    %686 = arith.addf %684, %685 : vector<8x8xf32>
    %c0_149 = arith.constant 0 : index
    %c0_150 = arith.constant 0 : index
    %687 = vector.load %arg3[%c0_149, %c0_150] : memref<8x8xf32, #tpu.memory_space<vmem>>, vector<8x8xf32>
    tpu.vector_store %arg3[%c0_149, %c0_150], %686 {strides = array<i32>} : memref<8x8xf32, #tpu.memory_space<vmem>>, vector<8x8xf32>,
    return
  }
  func.func @transform_0(%arg0: i32) -> (i32, i32) {
    %c0_i32 = arith.constant 0 : i32
    %c0_i32_0 = arith.constant 0 : i32
    return %arg0, %c0_i32 : i32, i32
  }
  func.func @transform_1(%arg0: i32) -> (i32, i32) {
    %c0_i32 = arith.constant 0 : i32
    %c0_i32_0 = arith.constant 0 : i32
    %c0_i32_1 = arith.constant 0 : i32
    return %c0_i32, %c0_i32_0 : i32, i32
  }
  func.func @transform_2(%arg0: i32) -> (i32, i32) {
    %c0_i32 = arith.constant 0 : i32
    %c0_i32_0 = arith.constant 0 : i32
    return %arg0, %c0_i32 : i32, i32
  }
  func.func @transform_3(%arg0: i32) -> (i32, i32) {
    %c0_i32 = arith.constant 0 : i32
    %c0_i32_0 = arith.constant 0 : i32
    return %arg0, %c0_i32 : i32, i32
  }
}

</mosaic_0001>

<llo_original>
// kernel: autoencoder_rnn_forward.1
$region0: #{autoencoder_rnn_forward.1}
  #allocation0 [shape = 'u32[]', space=smem, size = 0x4, offset = 0x4, fixed_abs, tag = 'smem constant byte address 0x4 - core index']
  #allocation1 [shape = 'u32[144,128]{1,0:T(1,128)}', space=vmem, size = 0x12000, scoped, tag = 'internal scratch']
  #allocation2 [shape = 'f32[8,8,32]{2,1,0:T(8,128)}', space=vmem, size = 0x8000, scoped, tag = 'scratch operand']
  #allocation3 [shape = 'f32[8,8,8]{2,1,0:T(8,128)}', space=vmem, size = 0x8000, scoped, tag = 'scratch operand']
  %s0 = inlined_call_operand.vmem [shape: f32[16,8], index: 0, kind: input, shape index: {}]
  %s1 = inlined_call_operand.vmem [shape: f32[104,32], index: 1, kind: input, shape index: {}]
  %s2 = inlined_call_operand.vmem [shape: f32[16,8], index: 2, kind: output, shape index: {0}]
  %s3 = inlined_call_operand.vmem [shape: f32[16,4], index: 3, kind: output, shape index: {1}]
  %4 = xla_tuple %s2, %s3
  %s5 = sld [smem:[#allocation0]]
  $region49: #{autoencoder_rnn_forward.1} parent=0
    _
  %s7 = ssub.s32 1, %s5
  %s8 = scalar_select 0, %s7, %s5
  loop: start=0, step=1, limit=4
  $region2: #{autoencoder_rnn_forward.1} parent=0 // loop_pre_header
    _
  $region3: #{autoencoder_rnn_forward.1} parent=0 // loop_header
    %s10 = sphi 0, %s14
    %p11 = scmp.ge.s32.totalorder %s10, 4
    %s20 = sphi 0, %s22
    %s23 = sphi 0, %s20
    %s24 = sphi 0, %s23
    %s40 = sphi 0, %s24
    %s44 = sphi 0, %s44
    %s46 = sphi 0, %s44
    %s47 = sphi 0, %s46
    %s61 = sphi 0, %s47
    %s67 = sphi 0, %s69
    %s70 = sphi 0, %s67
    %s71 = sphi 0, %s70
    %s87 = sphi 0, %s71
    %s93 = sphi 0, %s95
    %s96 = sphi 0, %s93
    %s97 = sphi 0, %s96
    %s113 = sphi 0, %s97
  $region4: #{autoencoder_rnn_forward.1} parent=0 // loop_header_branch
    %13 = sbr.rel (%p11) target = $region8
  $region5: #{autoencoder_rnn_forward.1} parent=0 // loop_body
    %s15 = ssub.s32 %s10, 1
    %s16 = ssub.s32 %s10, 2
    %s17 = sadd.s32 %s10, 1
    %s18 = ssub.s32 %s10, %s17
    %p19 = scmp.eq.s32.totalorder %s18, 0
    %s21 = sadd.s32 %s20, 1
    %s22 = scalar_select %p19, %s20, %s21
    %p25 = pneg %p19
    %p26 = scmp.eq.s32.totalorder %s10, 1
    %p27 = por %p25, %p26
    %p28 = scmp.ne.s32.totalorder %s20, %s23
    %p29 = scmp.eq.s32.totalorder %s10, 0
    %p30 = por %p28, %p29
    %p31 = scmp.ne.s32.totalorder %s20, %s23
    %p32 = scmp.eq.s32.totalorder %s15, 1
    %p33 = por %p31, %p32
    %p34 = scmp.ne.s32.totalorder %s23, %s24
    %p35 = scmp.eq.s32.totalorder %s15, 0
    %p36 = por %p34, %p35
    %p37 = scmp.ne.s32.totalorder %s23, %s24
    %p38 = scmp.eq.s32.totalorder %s16, 1
    %p39 = por %p37, %p38
    %p41 = scmp.ne.s32.totalorder %s24, %s40
    %p42 = scmp.eq.s32.totalorder %s16, 0
    %p43 = por %p41, %p42
    %s45 = sadd.s32 %s44, 1
    %p48 = scmp.eq.s32.totalorder %s10, 1
    %p49 = scmp.ne.s32.totalorder %s44, %s46
    %p50 = scmp.eq.s32.totalorder %s10, 0
    %p51 = por %p49, %p50
    %p52 = scmp.ne.s32.totalorder %s44, %s46
    %p53 = scmp.eq.s32.totalorder %s15, 1
    %p54 = por %p52, %p53
    %p55 = scmp.ne.s32.totalorder %s46, %s47
    %p56 = scmp.eq.s32.totalorder %s15, 0
    %p57 = por %p55, %p56
    %p58 = scmp.ne.s32.totalorder %s46, %s47
    %p59 = scmp.eq.s32.totalorder %s16, 1
    %p60 = por %p58, %p59
    %p62 = scmp.ne.s32.totalorder %s47, %s61
    %p63 = scmp.eq.s32.totalorder %s16, 0
    %p64 = por %p62, %p63
    %s65 = ssub.s32 %s10, %s17
    %p66 = scmp.eq.s32.totalorder %s65, 0
    %s68 = sadd.s32 %s67, 1
    %s69 = scalar_select %p66, %s67, %s68
    %p72 = pneg %p66
    %p73 = scmp.eq.s32.totalorder %s10, 1
    %p74 = por %p72, %p73
    %p75 = scmp.ne.s32.totalorder %s67, %s70
    %p76 = scmp.eq.s32.totalorder %s10, 0
    %p77 = por %p75, %p76
    %p78 = scmp.ne.s32.totalorder %s67, %s70
    %p79 = scmp.eq.s32.totalorder %s15, 1
    %p80 = por %p78, %p79
    %p81 = scmp.ne.s32.totalorder %s70, %s71
    %p82 = scmp.eq.s32.totalorder %s15, 0
    %p83 = por %p81, %p82
    %p84 = scmp.ne.s32.totalorder %s70, %s71
    %p85 = scmp.eq.s32.totalorder %s16, 1
    %p86 = por %p84, %p85
    %p88 = scmp.ne.s32.totalorder %s71, %s87
    %p89 = scmp.eq.s32.totalorder %s16, 0
    %p90 = por %p88, %p89
    %s91 = ssub.s32 %s10, %s17
    %p92 = scmp.eq.s32.totalorder %s91, 0
    %s94 = sadd.s32 %s93, 1
    %s95 = scalar_select %p92, %s93, %s94
    %p98 = pneg %p92
    %p99 = scmp.eq.s32.totalorder %s10, 1
    %p100 = por %p98, %p99
    %p101 = scmp.ne.s32.totalorder %s93, %s96
    %p102 = scmp.eq.s32.totalorder %s10, 0
    %p103 = por %p101, %p102
    %p104 = scmp.ne.s32.totalorder %s93, %s96
    %p105 = scmp.eq.s32.totalorder %s15, 1
    %p106 = por %p104, %p105
    %p107 = scmp.ne.s32.totalorder %s96, %s97
    %p108 = scmp.eq.s32.totalorder %s15, 0
    %p109 = por %p107, %p108
    %p110 = scmp.ne.s32.totalorder %s96, %s97
    %p111 = scmp.eq.s32.totalorder %s16, 1
    %p112 = por %p110, %p111
    %p114 = scmp.ne.s32.totalorder %s97, %s113
    %p115 = scmp.eq.s32.totalorder %s16, 0
    %p116 = por %p114, %p115
    %p117 = scmp.le.s32.totalorder 1, %s10
    %p118 = scmp.lt.s32.totalorder %s10, 3
    %p119 = pnand %p117, %p118
    %p120 = pneg %p119
    // Predicated region
    $region9: #{autoencoder_rnn_forward.1} parent=5 // pred_check
      _
    $region10: #{autoencoder_rnn_forward.1} parent=5 // pred_check_branch
      %122 = sbr.rel (%p119) target = $region12
    $region11: #{autoencoder_rnn_forward.1} parent=5 // pred_region
      %s123 = ssub.s32 %s10, 1
      // Predicated region
      $region13: #{autoencoder_rnn_forward.1} parent=11 // pred_check
        %p124 = pneg %p57
      $region14: #{autoencoder_rnn_forward.1} parent=11 // pred_check_branch
        %126 = sbr.rel (%p124) target = $region16
      $region15: #{autoencoder_rnn_forward.1} parent=11 // pred_region
        _
      $region16: #{autoencoder_rnn_forward.1} parent=11 // pred_fallthru
        _
    $region12: #{autoencoder_rnn_forward.1} parent=5 // pred_fallthru
      _
    %p127 = scmp.lt.s32.totalorder %s10, 2
    // Predicated region
    $region17: #{autoencoder_rnn_forward.1} parent=5 // pred_check
      %p128 = pneg %p127
    $region18: #{autoencoder_rnn_forward.1} parent=5 // pred_check_branch
      %130 = sbr.rel (%p128) target = $region20
    $region19: #{autoencoder_rnn_forward.1} parent=5 // pred_region
      // Predicated region
      $region21: #{autoencoder_rnn_forward.1} parent=19 // pred_check
        %p131 = pneg %p30
      $region22: #{autoencoder_rnn_forward.1} parent=19 // pred_check_branch
        %133 = sbr.rel (%p131) target = $region24
      $region23: #{autoencoder_rnn_forward.1} parent=19 // pred_region
        %p134 = scmp.lt.s32.totalorder %s10, 1
        %s135 = scalar_select %p134, %s10, 1
        %s136 = smul.addr %s135, 8
        %s137 = scalar_lea.vmem %s0, %s136
      $region24: #{autoencoder_rnn_forward.1} parent=19 // pred_fallthru
        _
    $region20: #{autoencoder_rnn_forward.1} parent=5 // pred_fallthru
      _
    %p138 = scmp.le.s32.totalorder 1, %s10
    %p139 = scmp.lt.s32.totalorder %s10, 3
    %p140 = pnand %p138, %p139
    %p141 = pneg %p140
    // Predicated region
    $region25: #{autoencoder_rnn_forward.1} parent=5 // pred_check
      _
    $region26: #{autoencoder_rnn_forward.1} parent=5 // pred_check_branch
      %143 = sbr.rel (%p140) target = $region28
    $region27: #{autoencoder_rnn_forward.1} parent=5 // pred_region
      %s144 = ssub.s32 %s10, 1
      %p145 = scmp.lt.s32.totalorder %s15, 1
      %s146 = scalar_select %p145, %s15, 1
      %s147 = smul.addr %s146, 8
      %s148 = scalar_lea.vmem %s0, %s147
      %p149 = pneg %p36
      %p150 = pneg %p33
      %p151 = pneg %p57
      %p152 = pneg %p54
      %p153 = pneg %p83
      %p154 = pneg %p80
      %p155 = scmp.lt.s32.totalorder %s15, 1
      %s156 = scalar_select %p155, %s15, 1
      %s157 = smul.addr %s156, 8
      %s158 = scalar_lea.vmem %s2, %s157
      %p159 = pneg %p109
      %p160 = pneg %p106
      %p161 = scmp.lt.s32.totalorder %s15, 1
      %s162 = scalar_select %p161, %s15, 1
      %s163 = smul.addr %s162, 8
      %s164 = scalar_lea.vmem %s3, %s163
      %p165 = scmp.lt.s32.totalorder %s15, 1
      %s166 = scalar_select %p165, %s15, 1
      %s167 = smul.addr %s166, 8
      %s168 = scalar_lea.vmem %s0, %s167
      %p169 = scmp.lt.s32.totalorder %s15, 1
      %s170 = scalar_select %p169, %s15, 1
      %s171 = smul.addr %s170, 8
      %s172 = scalar_lea.vmem %s2, %s171
      %p173 = scmp.lt.s32.totalorder %s15, 1
      %s174 = scalar_select %p173, %s15, 1
      %s175 = smul.addr %s174, 8
      %s176 = scalar_lea.vmem %s3, %s175
      %v177 = vld [vmem:[%s1] sm:$0x1]
      %v178 = vld [vmem:[%s1 + $0x8] sm:$0xff]
      %v179 = vld [vmem:[%s1 + $0x10] sm:$0x1]
      %v180 = vld [vmem:[%s1 + $0x18] sm:$0xff]
      %v181 = vld [vmem:[%s1 + $0x20] sm:$0xf]
      %v182 = vld [vmem:[%s1 + $0x28] sm:$0x1]
      %v183 = vld [vmem:[%s1 + $0x30] sm:$0xf]
      %v184 = vld [vmem:[%s1 + $0x38] sm:$0xf]
      %v185 = vld [vmem:[%s1 + $0x40] sm:$0x1]
      %v186 = vld [vmem:[%s1 + $0x48] sm:$0xf]
      %v187 = vld [vmem:[%s1 + $0x50] sm:$0xff]
      %v188 = vld [vmem:[%s1 + $0x58] sm:$0x1]
      %v189 = vld [vmem:[%s168] sm:$0xff]
      %190 = vxpose.xlu0.b32.start [1/16] %v189, 128
      %191 = vxpose.xlu0.b32.cont [2/16] 0.0, 128
      %192 = vxpose.xlu0.b32.cont [3/16] 0.0, 128
      %193 = vxpose.xlu0.b32.cont [4/16] 0.0, 128
      %194 = vxpose.xlu0.b32.cont [5/16] 0.0, 128
      %195 = vxpose.xlu0.b32.cont [6/16] 0.0, 128
      %196 = vxpose.xlu0.b32.cont [7/16] 0.0, 128
      %197 = vxpose.xlu0.b32.cont [8/16] 0.0, 128
      %198 = vxpose.xlu0.b32.cont [9/16] 0.0, 128
      %199 = vxpose.xlu0.b32.cont [10/16] 0.0, 128
      %200 = vxpose.xlu0.b32.cont [11/16] 0.0, 128
      %201 = vxpose.xlu0.b32.cont [12/16] 0.0, 128
      %202 = vxpose.xlu0.b32.cont [13/16] 0.0, 128
      %203 = vxpose.xlu0.b32.cont [14/16] 0.0, 128
      %204 = vxpose.xlu0.b32.cont [15/16] 0.0, 128
      %205 = vxpose.xlu0.b32.end [16/16] 0.0, 128
      %v206 = vpop.trf.xlu0
      %v207 = vpop.trf.xlu0
      %v208 = vpop.trf.xlu0
      %v209 = vpop.trf.xlu0
      %v210 = vpop.trf.xlu0
      %v211 = vpop.trf.xlu0
      %v212 = vpop.trf.xlu0
      %v213 = vpop.trf.xlu0
      %v214 = vpop.trf.xlu0
      %v215 = vpop.trf.xlu0
      %v216 = vpop.trf.xlu0
      %v217 = vpop.trf.xlu0
      %v218 = vpop.trf.xlu0
      %v219 = vpop.trf.xlu0
      %v220 = vpop.trf.xlu0
      %v221 = vpop.trf.xlu0
      %v222 = vlaneseq
      %v223 = vshrl.u32 %v222, 7
      %v224 = vsub.s32 0, %v223
      %v225 = vrot.slane %v206, %v224
      %227 = vbcast.lane.b32.xlu0 %v225, 256
      %v228 = vpop.permute.xlu0 %227
      %v229 = vlaneseq
      %v230 = vshrl.u32 %v229, 7
      %v231 = vsub.s32 1, %v230
      %v232 = vrot.slane %v206, %v231
      %234 = vbcast.lane.b32.xlu0 %v232, 256
      %v235 = vpop.permute.xlu0 %234
      %v236 = vlaneseq
      %v237 = vshrl.u32 %v236, 7
      %v238 = vsub.s32 2, %v237
      %v239 = vrot.slane %v206, %v238
      %241 = vbcast.lane.b32.xlu0 %v239, 256
      %v242 = vpop.permute.xlu0 %241
      %v243 = vlaneseq
      %v244 = vshrl.u32 %v243, 7
      %v245 = vsub.s32 3, %v244
      %v246 = vrot.slane %v206, %v245
      %248 = vbcast.lane.b32.xlu0 %v246, 256
      %v249 = vpop.permute.xlu0 %248
      %v250 = vlaneseq
      %v251 = vshrl.u32 %v250, 7
      %v252 = vsub.s32 4, %v251
      %v253 = vrot.slane %v206, %v252
      %255 = vbcast.lane.b32.xlu0 %v253, 256
      %v256 = vpop.permute.xlu0 %255
      %v257 = vlaneseq
      %v258 = vshrl.u32 %v257, 7
      %v259 = vsub.s32 5, %v258
      %v260 = vrot.slane %v206, %v259
      %262 = vbcast.lane.b32.xlu0 %v260, 256
      %v263 = vpop.permute.xlu0 %262
      %v264 = vlaneseq
      %v265 = vshrl.u32 %v264, 7
      %v266 = vsub.s32 6, %v265
      %v267 = vrot.slane %v206, %v266
      %269 = vbcast.lane.b32.xlu0 %v267, 256
      %v270 = vpop.permute.xlu0 %269
      %v271 = vlaneseq
      %v272 = vshrl.u32 %v271, 7
      %v273 = vsub.s32 7, %v272
      %v274 = vrot.slane %v206, %v273
      %276 = vbcast.lane.b32.xlu0 %v274, 256
      %v277 = vpop.permute.xlu0 %276
      %v278 = vlaneseq
      %v279 = vshrl.u32 %v278, 7
      %v280 = vsub.s32 0, %v279
      %v281 = vrot.slane %v177, %v280
      %v282 = vmul.f32 %v228, %v281
      %v283 = vmul.f32 %v235, %v281
      %v284 = vmul.f32 %v242, %v281
      %v285 = vmul.f32 %v249, %v281
      %v286 = vmul.f32 %v256, %v281
      %v287 = vmul.f32 %v263, %v281
      %v288 = vmul.f32 %v270, %v281
      %v289 = vmul.f32 %v277, %v281
      %v290 = vlaneseq
      %v291 = vshrl.u32 %v290, 7
      %v292 = vsub.s32 0, %v291
      %v293 = vrot.slane %v179, %v292
      %v294 = vadd.f32 %v282, %v293
      %v295 = vadd.f32 %v283, %v293
      %v296 = vadd.f32 %v284, %v293
      %v297 = vadd.f32 %v285, %v293
      %v298 = vadd.f32 %v286, %v293
      %v299 = vadd.f32 %v287, %v293
      %v300 = vadd.f32 %v288, %v293
      %v301 = vadd.f32 %v289, %v293
      %vm302 = vcmask 261120
      %303 = vst.msk [vmem:[#allocation2] sm:$0xff] %vm302, %v294
      %304 = vst.msk [vmem:[#allocation2 + $0x8] sm:$0xff] %vm302, %v295
      %305 = vst.msk [vmem:[#allocation2 + $0x10] sm:$0xff] %vm302, %v296
      %306 = vst.msk [vmem:[#allocation2 + $0x18] sm:$0xff] %vm302, %v297
      %307 = vst.msk [vmem:[#allocation2 + $0x20] sm:$0xff] %vm302, %v298
      %308 = vst.msk [vmem:[#allocation2 + $0x28] sm:$0xff] %vm302, %v299
      %309 = vst.msk [vmem:[#allocation2 + $0x30] sm:$0xff] %vm302, %v300
      %310 = vst.msk [vmem:[#allocation2 + $0x38] sm:$0xff] %vm302, %v301
      %v311 = vld [vmem:[#allocation2] sm:$0xff]
      %vm312 = vcmask 64512
      %v314 = vsel %vm312, 0.0, 0
      %316 = vmatprep.subr.mxu0 0.0
      %317 = vmatpush1.msra.mxu0 %v178
      %318 = vmatprep.subr.mxu0 0.0
      %319 = vmatpush1.msra.mxu0 0.0
      %320 = vmatprep.subr.mxu0 0.0
      %321 = vmatpush1.msra.mxu0 0.0
      %322 = vmatprep.subr.mxu0 0.0
      %323 = vmatpush1.msra.mxu0 0.0
      %324 = vmatprep.subr.mxu0 0.0
      %325 = vmatpush1.msra.mxu0 0.0
      %326 = vmatprep.subr.mxu0 0.0
      %327 = vmatpush1.msra.mxu0 0.0
      %328 = vmatprep.subr.mxu0 0.0
      %329 = vmatpush1.msra.mxu0 0.0
      %330 = vmatprep.subr.mxu0 0.0
      %331 = vmatpush1.msra.mxu0 0.0
      %332 = vmatprep.subr.mxu0 0.0
      %333 = vmatpush1.msra.mxu0 0.0
      %334 = vmatprep.subr.mxu0 0.0
      %335 = vmatpush1.msra.mxu0 0.0
      %336 = vmatprep.subr.mxu0 0.0
      %337 = vmatpush1.msra.mxu0 0.0
      %338 = vmatprep.subr.mxu0 0.0
      %339 = vmatpush1.msra.mxu0 0.0
      %340 = vmatprep.subr.mxu0 0.0
      %341 = vmatpush1.msra.mxu0 0.0
      %342 = vmatprep.subr.mxu0 0.0
      %343 = vmatpush1.msra.mxu0 0.0
      %344 = vmatprep.subr.mxu0 0.0
      %345 = vmatpush1.msra.mxu0 0.0
      %346 = vmatprep.subr.mxu0 0.0
      %347 = vmatpush1.msra.mxu0 0.0
      %348 = vmatprep.subr.mxu0 0.0
      %349 = vmatpush1.msra.mxu0 0.0
      %350 = vmatprep.subr.mxu0 0.0
      %351 = vmatpush1.msra.mxu0 0.0
      %352 = vmatprep.subr.mxu0 0.0
      %353 = vmatpush1.msra.mxu0 0.0
      %354 = vmatprep.subr.mxu0 0.0
      %355 = vmatpush1.msra.mxu0 0.0
      %356 = vmatprep.subr.mxu0 0.0
      %357 = vmatpush1.msra.mxu0 0.0
      %358 = vmatprep.subr.mxu0 0.0
      %359 = vmatpush1.msra.mxu0 0.0
      %360 = vmatprep.subr.mxu0 0.0
      %361 = vmatpush1.msra.mxu0 0.0
      %362 = vmatprep.subr.mxu0 0.0
      %363 = vmatpush1.msra.mxu0 0.0
      %364 = vmatprep.subr.mxu0 0.0
      %365 = vmatpush1.msra.mxu0 0.0
      %366 = vmatprep.subr.mxu0 0.0
      %367 = vmatpush1.msra.mxu0 0.0
      %368 = vmatprep.subr.mxu0 0.0
      %369 = vmatpush1.msra.mxu0 0.0
      %370 = vmatprep.subr.mxu0 0.0
      %371 = vmatpush1.msra.mxu0 0.0
      %372 = vmatprep.subr.mxu0 0.0
      %373 = vmatpush1.msra.mxu0 0.0
      %374 = vmatprep.subr.mxu0 0.0
      %375 = vmatpush1.msra.mxu0 0.0
      %376 = vmatprep.subr.mxu0 0.0
      %377 = vmatpush1.msra.mxu0 0.0
      %378 = vmatprep.subr.mxu0 0.0
      %379 = vmatpush1.msra.mxu0 0.0
      %380 = vmatprep.mubr.f32.mxu0 0.0
      %381 = vmatmul.mubr.f32.gmra.mrb[0].mxu0 %v314
      %v382 = vpop.f32.mrb[0].mxu0
      %v383 = vadd.f32 0.0, %v382
      %v384 = vpop.f32.mrb[0].mxu0
      %385 = vdwg.mxu0
      %v386 = vadd.f32 %v311, %v383
      %v387 = vxor.u32 %v386, 2147483648
      %v388 = vmul.f32 %v387, 1.442695
      %v389 = vpow.pop %v388
      %v390 = vadd.f32 %v389, 1.0
      %v391 = vrcp.pop %v390
      %v392 = vmul.f32 1.0, %v391
      %v393 = vtanh.pop %v386
      %v394 = vmul.f32 %v392, 0.0
      %396 = vrot.lane.b32.xlu0 %v393, 112
      %v397 = vpop.permute.xlu0 %396
      %v399 = vmul.f32 %v392, %v397
      %401 = vrot.lane.b32.xlu0 %v399, 8
      %v402 = vpop.permute.xlu0 %401
      %v404 = vadd.f32 %v394, %v402
      %v405 = vtanh.pop %v404
      %407 = vrot.lane.b32.xlu0 %v405, 16
      %v408 = vpop.permute.xlu0 %407
      %v410 = vmul.f32 %v392, %v408
      %v411 = vlaneseq
      %v412 = vshrl.u32 %v411, 7
      %v413 = vsub.s32 0, %v412
      %v414 = vrot.slane %v182, %v413
      %416 = vrot.lane.b32.xlu0 %v410, 104
      %v417 = vpop.permute.xlu0 %416
      %v418 = vsel %vm312, %v417, 0
      %420 = vmatprep.subr.mxu0 0.0
      %421 = vmatpush1.msra.mxu0 %v180
      %422 = vmatprep.subr.mxu0 0.0
      %423 = vmatpush1.msra.mxu0 0.0
      %424 = vmatprep.subr.mxu0 0.0
      %425 = vmatpush1.msra.mxu0 0.0
      %426 = vmatprep.subr.mxu0 0.0
      %427 = vmatpush1.msra.mxu0 0.0
      %428 = vmatprep.subr.mxu0 0.0
      %429 = vmatpush1.msra.mxu0 0.0
      %430 = vmatprep.subr.mxu0 0.0
      %431 = vmatpush1.msra.mxu0 0.0
      %432 = vmatprep.subr.mxu0 0.0
      %433 = vmatpush1.msra.mxu0 0.0
      %434 = vmatprep.subr.mxu0 0.0
      %435 = vmatpush1.msra.mxu0 0.0
      %436 = vmatprep.subr.mxu0 0.0
      %437 = vmatpush1.msra.mxu0 0.0
      %438 = vmatprep.subr.mxu0 0.0
      %439 = vmatpush1.msra.mxu0 0.0
      %440 = vmatprep.subr.mxu0 0.0
      %441 = vmatpush1.msra.mxu0 0.0
      %442 = vmatprep.subr.mxu0 0.0
      %443 = vmatpush1.msra.mxu0 0.0
      %444 = vmatprep.subr.mxu0 0.0
      %445 = vmatpush1.msra.mxu0 0.0
      %446 = vmatprep.subr.mxu0 0.0
      %447 = vmatpush1.msra.mxu0 0.0
      %448 = vmatprep.subr.mxu0 0.0
      %449 = vmatpush1.msra.mxu0 0.0
      %450 = vmatprep.subr.mxu0 0.0
      %451 = vmatpush1.msra.mxu0 0.0
      %452 = vmatprep.subr.mxu0 0.0
      %453 = vmatpush1.msra.mxu0 0.0
      %454 = vmatprep.subr.mxu0 0.0
      %455 = vmatpush1.msra.mxu0 0.0
      %456 = vmatprep.subr.mxu0 0.0
      %457 = vmatpush1.msra.mxu0 0.0
      %458 = vmatprep.subr.mxu0 0.0
      %459 = vmatpush1.msra.mxu0 0.0
      %460 = vmatprep.subr.mxu0 0.0
      %461 = vmatpush1.msra.mxu0 0.0
      %462 = vmatprep.subr.mxu0 0.0
      %463 = vmatpush1.msra.mxu0 0.0
      %464 = vmatprep.subr.mxu0 0.0
      %465 = vmatpush1.msra.mxu0 0.0
      %466 = vmatprep.subr.mxu0 0.0
      %467 = vmatpush1.msra.mxu0 0.0
      %468 = vmatprep.subr.mxu0 0.0
      %469 = vmatpush1.msra.mxu0 0.0
      %470 = vmatprep.subr.mxu0 0.0
      %471 = vmatpush1.msra.mxu0 0.0
      %472 = vmatprep.subr.mxu0 0.0
      %473 = vmatpush1.msra.mxu0 0.0
      %474 = vmatprep.subr.mxu0 0.0
      %475 = vmatpush1.msra.mxu0 0.0
      %476 = vmatprep.subr.mxu0 0.0
      %477 = vmatpush1.msra.mxu0 0.0
      %478 = vmatprep.subr.mxu0 0.0
      %479 = vmatpush1.msra.mxu0 0.0
      %480 = vmatprep.subr.mxu0 0.0
      %481 = vmatpush1.msra.mxu0 0.0
      %482 = vmatprep.subr.mxu0 0.0
      %483 = vmatpush1.msra.mxu0 0.0
      %484 = vmatprep.mubr.f32.mxu0 0.0
      %485 = vmatmul.mubr.f32.gmra.mrb[0].mxu0 %v418
      %v486 = vpop.f32.mrb[0].mxu0
      %v487 = vadd.f32 %v414, %v486
      %v488 = vpop.f32.mrb[0].mxu0
      %489 = vdwg.mxu0
      %vm490 = vcmask 31744
      %v491 = vsel %vm490, 0.0, 0
      %vm493 = vcmask 1043456
      %v495 = vsel %vm493, %v181, 0
      %497 = vmatprep.subr.mxu0 0.0
      %498 = vmatpush1.msra.mxu0 %v495
      %499 = vmatprep.subr.mxu0 0.0
      %500 = vmatpush1.msra.mxu0 0.0
      %501 = vmatprep.subr.mxu0 0.0
      %502 = vmatpush1.msra.mxu0 0.0
      %503 = vmatprep.subr.mxu0 0.0
      %504 = vmatpush1.msra.mxu0 0.0
      %505 = vmatprep.subr.mxu0 0.0
      %506 = vmatpush1.msra.mxu0 0.0
      %507 = vmatprep.subr.mxu0 0.0
      %508 = vmatpush1.msra.mxu0 0.0
      %509 = vmatprep.subr.mxu0 0.0
      %510 = vmatpush1.msra.mxu0 0.0
      %511 = vmatprep.subr.mxu0 0.0
      %512 = vmatpush1.msra.mxu0 0.0
      %513 = vmatprep.subr.mxu0 0.0
      %514 = vmatpush1.msra.mxu0 0.0
      %515 = vmatprep.subr.mxu0 0.0
      %516 = vmatpush1.msra.mxu0 0.0
      %517 = vmatprep.subr.mxu0 0.0
      %518 = vmatpush1.msra.mxu0 0.0
      %519 = vmatprep.subr.mxu0 0.0
      %520 = vmatpush1.msra.mxu0 0.0
      %521 = vmatprep.subr.mxu0 0.0
      %522 = vmatpush1.msra.mxu0 0.0
      %523 = vmatprep.subr.mxu0 0.0
      %524 = vmatpush1.msra.mxu0 0.0
      %525 = vmatprep.subr.mxu0 0.0
      %526 = vmatpush1.msra.mxu0 0.0
      %527 = vmatprep.subr.mxu0 0.0
      %528 = vmatpush1.msra.mxu0 0.0
      %529 = vmatprep.subr.mxu0 0.0
      %530 = vmatpush1.msra.mxu0 0.0
      %531 = vmatprep.subr.mxu0 0.0
      %532 = vmatpush1.msra.mxu0 0.0
      %533 = vmatprep.subr.mxu0 0.0
      %534 = vmatpush1.msra.mxu0 0.0
      %535 = vmatprep.subr.mxu0 0.0
      %536 = vmatpush1.msra.mxu0 0.0
      %537 = vmatprep.subr.mxu0 0.0
      %538 = vmatpush1.msra.mxu0 0.0
      %539 = vmatprep.subr.mxu0 0.0
      %540 = vmatpush1.msra.mxu0 0.0
      %541 = vmatprep.subr.mxu0 0.0
      %542 = vmatpush1.msra.mxu0 0.0
      %543 = vmatprep.subr.mxu0 0.0
      %544 = vmatpush1.msra.mxu0 0.0
      %545 = vmatprep.subr.mxu0 0.0
      %546 = vmatpush1.msra.mxu0 0.0
      %547 = vmatprep.subr.mxu0 0.0
      %548 = vmatpush1.msra.mxu0 0.0
      %549 = vmatprep.subr.mxu0 0.0
      %550 = vmatpush1.msra.mxu0 0.0
      %551 = vmatprep.subr.mxu0 0.0
      %552 = vmatpush1.msra.mxu0 0.0
      %553 = vmatprep.subr.mxu0 0.0
      %554 = vmatpush1.msra.mxu0 0.0
      %555 = vmatprep.subr.mxu0 0.0
      %556 = vmatpush1.msra.mxu0 0.0
      %557 = vmatprep.subr.mxu0 0.0
      %558 = vmatpush1.msra.mxu0 0.0
      %559 = vmatprep.subr.mxu0 0.0
      %560 = vmatpush1.msra.mxu0 0.0
      %561 = vmatprep.mubr.f32.mxu0 0.0
      %562 = vmatmul.mubr.f32.gmra.mrb[0].mxu0 %v491
      %v563 = vpop.f32.mrb[0].mxu0
      %v564 = vadd.f32 0.0, %v563
      %v565 = vpop.f32.mrb[0].mxu0
      %566 = vdwg.mxu0
      %v567 = vadd.f32 %v487, %v564
      %v568 = vxor.u32 %v567, 2147483648
      %v569 = vmul.f32 %v568, 1.442695
      %v570 = vpow.pop %v569
      %v571 = vadd.f32 %v570, 1.0
      %v572 = vrcp.pop %v571
      %v573 = vmul.f32 1.0, %v572
      %v574 = vtanh.pop %v567
      %v575 = vmul.f32 %v573, 0.0
      %577 = vrot.lane.b32.xlu0 %v574, 120
      %v578 = vpop.permute.xlu0 %577
      %v580 = vmul.f32 %v573, %v578
      %582 = vrot.lane.b32.xlu0 %v580, 4
      %v583 = vpop.permute.xlu0 %582
      %v585 = vadd.f32 %v575, %v583
      %v586 = vtanh.pop %v585
      %588 = vrot.lane.b32.xlu0 %v586, 8
      %v589 = vpop.permute.xlu0 %588
      %v591 = vmul.f32 %v573, %v589
      %s592 = scalar_lea.vmem [#allocation2], 8
      %v593 = vld [vmem:[%s592] sm:$0xff]
      %594 = vmatprep.subr.mxu0 0.0
      %595 = vmatpush1.msra.mxu0 %v178
      %596 = vmatprep.subr.mxu0 0.0
      %597 = vmatpush1.msra.mxu0 0.0
      %598 = vmatprep.subr.mxu0 0.0
      %599 = vmatpush1.msra.mxu0 0.0
      %600 = vmatprep.subr.mxu0 0.0
      %601 = vmatpush1.msra.mxu0 0.0
      %602 = vmatprep.subr.mxu0 0.0
      %603 = vmatpush1.msra.mxu0 0.0
      %604 = vmatprep.subr.mxu0 0.0
      %605 = vmatpush1.msra.mxu0 0.0
      %606 = vmatprep.subr.mxu0 0.0
      %607 = vmatpush1.msra.mxu0 0.0
      %608 = vmatprep.subr.mxu0 0.0
      %609 = vmatpush1.msra.mxu0 0.0
      %610 = vmatprep.subr.mxu0 0.0
      %611 = vmatpush1.msra.mxu0 0.0
      %612 = vmatprep.subr.mxu0 0.0
      %613 = vmatpush1.msra.mxu0 0.0
      %614 = vmatprep.subr.mxu0 0.0
      %615 = vmatpush1.msra.mxu0 0.0
      %616 = vmatprep.subr.mxu0 0.0
      %617 = vmatpush1.msra.mxu0 0.0
      %618 = vmatprep.subr.mxu0 0.0
      %619 = vmatpush1.msra.mxu0 0.0
      %620 = vmatprep.subr.mxu0 0.0
      %621 = vmatpush1.msra.mxu0 0.0
      %622 = vmatprep.subr.mxu0 0.0
      %623 = vmatpush1.msra.mxu0 0.0
      %624 = vmatprep.subr.mxu0 0.0
      %625 = vmatpush1.msra.mxu0 0.0
      %626 = vmatprep.subr.mxu0 0.0
      %627 = vmatpush1.msra.mxu0 0.0
      %628 = vmatprep.subr.mxu0 0.0
      %629 = vmatpush1.msra.mxu0 0.0
      %630 = vmatprep.subr.mxu0 0.0
      %631 = vmatpush1.msra.mxu0 0.0
      %632 = vmatprep.subr.mxu0 0.0
      %633 = vmatpush1.msra.mxu0 0.0
      %634 = vmatprep.subr.mxu0 0.0
      %635 = vmatpush1.msra.mxu0 0.0
      %636 = vmatprep.subr.mxu0 0.0
      %637 = vmatpush1.msra.mxu0 0.0
      %638 = vmatprep.subr.mxu0 0.0
      %639 = vmatpush1.msra.mxu0 0.0
      %640 = vmatprep.subr.mxu0 0.0
      %641 = vmatpush1.msra.mxu0 0.0
      %642 = vmatprep.subr.mxu0 0.0
      %643 = vmatpush1.msra.mxu0 0.0
      %644 = vmatprep.subr.mxu0 0.0
      %645 = vmatpush1.msra.mxu0 0.0
      %646 = vmatprep.subr.mxu0 0.0
      %647 = vmatpush1.msra.mxu0 0.0
      %648 = vmatprep.subr.mxu0 0.0
      %649 = vmatpush1.msra.mxu0 0.0
      %650 = vmatprep.subr.mxu0 0.0
      %651 = vmatpush1.msra.mxu0 0.0
      %652 = vmatprep.subr.mxu0 0.0
      %653 = vmatpush1.msra.mxu0 0.0
      %654 = vmatprep.subr.mxu0 0.0
      %655 = vmatpush1.msra.mxu0 0.0
      %656 = vmatprep.subr.mxu0 0.0
      %657 = vmatpush1.msra.mxu0 0.0
      %658 = vmatprep.mubr.f32.mxu0 0.0
      %659 = vmatmul.mubr.f32.gmra.mrb[0].mxu0 %v418
      %v660 = vpop.f32.mrb[0].mxu0
      %v661 = vadd.f32 0.0, %v660
      %v662 = vpop.f32.mrb[0].mxu0
      %663 = vdwg.mxu0
      %v664 = vadd.f32 %v593, %v661
      %v665 = vxor.u32 %v664, 2147483648
      %v666 = vmul.f32 %v665, 1.442695
      %v667 = vpow.pop %v666
      %v668 = vadd.f32 %v667, 1.0
      %v669 = vrcp.pop %v668
      %v670 = vmul.f32 1.0, %v669
      %v671 = vtanh.pop %v664
      %v672 = vmul.f32 %v670, %v404
      %674 = vrot.lane.b32.xlu0 %v671, 112
      %v675 = vpop.permute.xlu0 %674
      %v677 = vmul.f32 %v670, %v675
      %679 = vrot.lane.b32.xlu0 %v677, 8
      %v680 = vpop.permute.xlu0 %679
      %v682 = vadd.f32 %v672, %v680
      %v683 = vtanh.pop %v682
      %685 = vrot.lane.b32.xlu0 %v683, 16
      %v686 = vpop.permute.xlu0 %685
      %v688 = vmul.f32 %v670, %v686
      %690 = vrot.lane.b32.xlu0 %v688, 104
      %v691 = vpop.permute.xlu0 %690
      %v692 = vsel %vm312, %v691, 0
      %694 = vmatprep.subr.mxu0 0.0
      %695 = vmatpush1.msra.mxu0 %v180
      %696 = vmatprep.subr.mxu0 0.0
      %697 = vmatpush1.msra.mxu0 0.0
      %698 = vmatprep.subr.mxu0 0.0
      %699 = vmatpush1.msra.mxu0 0.0
      %700 = vmatprep.subr.mxu0 0.0
      %701 = vmatpush1.msra.mxu0 0.0
      %702 = vmatprep.subr.mxu0 0.0
      %703 = vmatpush1.msra.mxu0 0.0
      %704 = vmatprep.subr.mxu0 0.0
      %705 = vmatpush1.msra.mxu0 0.0
      %706 = vmatprep.subr.mxu0 0.0
      %707 = vmatpush1.msra.mxu0 0.0
      %708 = vmatprep.subr.mxu0 0.0
      %709 = vmatpush1.msra.mxu0 0.0
      %710 = vmatprep.subr.mxu0 0.0
      %711 = vmatpush1.msra.mxu0 0.0
      %712 = vmatprep.subr.mxu0 0.0
      %713 = vmatpush1.msra.mxu0 0.0
      %714 = vmatprep.subr.mxu0 0.0
      %715 = vmatpush1.msra.mxu0 0.0
      %716 = vmatprep.subr.mxu0 0.0
      %717 = vmatpush1.msra.mxu0 0.0
      %718 = vmatprep.subr.mxu0 0.0
      %719 = vmatpush1.msra.mxu0 0.0
      %720 = vmatprep.subr.mxu0 0.0
      %721 = vmatpush1.msra.mxu0 0.0
      %722 = vmatprep.subr.mxu0 0.0
      %723 = vmatpush1.msra.mxu0 0.0
      %724 = vmatprep.subr.mxu0 0.0
      %725 = vmatpush1.msra.mxu0 0.0
      %726 = vmatprep.subr.mxu0 0.0
      %727 = vmatpush1.msra.mxu0 0.0
      %728 = vmatprep.subr.mxu0 0.0
      %729 = vmatpush1.msra.mxu0 0.0
      %730 = vmatprep.subr.mxu0 0.0
      %731 = vmatpush1.msra.mxu0 0.0
      %732 = vmatprep.subr.mxu0 0.0
      %733 = vmatpush1.msra.mxu0 0.0
      %734 = vmatprep.subr.mxu0 0.0
      %735 = vmatpush1.msra.mxu0 0.0
      %736 = vmatprep.subr.mxu0 0.0
      %737 = vmatpush1.msra.mxu0 0.0
      %738 = vmatprep.subr.mxu0 0.0
      %739 = vmatpush1.msra.mxu0 0.0
      %740 = vmatprep.subr.mxu0 0.0
      %741 = vmatpush1.msra.mxu0 0.0
      %742 = vmatprep.subr.mxu0 0.0
      %743 = vmatpush1.msra.mxu0 0.0
      %744 = vmatprep.subr.mxu0 0.0
      %745 = vmatpush1.msra.mxu0 0.0
      %746 = vmatprep.subr.mxu0 0.0
      %747 = vmatpush1.msra.mxu0 0.0
      %748 = vmatprep.subr.mxu0 0.0
      %749 = vmatpush1.msra.mxu0 0.0
      %750 = vmatprep.subr.mxu0 0.0
      %751 = vmatpush1.msra.mxu0 0.0
      %752 = vmatprep.subr.mxu0 0.0
      %753 = vmatpush1.msra.mxu0 0.0
      %754 = vmatprep.subr.mxu0 0.0
      %755 = vmatpush1.msra.mxu0 0.0
      %756 = vmatprep.subr.mxu0 0.0
      %757 = vmatpush1.msra.mxu0 0.0
      %758 = vmatprep.mubr.f32.mxu0 0.0
      %759 = vmatmul.mubr.f32.gmra.mrb[0].mxu0 %v692
      %v760 = vpop.f32.mrb[0].mxu0
      %v761 = vadd.f32 %v414, %v760
      %v762 = vpop.f32.mrb[0].mxu0
      %763 = vdwg.mxu0
      %765 = vrot.lane.b32.xlu0 %v591, 116
      %v766 = vpop.permute.xlu0 %765
      %v767 = vsel %vm490, %v766, 0
      %769 = vmatprep.subr.mxu0 0.0
      %770 = vmatpush1.msra.mxu0 %v495
      %771 = vmatprep.subr.mxu0 0.0
      %772 = vmatpush1.msra.mxu0 0.0
      %773 = vmatprep.subr.mxu0 0.0
      %774 = vmatpush1.msra.mxu0 0.0
      %775 = vmatprep.subr.mxu0 0.0
      %776 = vmatpush1.msra.mxu0 0.0
      %777 = vmatprep.subr.mxu0 0.0
      %778 = vmatpush1.msra.mxu0 0.0
      %779 = vmatprep.subr.mxu0 0.0
      %780 = vmatpush1.msra.mxu0 0.0
      %781 = vmatprep.subr.mxu0 0.0
      %782 = vmatpush1.msra.mxu0 0.0
      %783 = vmatprep.subr.mxu0 0.0
      %784 = vmatpush1.msra.mxu0 0.0
      %785 = vmatprep.subr.mxu0 0.0
      %786 = vmatpush1.msra.mxu0 0.0
      %787 = vmatprep.subr.mxu0 0.0
      %788 = vmatpush1.msra.mxu0 0.0
      %789 = vmatprep.subr.mxu0 0.0
      %790 = vmatpush1.msra.mxu0 0.0
      %791 = vmatprep.subr.mxu0 0.0
      %792 = vmatpush1.msra.mxu0 0.0
      %793 = vmatprep.subr.mxu0 0.0
      %794 = vmatpush1.msra.mxu0 0.0
      %795 = vmatprep.subr.mxu0 0.0
      %796 = vmatpush1.msra.mxu0 0.0
      %797 = vmatprep.subr.mxu0 0.0
      %798 = vmatpush1.msra.mxu0 0.0
      %799 = vmatprep.subr.mxu0 0.0
      %800 = vmatpush1.msra.mxu0 0.0
      %801 = vmatprep.subr.mxu0 0.0
      %802 = vmatpush1.msra.mxu0 0.0
      %803 = vmatprep.subr.mxu0 0.0
      %804 = vmatpush1.msra.mxu0 0.0
      %805 = vmatprep.subr.mxu0 0.0
      %806 = vmatpush1.msra.mxu0 0.0
      %807 = vmatprep.subr.mxu0 0.0
      %808 = vmatpush1.msra.mxu0 0.0
      %809 = vmatprep.subr.mxu0 0.0
      %810 = vmatpush1.msra.mxu0 0.0
      %811 = vmatprep.subr.mxu0 0.0
      %812 = vmatpush1.msra.mxu0 0.0
      %813 = vmatprep.subr.mxu0 0.0
      %814 = vmatpush1.msra.mxu0 0.0
      %815 = vmatprep.subr.mxu0 0.0
      %816 = vmatpush1.msra.mxu0 0.0
      %817 = vmatprep.subr.mxu0 0.0
      %818 = vmatpush1.msra.mxu0 0.0
      %819 = vmatprep.subr.mxu0 0.0
      %820 = vmatpush1.msra.mxu0 0.0
      %821 = vmatprep.subr.mxu0 0.0
      %822 = vmatpush1.msra.mxu0 0.0
      %823 = vmatprep.subr.mxu0 0.0
      %824 = vmatpush1.msra.mxu0 0.0
      %825 = vmatprep.subr.mxu0 0.0
      %826 = vmatpush1.msra.mxu0 0.0
      %827 = vmatprep.subr.mxu0 0.0
      %828 = vmatpush1.msra.mxu0 0.0
      %829 = vmatprep.subr.mxu0 0.0
      %830 = vmatpush1.msra.mxu0 0.0
      %831 = vmatprep.subr.mxu0 0.0
      %832 = vmatpush1.msra.mxu0 0.0
      %833 = vmatprep.mubr.f32.mxu0 0.0
      %834 = vmatmul.mubr.f32.gmra.mrb[0].mxu0 %v767
      %v835 = vpop.f32.mrb[0].mxu0
      %v836 = vadd.f32 0.0, %v835
      %v837 = vpop.f32.mrb[0].mxu0
      %838 = vdwg.mxu0
      %v839 = vadd.f32 %v761, %v836
      %v840 = vxor.u32 %v839, 2147483648
      %v841 = vmul.f32 %v840, 1.442695
      %v842 = vpow.pop %v841
      %v843 = vadd.f32 %v842, 1.0
      %v844 = vrcp.pop %v843
      %v845 = vmul.f32 1.0, %v844
      %v846 = vtanh.pop %v839
      %v847 = vmul.f32 %v845, %v585
      %849 = vrot.lane.b32.xlu0 %v846, 120
      %v850 = vpop.permute.xlu0 %849
      %v852 = vmul.f32 %v845, %v850
      %854 = vrot.lane.b32.xlu0 %v852, 4
      %v855 = vpop.permute.xlu0 %854
      %v857 = vadd.f32 %v847, %v855
      %v858 = vtanh.pop %v857
      %860 = vrot.lane.b32.xlu0 %v858, 8
      %v861 = vpop.permute.xlu0 %860
      %v863 = vmul.f32 %v845, %v861
      %s864 = scalar_lea.vmem [#allocation2], 16
      %v865 = vld [vmem:[%s864] sm:$0xff]
      %866 = vmatprep.subr.mxu0 0.0
      %867 = vmatpush1.msra.mxu0 %v178
      %868 = vmatprep.subr.mxu0 0.0
      %869 = vmatpush1.msra.mxu0 0.0
      %870 = vmatprep.subr.mxu0 0.0
      %871 = vmatpush1.msra.mxu0 0.0
      %872 = vmatprep.subr.mxu0 0.0
      %873 = vmatpush1.msra.mxu0 0.0
      %874 = vmatprep.subr.mxu0 0.0
      %875 = vmatpush1.msra.mxu0 0.0
      %876 = vmatprep.subr.mxu0 0.0
      %877 = vmatpush1.msra.mxu0 0.0
      %878 = vmatprep.subr.mxu0 0.0
      %879 = vmatpush1.msra.mxu0 0.0
      %880 = vmatprep.subr.mxu0 0.0
      %881 = vmatpush1.msra.mxu0 0.0
      %882 = vmatprep.subr.mxu0 0.0
      %883 = vmatpush1.msra.mxu0 0.0
      %884 = vmatprep.subr.mxu0 0.0
      %885 = vmatpush1.msra.mxu0 0.0
      %886 = vmatprep.subr.mxu0 0.0
      %887 = vmatpush1.msra.mxu0 0.0
      %888 = vmatprep.subr.mxu0 0.0
      %889 = vmatpush1.msra.mxu0 0.0
      %890 = vmatprep.subr.mxu0 0.0
      %891 = vmatpush1.msra.mxu0 0.0
      %892 = vmatprep.subr.mxu0 0.0
      %893 = vmatpush1.msra.mxu0 0.0
      %894 = vmatprep.subr.mxu0 0.0
      %895 = vmatpush1.msra.mxu0 0.0
      %896 = vmatprep.subr.mxu0 0.0
      %897 = vmatpush1.msra.mxu0 0.0
      %898 = vmatprep.subr.mxu0 0.0
      %899 = vmatpush1.msra.mxu0 0.0
      %900 = vmatprep.subr.mxu0 0.0
      %901 = vmatpush1.msra.mxu0 0.0
      %902 = vmatprep.subr.mxu0 0.0
      %903 = vmatpush1.msra.mxu0 0.0
      %904 = vmatprep.subr.mxu0 0.0
      %905 = vmatpush1.msra.mxu0 0.0
      %906 = vmatprep.subr.mxu0 0.0
      %907 = vmatpush1.msra.mxu0 0.0
      %908 = vmatprep.subr.mxu0 0.0
      %909 = vmatpush1.msra.mxu0 0.0
      %910 = vmatprep.subr.mxu0 0.0
      %911 = vmatpush1.msra.mxu0 0.0
      %912 = vmatprep.subr.mxu0 0.0
      %913 = vmatpush1.msra.mxu0 0.0
      %914 = vmatprep.subr.mxu0 0.0
      %915 = vmatpush1.msra.mxu0 0.0
      %916 = vmatprep.subr.mxu0 0.0
      %917 = vmatpush1.msra.mxu0 0.0
      %918 = vmatprep.subr.mxu0 0.0
      %919 = vmatpush1.msra.mxu0 0.0
      %920 = vmatprep.subr.mxu0 0.0
      %921 = vmatpush1.msra.mxu0 0.0
      %922 = vmatprep.subr.mxu0 0.0
      %923 = vmatpush1.msra.mxu0 0.0
      %924 = vmatprep.subr.mxu0 0.0
      %925 = vmatpush1.msra.mxu0 0.0
      %926 = vmatprep.subr.mxu0 0.0
      %927 = vmatpush1.msra.mxu0 0.0
      %928 = vmatprep.subr.mxu0 0.0
      %929 = vmatpush1.msra.mxu0 0.0
      %930 = vmatprep.mubr.f32.mxu0 0.0
      %931 = vmatmul.mubr.f32.gmra.mrb[0].mxu0 %v692
      %v932 = vpop.f32.mrb[0].mxu0
      %v933 = vadd.f32 0.0, %v932
      %v934 = vpop.f32.mrb[0].mxu0
      %935 = vdwg.mxu0
      %v936 = vadd.f32 %v865, %v933
      %v937 = vxor.u32 %v936, 2147483648
      %v938 = vmul.f32 %v937, 1.442695
      %v939 = vpow.pop %v938
      %v940 = vadd.f32 %v939, 1.0
      %v941 = vrcp.pop %v940
      %v942 = vmul.f32 1.0, %v941
      %v943 = vtanh.pop %v936
      %v944 = vmul.f32 %v942, %v682
      %946 = vrot.lane.b32.xlu0 %v943, 112
      %v947 = vpop.permute.xlu0 %946
      %v949 = vmul.f32 %v942, %v947
      %951 = vrot.lane.b32.xlu0 %v949, 8
      %v952 = vpop.permute.xlu0 %951
      %v954 = vadd.f32 %v944, %v952
      %v955 = vtanh.pop %v954
      %957 = vrot.lane.b32.xlu0 %v955, 16
      %v958 = vpop.permute.xlu0 %957
      %v960 = vmul.f32 %v942, %v958
      %962 = vrot.lane.b32.xlu0 %v960, 104
      %v963 = vpop.permute.xlu0 %962
      %v964 = vsel %vm312, %v963, 0
      %966 = vmatprep.subr.mxu0 0.0
      %967 = vmatpush1.msra.mxu0 %v180
      %968 = vmatprep.subr.mxu0 0.0
      %969 = vmatpush1.msra.mxu0 0.0
      %970 = vmatprep.subr.mxu0 0.0
      %971 = vmatpush1.msra.mxu0 0.0
      %972 = vmatprep.subr.mxu0 0.0
      %973 = vmatpush1.msra.mxu0 0.0
      %974 = vmatprep.subr.mxu0 0.0
      %975 = vmatpush1.msra.mxu0 0.0
      %976 = vmatprep.subr.mxu0 0.0
      %977 = vmatpush1.msra.mxu0 0.0
      %978 = vmatprep.subr.mxu0 0.0
      %979 = vmatpush1.msra.mxu0 0.0
      %980 = vmatprep.subr.mxu0 0.0
      %981 = vmatpush1.msra.mxu0 0.0
      %982 = vmatprep.subr.mxu0 0.0
      %983 = vmatpush1.msra.mxu0 0.0
      %984 = vmatprep.subr.mxu0 0.0
      %985 = vmatpush1.msra.mxu0 0.0
      %986 = vmatprep.subr.mxu0 0.0
      %987 = vmatpush1.msra.mxu0 0.0
      %988 = vmatprep.subr.mxu0 0.0
      %989 = vmatpush1.msra.mxu0 0.0
      %990 = vmatprep.subr.mxu0 0.0
      %991 = vmatpush1.msra.mxu0 0.0
      %992 = vmatprep.subr.mxu0 0.0
      %993 = vmatpush1.msra.mxu0 0.0
      %994 = vmatprep.subr.mxu0 0.0
      %995 = vmatpush1.msra.mxu0 0.0
      %996 = vmatprep.subr.mxu0 0.0
      %997 = vmatpush1.msra.mxu0 0.0
      %998 = vmatprep.subr.mxu0 0.0
      %999 = vmatpush1.msra.mxu0 0.0
      %1000 = vmatprep.subr.mxu0 0.0
      %1001 = vmatpush1.msra.mxu0 0.0
      %1002 = vmatprep.subr.mxu0 0.0
      %1003 = vmatpush1.msra.mxu0 0.0
      %1004 = vmatprep.subr.mxu0 0.0
      %1005 = vmatpush1.msra.mxu0 0.0
      %1006 = vmatprep.subr.mxu0 0.0
      %1007 = vmatpush1.msra.mxu0 0.0
      %1008 = vmatprep.subr.mxu0 0.0
      %1009 = vmatpush1.msra.mxu0 0.0
      %1010 = vmatprep.subr.mxu0 0.0
      %1011 = vmatpush1.msra.mxu0 0.0
      %1012 = vmatprep.subr.mxu0 0.0
      %1013 = vmatpush1.msra.mxu0 0.0
      %1014 = vmatprep.subr.mxu0 0.0
      %1015 = vmatpush1.msra.mxu0 0.0
      %1016 = vmatprep.subr.mxu0 0.0
      %1017 = vmatpush1.msra.mxu0 0.0
      %1018 = vmatprep.subr.mxu0 0.0
      %1019 = vmatpush1.msra.mxu0 0.0
      %1020 = vmatprep.subr.mxu0 0.0
      %1021 = vmatpush1.msra.mxu0 0.0
      %1022 = vmatprep.subr.mxu0 0.0
      %1023 = vmatpush1.msra.mxu0 0.0
      %1024 = vmatprep.subr.mxu0 0.0
      %1025 = vmatpush1.msra.mxu0 0.0
      %1026 = vmatprep.subr.mxu0 0.0
      %1027 = vmatpush1.msra.mxu0 0.0
      %1028 = vmatprep.subr.mxu0 0.0
      %1029 = vmatpush1.msra.mxu0 0.0
      %1030 = vmatprep.mubr.f32.mxu0 0.0
      %1031 = vmatmul.mubr.f32.gmra.mrb[0].mxu0 %v964
      %v1032 = vpop.f32.mrb[0].mxu0
      %v1033 = vadd.f32 %v414, %v1032
      %v1034 = vpop.f32.mrb[0].mxu0
      %1035 = vdwg.mxu0
      %1037 = vrot.lane.b32.xlu0 %v863, 116
      %v1038 = vpop.permute.xlu0 %1037
      %v1039 = vsel %vm490, %v1038, 0
      %1041 = vmatprep.subr.mxu0 0.0
      %1042 = vmatpush1.msra.mxu0 %v495
      %1043 = vmatprep.subr.mxu0 0.0
      %1044 = vmatpush1.msra.mxu0 0.0
      %1045 = vmatprep.subr.mxu0 0.0
      %1046 = vmatpush1.msra.mxu0 0.0
      %1047 = vmatprep.subr.mxu0 0.0
      %1048 = vmatpush1.msra.mxu0 0.0
      %1049 = vmatprep.subr.mxu0 0.0
      %1050 = vmatpush1.msra.mxu0 0.0
      %1051 = vmatprep.subr.mxu0 0.0
      %1052 = vmatpush1.msra.mxu0 0.0
      %1053 = vmatprep.subr.mxu0 0.0
      %1054 = vmatpush1.msra.mxu0 0.0
      %1055 = vmatprep.subr.mxu0 0.0
      %1056 = vmatpush1.msra.mxu0 0.0
      %1057 = vmatprep.subr.mxu0 0.0
      %1058 = vmatpush1.msra.mxu0 0.0
      %1059 = vmatprep.subr.mxu0 0.0
      %1060 = vmatpush1.msra.mxu0 0.0
      %1061 = vmatprep.subr.mxu0 0.0
      %1062 = vmatpush1.msra.mxu0 0.0
      %1063 = vmatprep.subr.mxu0 0.0
      %1064 = vmatpush1.msra.mxu0 0.0
      %1065 = vmatprep.subr.mxu0 0.0
      %1066 = vmatpush1.msra.mxu0 0.0
      %1067 = vmatprep.subr.mxu0 0.0
      %1068 = vmatpush1.msra.mxu0 0.0
      %1069 = vmatprep.subr.mxu0 0.0
      %1070 = vmatpush1.msra.mxu0 0.0
      %1071 = vmatprep.subr.mxu0 0.0
      %1072 = vmatpush1.msra.mxu0 0.0
      %1073 = vmatprep.subr.mxu0 0.0
      %1074 = vmatpush1.msra.mxu0 0.0
      %1075 = vmatprep.subr.mxu0 0.0
      %1076 = vmatpush1.msra.mxu0 0.0
      %1077 = vmatprep.subr.mxu0 0.0
      %1078 = vmatpush1.msra.mxu0 0.0
      %1079 = vmatprep.subr.mxu0 0.0
      %1080 = vmatpush1.msra.mxu0 0.0
      %1081 = vmatprep.subr.mxu0 0.0
      %1082 = vmatpush1.msra.mxu0 0.0
      %1083 = vmatprep.subr.mxu0 0.0
      %1084 = vmatpush1.msra.mxu0 0.0
      %1085 = vmatprep.subr.mxu0 0.0
      %1086 = vmatpush1.msra.mxu0 0.0
      %1087 = vmatprep.subr.mxu0 0.0
      %1088 = vmatpush1.msra.mxu0 0.0
      %1089 = vmatprep.subr.mxu0 0.0
      %1090 = vmatpush1.msra.mxu0 0.0
      %1091 = vmatprep.subr.mxu0 0.0
      %1092 = vmatpush1.msra.mxu0 0.0
      %1093 = vmatprep.subr.mxu0 0.0
      %1094 = vmatpush1.msra.mxu0 0.0
      %1095 = vmatprep.subr.mxu0 0.0
      %1096 = vmatpush1.msra.mxu0 0.0
      %1097 = vmatprep.subr.mxu0 0.0
      %1098 = vmatpush1.msra.mxu0 0.0
      %1099 = vmatprep.subr.mxu0 0.0
      %1100 = vmatpush1.msra.mxu0 0.0
      %1101 = vmatprep.subr.mxu0 0.0
      %1102 = vmatpush1.msra.mxu0 0.0
      %1103 = vmatprep.subr.mxu0 0.0
      %1104 = vmatpush1.msra.mxu0 0.0
      %1105 = vmatprep.mubr.f32.mxu0 0.0
      %1106 = vmatmul.mubr.f32.gmra.mrb[0].mxu0 %v1039
      %v1107 = vpop.f32.mrb[0].mxu0
      %v1108 = vadd.f32 0.0, %v1107
      %v1109 = vpop.f32.mrb[0].mxu0
      %1110 = vdwg.mxu0
      %v1111 = vadd.f32 %v1033, %v1108
      %v1112 = vxor.u32 %v1111, 2147483648
      %v1113 = vmul.f32 %v1112, 1.442695
      %v1114 = vpow.pop %v1113
      %v1115 = vadd.f32 %v1114, 1.0
      %v1116 = vrcp.pop %v1115
      %v1117 = vmul.f32 1.0, %v1116
      %v1118 = vtanh.pop %v1111
      %v1119 = vmul.f32 %v1117, %v857
      %1121 = vrot.lane.b32.xlu0 %v1118, 120
      %v1122 = vpop.permute.xlu0 %1121
      %v1124 = vmul.f32 %v1117, %v1122
      %1126 = vrot.lane.b32.xlu0 %v1124, 4
      %v1127 = vpop.permute.xlu0 %1126
      %v1129 = vadd.f32 %v1119, %v1127
      %v1130 = vtanh.pop %v1129
      %1132 = vrot.lane.b32.xlu0 %v1130, 8
      %v1133 = vpop.permute.xlu0 %1132
      %v1135 = vmul.f32 %v1117, %v1133
      %s1136 = scalar_lea.vmem [#allocation2], 24
      %v1137 = vld [vmem:[%s1136] sm:$0xff]
      %1138 = vmatprep.subr.mxu0 0.0
      %1139 = vmatpush1.msra.mxu0 %v178
      %1140 = vmatprep.subr.mxu0 0.0
      %1141 = vmatpush1.msra.mxu0 0.0
      %1142 = vmatprep.subr.mxu0 0.0
      %1143 = vmatpush1.msra.mxu0 0.0
      %1144 = vmatprep.subr.mxu0 0.0
      %1145 = vmatpush1.msra.mxu0 0.0
      %1146 = vmatprep.subr.mxu0 0.0
      %1147 = vmatpush1.msra.mxu0 0.0
      %1148 = vmatprep.subr.mxu0 0.0
      %1149 = vmatpush1.msra.mxu0 0.0
      %1150 = vmatprep.subr.mxu0 0.0
      %1151 = vmatpush1.msra.mxu0 0.0
      %1152 = vmatprep.subr.mxu0 0.0
      %1153 = vmatpush1.msra.mxu0 0.0
      %1154 = vmatprep.subr.mxu0 0.0
      %1155 = vmatpush1.msra.mxu0 0.0
      %1156 = vmatprep.subr.mxu0 0.0
      %1157 = vmatpush1.msra.mxu0 0.0
      %1158 = vmatprep.subr.mxu0 0.0
      %1159 = vmatpush1.msra.mxu0 0.0
      %1160 = vmatprep.subr.mxu0 0.0
      %1161 = vmatpush1.msra.mxu0 0.0
      %1162 = vmatprep.subr.mxu0 0.0
      %1163 = vmatpush1.msra.mxu0 0.0
      %1164 = vmatprep.subr.mxu0 0.0
      %1165 = vmatpush1.msra.mxu0 0.0
      %1166 = vmatprep.subr.mxu0 0.0
      %1167 = vmatpush1.msra.mxu0 0.0
      %1168 = vmatprep.subr.mxu0 0.0
      %1169 = vmatpush1.msra.mxu0 0.0
      %1170 = vmatprep.subr.mxu0 0.0
      %1171 = vmatpush1.msra.mxu0 0.0
      %1172 = vmatprep.subr.mxu0 0.0
      %1173 = vmatpush1.msra.mxu0 0.0
      %1174 = vmatprep.subr.mxu0 0.0
      %1175 = vmatpush1.msra.mxu0 0.0
      %1176 = vmatprep.subr.mxu0 0.0
      %1177 = vmatpush1.msra.mxu0 0.0
      %1178 = vmatprep.subr.mxu0 0.0
      %1179 = vmatpush1.msra.mxu0 0.0
      %1180 = vmatprep.subr.mxu0 0.0
      %1181 = vmatpush1.msra.mxu0 0.0
      %1182 = vmatprep.subr.mxu0 0.0
      %1183 = vmatpush1.msra.mxu0 0.0
      %1184 = vmatprep.subr.mxu0 0.0
      %1185 = vmatpush1.msra.mxu0 0.0
      %1186 = vmatprep.subr.mxu0 0.0
      %1187 = vmatpush1.msra.mxu0 0.0
      %1188 = vmatprep.subr.mxu0 0.0
      %1189 = vmatpush1.msra.mxu0 0.0
      %1190 = vmatprep.subr.mxu0 0.0
      %1191 = vmatpush1.msra.mxu0 0.0
      %1192 = vmatprep.subr.mxu0 0.0
      %1193 = vmatpush1.msra.mxu0 0.0
      %1194 = vmatprep.subr.mxu0 0.0
      %1195 = vmatpush1.msra.mxu0 0.0
      %1196 = vmatprep.subr.mxu0 0.0
      %1197 = vmatpush1.msra.mxu0 0.0
      %1198 = vmatprep.subr.mxu0 0.0
      %1199 = vmatpush1.msra.mxu0 0.0
      %1200 = vmatprep.subr.mxu0 0.0
      %1201 = vmatpush1.msra.mxu0 0.0
      %1202 = vmatprep.mubr.f32.mxu0 0.0
      %1203 = vmatmul.mubr.f32.gmra.mrb[0].mxu0 %v964
      %v1204 = vpop.f32.mrb[0].mxu0
      %v1205 = vadd.f32 0.0, %v1204
      %v1206 = vpop.f32.mrb[0].mxu0
      %1207 = vdwg.mxu0
      %v1208 = vadd.f32 %v1137, %v1205
      %v1209 = vxor.u32 %v1208, 2147483648
      %v1210 = vmul.f32 %v1209, 1.442695
      %v1211 = vpow.pop %v1210
      %v1212 = vadd.f32 %v1211, 1.0
      %v1213 = vrcp.pop %v1212
      %v1214 = vmul.f32 1.0, %v1213
      %v1215 = vtanh.pop %v1208
      %v1216 = vmul.f32 %v1214, %v954
      %1218 = vrot.lane.b32.xlu0 %v1215, 112
      %v1219 = vpop.permute.xlu0 %1218
      %v1221 = vmul.f32 %v1214, %v1219
      %1223 = vrot.lane.b32.xlu0 %v1221, 8
      %v1224 = vpop.permute.xlu0 %1223
      %v1226 = vadd.f32 %v1216, %v1224
      %v1227 = vtanh.pop %v1226
      %1229 = vrot.lane.b32.xlu0 %v1227, 16
      %v1230 = vpop.permute.xlu0 %1229
      %v1232 = vmul.f32 %v1214, %v1230
      %1234 = vrot.lane.b32.xlu0 %v1232, 104
      %v1235 = vpop.permute.xlu0 %1234
      %v1236 = vsel %vm312, %v1235, 0
      %1238 = vmatprep.subr.mxu0 0.0
      %1239 = vmatpush1.msra.mxu0 %v180
      %1240 = vmatprep.subr.mxu0 0.0
      %1241 = vmatpush1.msra.mxu0 0.0
      %1242 = vmatprep.subr.mxu0 0.0
      %1243 = vmatpush1.msra.mxu0 0.0
      %1244 = vmatprep.subr.mxu0 0.0
      %1245 = vmatpush1.msra.mxu0 0.0
      %1246 = vmatprep.subr.mxu0 0.0
      %1247 = vmatpush1.msra.mxu0 0.0
      %1248 = vmatprep.subr.mxu0 0.0
      %1249 = vmatpush1.msra.mxu0 0.0
      %1250 = vmatprep.subr.mxu0 0.0
      %1251 = vmatpush1.msra.mxu0 0.0
      %1252 = vmatprep.subr.mxu0 0.0
      %1253 = vmatpush1.msra.mxu0 0.0
      %1254 = vmatprep.subr.mxu0 0.0
      %1255 = vmatpush1.msra.mxu0 0.0
      %1256 = vmatprep.subr.mxu0 0.0
      %1257 = vmatpush1.msra.mxu0 0.0
      %1258 = vmatprep.subr.mxu0 0.0
      %1259 = vmatpush1.msra.mxu0 0.0
      %1260 = vmatprep.subr.mxu0 0.0
      %1261 = vmatpush1.msra.mxu0 0.0
      %1262 = vmatprep.subr.mxu0 0.0
      %1263 = vmatpush1.msra.mxu0 0.0
      %1264 = vmatprep.subr.mxu0 0.0
      %1265 = vmatpush1.msra.mxu0 0.0
      %1266 = vmatprep.subr.mxu0 0.0
      %1267 = vmatpush1.msra.mxu0 0.0
      %1268 = vmatprep.subr.mxu0 0.0
      %1269 = vmatpush1.msra.mxu0 0.0
      %1270 = vmatprep.subr.mxu0 0.0
      %1271 = vmatpush1.msra.mxu0 0.0
      %1272 = vmatprep.subr.mxu0 0.0
      %1273 = vmatpush1.msra.mxu0 0.0
      %1274 = vmatprep.subr.mxu0 0.0
      %1275 = vmatpush1.msra.mxu0 0.0
      %1276 = vmatprep.subr.mxu0 0.0
      %1277 = vmatpush1.msra.mxu0 0.0
      %1278 = vmatprep.subr.mxu0 0.0
      %1279 = vmatpush1.msra.mxu0 0.0
      %1280 = vmatprep.subr.mxu0 0.0
      %1281 = vmatpush1.msra.mxu0 0.0
      %1282 = vmatprep.subr.mxu0 0.0
      %1283 = vmatpush1.msra.mxu0 0.0
      %1284 = vmatprep.subr.mxu0 0.0
      %1285 = vmatpush1.msra.mxu0 0.0
      %1286 = vmatprep.subr.mxu0 0.0
      %1287 = vmatpush1.msra.mxu0 0.0
      %1288 = vmatprep.subr.mxu0 0.0
      %1289 = vmatpush1.msra.mxu0 0.0
      %1290 = vmatprep.subr.mxu0 0.0
      %1291 = vmatpush1.msra.mxu0 0.0
      %1292 = vmatprep.subr.mxu0 0.0
      %1293 = vmatpush1.msra.mxu0 0.0
      %1294 = vmatprep.subr.mxu0 0.0
      %1295 = vmatpush1.msra.mxu0 0.0
      %1296 = vmatprep.subr.mxu0 0.0
      %1297 = vmatpush1.msra.mxu0 0.0
      %1298 = vmatprep.subr.mxu0 0.0
      %1299 = vmatpush1.msra.mxu0 0.0
      %1300 = vmatprep.subr.mxu0 0.0
      %1301 = vmatpush1.msra.mxu0 0.0
      %1302 = vmatprep.mubr.f32.mxu0 0.0
      %1303 = vmatmul.mubr.f32.gmra.mrb[0].mxu0 %v1236
      %v1304 = vpop.f32.mrb[0].mxu0
      %v1305 = vadd.f32 %v414, %v1304
      %v1306 = vpop.f32.mrb[0].mxu0
      %1307 = vdwg.mxu0
      %1309 = vrot.lane.b32.xlu0 %v1135, 116
      %v1310 = vpop.permute.xlu0 %1309
      %v1311 = vsel %vm490, %v1310, 0
      %1313 = vmatprep.subr.mxu0 0.0
      %1314 = vmatpush1.msra.mxu0 %v495
      %1315 = vmatprep.subr.mxu0 0.0
      %1316 = vmatpush1.msra.mxu0 0.0
      %1317 = vmatprep.subr.mxu0 0.0
      %1318 = vmatpush1.msra.mxu0 0.0
      %1319 = vmatprep.subr.mxu0 0.0
      %1320 = vmatpush1.msra.mxu0 0.0
      %1321 = vmatprep.subr.mxu0 0.0
      %1322 = vmatpush1.msra.mxu0 0.0
      %1323 = vmatprep.subr.mxu0 0.0
      %1324 = vmatpush1.msra.mxu0 0.0
      %1325 = vmatprep.subr.mxu0 0.0
      %1326 = vmatpush1.msra.mxu0 0.0
      %1327 = vmatprep.subr.mxu0 0.0
      %1328 = vmatpush1.msra.mxu0 0.0
      %1329 = vmatprep.subr.mxu0 0.0
      %1330 = vmatpush1.msra.mxu0 0.0
      %1331 = vmatprep.subr.mxu0 0.0
      %1332 = vmatpush1.msra.mxu0 0.0
      %1333 = vmatprep.subr.mxu0 0.0
      %1334 = vmatpush1.msra.mxu0 0.0
      %1335 = vmatprep.subr.mxu0 0.0
      %1336 = vmatpush1.msra.mxu0 0.0
      %1337 = vmatprep.subr.mxu0 0.0
      %1338 = vmatpush1.msra.mxu0 0.0
      %1339 = vmatprep.subr.mxu0 0.0
      %1340 = vmatpush1.msra.mxu0 0.0
      %1341 = vmatprep.subr.mxu0 0.0
      %1342 = vmatpush1.msra.mxu0 0.0
      %1343 = vmatprep.subr.mxu0 0.0
      %1344 = vmatpush1.msra.mxu0 0.0
      %1345 = vmatprep.subr.mxu0 0.0
      %1346 = vmatpush1.msra.mxu0 0.0
      %1347 = vmatprep.subr.mxu0 0.0
      %1348 = vmatpush1.msra.mxu0 0.0
      %1349 = vmatprep.subr.mxu0 0.0
      %1350 = vmatpush1.msra.mxu0 0.0
      %1351 = vmatprep.subr.mxu0 0.0
      %1352 = vmatpush1.msra.mxu0 0.0
      %1353 = vmatprep.subr.mxu0 0.0
      %1354 = vmatpush1.msra.mxu0 0.0
      %1355 = vmatprep.subr.mxu0 0.0
      %1356 = vmatpush1.msra.mxu0 0.0
      %1357 = vmatprep.subr.mxu0 0.0
      %1358 = vmatpush1.msra.mxu0 0.0
      %1359 = vmatprep.subr.mxu0 0.0
      %1360 = vmatpush1.msra.mxu0 0.0
      %1361 = vmatprep.subr.mxu0 0.0
      %1362 = vmatpush1.msra.mxu0 0.0
      %1363 = vmatprep.subr.mxu0 0.0
      %1364 = vmatpush1.msra.mxu0 0.0
      %1365 = vmatprep.subr.mxu0 0.0
      %1366 = vmatpush1.msra.mxu0 0.0
      %1367 = vmatprep.subr.mxu0 0.0
      %1368 = vmatpush1.msra.mxu0 0.0
      %1369 = vmatprep.subr.mxu0 0.0
      %1370 = vmatpush1.msra.mxu0 0.0
      %1371 = vmatprep.subr.mxu0 0.0
      %1372 = vmatpush1.msra.mxu0 0.0
      %1373 = vmatprep.subr.mxu0 0.0
      %1374 = vmatpush1.msra.mxu0 0.0
      %1375 = vmatprep.subr.mxu0 0.0
      %1376 = vmatpush1.msra.mxu0 0.0
      %1377 = vmatprep.mubr.f32.mxu0 0.0
      %1378 = vmatmul.mubr.f32.gmra.mrb[0].mxu0 %v1311
      %v1379 = vpop.f32.mrb[0].mxu0
      %v1380 = vadd.f32 0.0, %v1379
      %v1381 = vpop.f32.mrb[0].mxu0
      %1382 = vdwg.mxu0
      %v1383 = vadd.f32 %v1305, %v1380
      %v1384 = vxor.u32 %v1383, 2147483648
      %v1385 = vmul.f32 %v1384, 1.442695
      %v1386 = vpow.pop %v1385
      %v1387 = vadd.f32 %v1386, 1.0
      %v1388 = vrcp.pop %v1387
      %v1389 = vmul.f32 1.0, %v1388
      %v1390 = vtanh.pop %v1383
      %v1391 = vmul.f32 %v1389, %v1129
      %1393 = vrot.lane.b32.xlu0 %v1390, 120
      %v1394 = vpop.permute.xlu0 %1393
      %v1396 = vmul.f32 %v1389, %v1394
      %1398 = vrot.lane.b32.xlu0 %v1396, 4
      %v1399 = vpop.permute.xlu0 %1398
      %v1401 = vadd.f32 %v1391, %v1399
      %v1402 = vtanh.pop %v1401
      %1404 = vrot.lane.b32.xlu0 %v1402, 8
      %v1405 = vpop.permute.xlu0 %1404
      %v1407 = vmul.f32 %v1389, %v1405
      %s1408 = scalar_lea.vmem [#allocation2], 32
      %v1409 = vld [vmem:[%s1408] sm:$0xff]
      %1410 = vmatprep.subr.mxu0 0.0
      %1411 = vmatpush1.msra.mxu0 %v178
      %1412 = vmatprep.subr.mxu0 0.0
      %1413 = vmatpush1.msra.mxu0 0.0
      %1414 = vmatprep.subr.mxu0 0.0
      %1415 = vmatpush1.msra.mxu0 0.0
      %1416 = vmatprep.subr.mxu0 0.0
      %1417 = vmatpush1.msra.mxu0 0.0
      %1418 = vmatprep.subr.mxu0 0.0
      %1419 = vmatpush1.msra.mxu0 0.0
      %1420 = vmatprep.subr.mxu0 0.0
      %1421 = vmatpush1.msra.mxu0 0.0
      %1422 = vmatprep.subr.mxu0 0.0
      %1423 = vmatpush1.msra.mxu0 0.0
      %1424 = vmatprep.subr.mxu0 0.0
      %1425 = vmatpush1.msra.mxu0 0.0
      %1426 = vmatprep.subr.mxu0 0.0
      %1427 = vmatpush1.msra.mxu0 0.0
      %1428 = vmatprep.subr.mxu0 0.0
      %1429 = vmatpush1.msra.mxu0 0.0
      %1430 = vmatprep.subr.mxu0 0.0
      %1431 = vmatpush1.msra.mxu0 0.0
      %1432 = vmatprep.subr.mxu0 0.0
      %1433 = vmatpush1.msra.mxu0 0.0
      %1434 = vmatprep.subr.mxu0 0.0
      %1435 = vmatpush1.msra.mxu0 0.0
      %1436 = vmatprep.subr.mxu0 0.0
      %1437 = vmatpush1.msra.mxu0 0.0
      %1438 = vmatprep.subr.mxu0 0.0
      %1439 = vmatpush1.msra.mxu0 0.0
      %1440 = vmatprep.subr.mxu0 0.0
      %1441 = vmatpush1.msra.mxu0 0.0
      %1442 = vmatprep.subr.mxu0 0.0
      %1443 = vmatpush1.msra.mxu0 0.0
      %1444 = vmatprep.subr.mxu0 0.0
      %1445 = vmatpush1.msra.mxu0 0.0
      %1446 = vmatprep.subr.mxu0 0.0
      %1447 = vmatpush1.msra.mxu0 0.0
      %1448 = vmatprep.subr.mxu0 0.0
      %1449 = vmatpush1.msra.mxu0 0.0
      %1450 = vmatprep.subr.mxu0 0.0
      %1451 = vmatpush1.msra.mxu0 0.0
      %1452 = vmatprep.subr.mxu0 0.0
      %1453 = vmatpush1.msra.mxu0 0.0
      %1454 = vmatprep.subr.mxu0 0.0
      %1455 = vmatpush1.msra.mxu0 0.0
      %1456 = vmatprep.subr.mxu0 0.0
      %1457 = vmatpush1.msra.mxu0 0.0
      %1458 = vmatprep.subr.mxu0 0.0
      %1459 = vmatpush1.msra.mxu0 0.0
      %1460 = vmatprep.subr.mxu0 0.0
      %1461 = vmatpush1.msra.mxu0 0.0
      %1462 = vmatprep.subr.mxu0 0.0
      %1463 = vmatpush1.msra.mxu0 0.0
      %1464 = vmatprep.subr.mxu0 0.0
      %1465 = vmatpush1.msra.mxu0 0.0
      %1466 = vmatprep.subr.mxu0 0.0
      %1467 = vmatpush1.msra.mxu0 0.0
      %1468 = vmatprep.subr.mxu0 0.0
      %1469 = vmatpush1.msra.mxu0 0.0
      %1470 = vmatprep.subr.mxu0 0.0
      %1471 = vmatpush1.msra.mxu0 0.0
      %1472 = vmatprep.subr.mxu0 0.0
      %1473 = vmatpush1.msra.mxu0 0.0
      %1474 = vmatprep.mubr.f32.mxu0 0.0
      %1475 = vmatmul.mubr.f32.gmra.mrb[0].mxu0 %v1236
      %v1476 = vpop.f32.mrb[0].mxu0
      %v1477 = vadd.f32 0.0, %v1476
      %v1478 = vpop.f32.mrb[0].mxu0
      %1479 = vdwg.mxu0
      %v1480 = vadd.f32 %v1409, %v1477
      %v1481 = vxor.u32 %v1480, 2147483648
      %v1482 = vmul.f32 %v1481, 1.442695
      %v1483 = vpow.pop %v1482
      %v1484 = vadd.f32 %v1483, 1.0
      %v1485 = vrcp.pop %v1484
      %v1486 = vmul.f32 1.0, %v1485
      %v1487 = vtanh.pop %v1480
      %v1488 = vmul.f32 %v1486, %v1226
      %1490 = vrot.lane.b32.xlu0 %v1487, 112
      %v1491 = vpop.permute.xlu0 %1490
      %v1493 = vmul.f32 %v1486, %v1491
      %1495 = vrot.lane.b32.xlu0 %v1493, 8
      %v1496 = vpop.permute.xlu0 %1495
      %v1498 = vadd.f32 %v1488, %v1496
      %v1499 = vtanh.pop %v1498
      %1501 = vrot.lane.b32.xlu0 %v1499, 16
      %v1502 = vpop.permute.xlu0 %1501
      %v1504 = vmul.f32 %v1486, %v1502
      %1506 = vrot.lane.b32.xlu0 %v1504, 104
      %v1507 = vpop.permute.xlu0 %1506
      %v1508 = vsel %vm312, %v1507, 0
      %1510 = vmatprep.subr.mxu0 0.0
      %1511 = vmatpush1.msra.mxu0 %v180
      %1512 = vmatprep.subr.mxu0 0.0
      %1513 = vmatpush1.msra.mxu0 0.0
      %1514 = vmatprep.subr.mxu0 0.0
      %1515 = vmatpush1.msra.mxu0 0.0
      %1516 = vmatprep.subr.mxu0 0.0
      %1517 = vmatpush1.msra.mxu0 0.0
      %1518 = vmatprep.subr.mxu0 0.0
      %1519 = vmatpush1.msra.mxu0 0.0
      %1520 = vmatprep.subr.mxu0 0.0
      %1521 = vmatpush1.msra.mxu0 0.0
      %1522 = vmatprep.subr.mxu0 0.0
      %1523 = vmatpush1.msra.mxu0 0.0
      %1524 = vmatprep.subr.mxu0 0.0
      %1525 = vmatpush1.msra.mxu0 0.0
      %1526 = vmatprep.subr.mxu0 0.0
      %1527 = vmatpush1.msra.mxu0 0.0
      %1528 = vmatprep.subr.mxu0 0.0
      %1529 = vmatpush1.msra.mxu0 0.0
      %1530 = vmatprep.subr.mxu0 0.0
      %1531 = vmatpush1.msra.mxu0 0.0
      %1532 = vmatprep.subr.mxu0 0.0
      %1533 = vmatpush1.msra.mxu0 0.0
      %1534 = vmatprep.subr.mxu0 0.0
      %1535 = vmatpush1.msra.mxu0 0.0
      %1536 = vmatprep.subr.mxu0 0.0
      %1537 = vmatpush1.msra.mxu0 0.0
      %1538 = vmatprep.subr.mxu0 0.0
      %1539 = vmatpush1.msra.mxu0 0.0
      %1540 = vmatprep.subr.mxu0 0.0
      %1541 = vmatpush1.msra.mxu0 0.0
      %1542 = vmatprep.subr.mxu0 0.0
      %1543 = vmatpush1.msra.mxu0 0.0
      %1544 = vmatprep.subr.mxu0 0.0
      %1545 = vmatpush1.msra.mxu0 0.0
      %1546 = vmatprep.subr.mxu0 0.0
      %1547 = vmatpush1.msra.mxu0 0.0
      %1548 = vmatprep.subr.mxu0 0.0
      %1549 = vmatpush1.msra.mxu0 0.0
      %1550 = vmatprep.subr.mxu0 0.0
      %1551 = vmatpush1.msra.mxu0 0.0
      %1552 = vmatprep.subr.mxu0 0.0
      %1553 = vmatpush1.msra.mxu0 0.0
      %1554 = vmatprep.subr.mxu0 0.0
      %1555 = vmatpush1.msra.mxu0 0.0
      %1556 = vmatprep.subr.mxu0 0.0
      %1557 = vmatpush1.msra.mxu0 0.0
      %1558 = vmatprep.subr.mxu0 0.0
      %1559 = vmatpush1.msra.mxu0 0.0
      %1560 = vmatprep.subr.mxu0 0.0
      %1561 = vmatpush1.msra.mxu0 0.0
      %1562 = vmatprep.subr.mxu0 0.0
      %1563 = vmatpush1.msra.mxu0 0.0
      %1564 = vmatprep.subr.mxu0 0.0
      %1565 = vmatpush1.msra.mxu0 0.0
      %1566 = vmatprep.subr.mxu0 0.0
      %1567 = vmatpush1.msra.mxu0 0.0
      %1568 = vmatprep.subr.mxu0 0.0
      %1569 = vmatpush1.msra.mxu0 0.0
      %1570 = vmatprep.subr.mxu0 0.0
      %1571 = vmatpush1.msra.mxu0 0.0
      %1572 = vmatprep.subr.mxu0 0.0
      %1573 = vmatpush1.msra.mxu0 0.0
      %1574 = vmatprep.mubr.f32.mxu0 0.0
      %1575 = vmatmul.mubr.f32.gmra.mrb[0].mxu0 %v1508
      %v1576 = vpop.f32.mrb[0].mxu0
      %v1577 = vadd.f32 %v414, %v1576
      %v1578 = vpop.f32.mrb[0].mxu0
      %1579 = vdwg.mxu0
      %1581 = vrot.lane.b32.xlu0 %v1407, 116
      %v1582 = vpop.permute.xlu0 %1581
      %v1583 = vsel %vm490, %v1582, 0
      %1585 = vmatprep.subr.mxu0 0.0
      %1586 = vmatpush1.msra.mxu0 %v495
      %1587 = vmatprep.subr.mxu0 0.0
      %1588 = vmatpush1.msra.mxu0 0.0
      %1589 = vmatprep.subr.mxu0 0.0
      %1590 = vmatpush1.msra.mxu0 0.0
      %1591 = vmatprep.subr.mxu0 0.0
      %1592 = vmatpush1.msra.mxu0 0.0
      %1593 = vmatprep.subr.mxu0 0.0
      %1594 = vmatpush1.msra.mxu0 0.0
      %1595 = vmatprep.subr.mxu0 0.0
      %1596 = vmatpush1.msra.mxu0 0.0
      %1597 = vmatprep.subr.mxu0 0.0
      %1598 = vmatpush1.msra.mxu0 0.0
      %1599 = vmatprep.subr.mxu0 0.0
      %1600 = vmatpush1.msra.mxu0 0.0
      %1601 = vmatprep.subr.mxu0 0.0
      %1602 = vmatpush1.msra.mxu0 0.0
      %1603 = vmatprep.subr.mxu0 0.0
      %1604 = vmatpush1.msra.mxu0 0.0
      %1605 = vmatprep.subr.mxu0 0.0
      %1606 = vmatpush1.msra.mxu0 0.0
      %1607 = vmatprep.subr.mxu0 0.0
      %1608 = vmatpush1.msra.mxu0 0.0
      %1609 = vmatprep.subr.mxu0 0.0
      %1610 = vmatpush1.msra.mxu0 0.0
      %1611 = vmatprep.subr.mxu0 0.0
      %1612 = vmatpush1.msra.mxu0 0.0
      %1613 = vmatprep.subr.mxu0 0.0
      %1614 = vmatpush1.msra.mxu0 0.0
      %1615 = vmatprep.subr.mxu0 0.0
      %1616 = vmatpush1.msra.mxu0 0.0
      %1617 = vmatprep.subr.mxu0 0.0
      %1618 = vmatpush1.msra.mxu0 0.0
      %1619 = vmatprep.subr.mxu0 0.0
      %1620 = vmatpush1.msra.mxu0 0.0
      %1621 = vmatprep.subr.mxu0 0.0
      %1622 = vmatpush1.msra.mxu0 0.0
      %1623 = vmatprep.subr.mxu0 0.0
      %1624 = vmatpush1.msra.mxu0 0.0
      %1625 = vmatprep.subr.mxu0 0.0
      %1626 = vmatpush1.msra.mxu0 0.0
      %1627 = vmatprep.subr.mxu0 0.0
      %1628 = vmatpush1.msra.mxu0 0.0
      %1629 = vmatprep.subr.mxu0 0.0
      %1630 = vmatpush1.msra.mxu0 0.0
      %1631 = vmatprep.subr.mxu0 0.0
      %1632 = vmatpush1.msra.mxu0 0.0
      %1633 = vmatprep.subr.mxu0 0.0
      %1634 = vmatpush1.msra.mxu0 0.0
      %1635 = vmatprep.subr.mxu0 0.0
      %1636 = vmatpush1.msra.mxu0 0.0
      %1637 = vmatprep.subr.mxu0 0.0
      %1638 = vmatpush1.msra.mxu0 0.0
      %1639 = vmatprep.subr.mxu0 0.0
      %1640 = vmatpush1.msra.mxu0 0.0
      %1641 = vmatprep.subr.mxu0 0.0
      %1642 = vmatpush1.msra.mxu0 0.0
      %1643 = vmatprep.subr.mxu0 0.0
      %1644 = vmatpush1.msra.mxu0 0.0
      %1645 = vmatprep.subr.mxu0 0.0
      %1646 = vmatpush1.msra.mxu0 0.0
      %1647 = vmatprep.subr.mxu0 0.0
      %1648 = vmatpush1.msra.mxu0 0.0
      %1649 = vmatprep.mubr.f32.mxu0 0.0
      %1650 = vmatmul.mubr.f32.gmra.mrb[0].mxu0 %v1583
      %v1651 = vpop.f32.mrb[0].mxu0
      %v1652 = vadd.f32 0.0, %v1651
      %v1653 = vpop.f32.mrb[0].mxu0
      %1654 = vdwg.mxu0
      %v1655 = vadd.f32 %v1577, %v1652
      %v1656 = vxor.u32 %v1655, 2147483648
      %v1657 = vmul.f32 %v1656, 1.442695
      %v1658 = vpow.pop %v1657
      %v1659 = vadd.f32 %v1658, 1.0
      %v1660 = vrcp.pop %v1659
      %v1661 = vmul.f32 1.0, %v1660
      %v1662 = vtanh.pop %v1655
      %v1663 = vmul.f32 %v1661, %v1401
      %1665 = vrot.lane.b32.xlu0 %v1662, 120
      %v1666 = vpop.permute.xlu0 %1665
      %v1668 = vmul.f32 %v1661, %v1666
      %1670 = vrot.lane.b32.xlu0 %v1668, 4
      %v1671 = vpop.permute.xlu0 %1670
      %v1673 = vadd.f32 %v1663, %v1671
      %v1674 = vtanh.pop %v1673
      %1676 = vrot.lane.b32.xlu0 %v1674, 8
      %v1677 = vpop.permute.xlu0 %1676
      %v1679 = vmul.f32 %v1661, %v1677
      %s1680 = scalar_lea.vmem [#allocation2], 40
      %v1681 = vld [vmem:[%s1680] sm:$0xff]
      %1682 = vmatprep.subr.mxu0 0.0
      %1683 = vmatpush1.msra.mxu0 %v178
      %1684 = vmatprep.subr.mxu0 0.0
      %1685 = vmatpush1.msra.mxu0 0.0
      %1686 = vmatprep.subr.mxu0 0.0
      %1687 = vmatpush1.msra.mxu0 0.0
      %1688 = vmatprep.subr.mxu0 0.0
      %1689 = vmatpush1.msra.mxu0 0.0
      %1690 = vmatprep.subr.mxu0 0.0
      %1691 = vmatpush1.msra.mxu0 0.0
      %1692 = vmatprep.subr.mxu0 0.0
      %1693 = vmatpush1.msra.mxu0 0.0
      %1694 = vmatprep.subr.mxu0 0.0
      %1695 = vmatpush1.msra.mxu0 0.0
      %1696 = vmatprep.subr.mxu0 0.0
      %1697 = vmatpush1.msra.mxu0 0.0
      %1698 = vmatprep.subr.mxu0 0.0
      %1699 = vmatpush1.msra.mxu0 0.0
      %1700 = vmatprep.subr.mxu0 0.0
      %1701 = vmatpush1.msra.mxu0 0.0
      %1702 = vmatprep.subr.mxu0 0.0
      %1703 = vmatpush1.msra.mxu0 0.0
      %1704 = vmatprep.subr.mxu0 0.0
      %1705 = vmatpush1.msra.mxu0 0.0
      %1706 = vmatprep.subr.mxu0 0.0
      %1707 = vmatpush1.msra.mxu0 0.0
      %1708 = vmatprep.subr.mxu0 0.0
      %1709 = vmatpush1.msra.mxu0 0.0
      %1710 = vmatprep.subr.mxu0 0.0
      %1711 = vmatpush1.msra.mxu0 0.0
      %1712 = vmatprep.subr.mxu0 0.0
      %1713 = vmatpush1.msra.mxu0 0.0
      %1714 = vmatprep.subr.mxu0 0.0
      %1715 = vmatpush1.msra.mxu0 0.0
      %1716 = vmatprep.subr.mxu0 0.0
      %1717 = vmatpush1.msra.mxu0 0.0
      %1718 = vmatprep.subr.mxu0 0.0
      %1719 = vmatpush1.msra.mxu0 0.0
      %1720 = vmatprep.subr.mxu0 0.0
      %1721 = vmatpush1.msra.mxu0 0.0
      %1722 = vmatprep.subr.mxu0 0.0
      %1723 = vmatpush1.msra.mxu0 0.0
      %1724 = vmatprep.subr.mxu0 0.0
      %1725 = vmatpush1.msra.mxu0 0.0
      %1726 = vmatprep.subr.mxu0 0.0
      %1727 = vmatpush1.msra.mxu0 0.0
      %1728 = vmatprep.subr.mxu0 0.0
      %1729 = vmatpush1.msra.mxu0 0.0
      %1730 = vmatprep.subr.mxu0 0.0
      %1731 = vmatpush1.msra.mxu0 0.0
      %1732 = vmatprep.subr.mxu0 0.0
      %1733 = vmatpush1.msra.mxu0 0.0
      %1734 = vmatprep.subr.mxu0 0.0
      %1735 = vmatpush1.msra.mxu0 0.0
      %1736 = vmatprep.subr.mxu0 0.0
      %1737 = vmatpush1.msra.mxu0 0.0
      %1738 = vmatprep.subr.mxu0 0.0
      %1739 = vmatpush1.msra.mxu0 0.0
      %1740 = vmatprep.subr.mxu0 0.0
      %1741 = vmatpush1.msra.mxu0 0.0
      %1742 = vmatprep.subr.mxu0 0.0
      %1743 = vmatpush1.msra.mxu0 0.0
      %1744 = vmatprep.subr.mxu0 0.0
      %1745 = vmatpush1.msra.mxu0 0.0
      %1746 = vmatprep.mubr.f32.mxu0 0.0
      %1747 = vmatmul.mubr.f32.gmra.mrb[0].mxu0 %v1508
      %v1748 = vpop.f32.mrb[0].mxu0
      %v1749 = vadd.f32 0.0, %v1748
      %v1750 = vpop.f32.mrb[0].mxu0
      %1751 = vdwg.mxu0
      %v1752 = vadd.f32 %v1681, %v1749
      %v1753 = vxor.u32 %v1752, 2147483648
      %v1754 = vmul.f32 %v1753, 1.442695
      %v1755 = vpow.pop %v1754
      %v1756 = vadd.f32 %v1755, 1.0
      %v1757 = vrcp.pop %v1756
      %v1758 = vmul.f32 1.0, %v1757
      %v1759 = vtanh.pop %v1752
      %v1760 = vmul.f32 %v1758, %v1498
      %1762 = vrot.lane.b32.xlu0 %v1759, 112
      %v1763 = vpop.permute.xlu0 %1762
      %v1765 = vmul.f32 %v1758, %v1763
      %1767 = vrot.lane.b32.xlu0 %v1765, 8
      %v1768 = vpop.permute.xlu0 %1767
      %v1770 = vadd.f32 %v1760, %v1768
      %v1771 = vtanh.pop %v1770
      %1773 = vrot.lane.b32.xlu0 %v1771, 16
      %v1774 = vpop.permute.xlu0 %1773
      %v1776 = vmul.f32 %v1758, %v1774
      %1778 = vrot.lane.b32.xlu0 %v1776, 104
      %v1779 = vpop.permute.xlu0 %1778
      %v1780 = vsel %vm312, %v1779, 0
      %1782 = vmatprep.subr.mxu0 0.0
      %1783 = vmatpush1.msra.mxu0 %v180
      %1784 = vmatprep.subr.mxu0 0.0
      %1785 = vmatpush1.msra.mxu0 0.0
      %1786 = vmatprep.subr.mxu0 0.0
      %1787 = vmatpush1.msra.mxu0 0.0
      %1788 = vmatprep.subr.mxu0 0.0
      %1789 = vmatpush1.msra.mxu0 0.0
      %1790 = vmatprep.subr.mxu0 0.0
      %1791 = vmatpush1.msra.mxu0 0.0
      %1792 = vmatprep.subr.mxu0 0.0
      %1793 = vmatpush1.msra.mxu0 0.0
      %1794 = vmatprep.subr.mxu0 0.0
      %1795 = vmatpush1.msra.mxu0 0.0
      %1796 = vmatprep.subr.mxu0 0.0
      %1797 = vmatpush1.msra.mxu0 0.0
      %1798 = vmatprep.subr.mxu0 0.0
      %1799 = vmatpush1.msra.mxu0 0.0
      %1800 = vmatprep.subr.mxu0 0.0
      %1801 = vmatpush1.msra.mxu0 0.0
      %1802 = vmatprep.subr.mxu0 0.0
      %1803 = vmatpush1.msra.mxu0 0.0
      %1804 = vmatprep.subr.mxu0 0.0
      %1805 = vmatpush1.msra.mxu0 0.0
      %1806 = vmatprep.subr.mxu0 0.0
      %1807 = vmatpush1.msra.mxu0 0.0
      %1808 = vmatprep.subr.mxu0 0.0
      %1809 = vmatpush1.msra.mxu0 0.0
      %1810 = vmatprep.subr.mxu0 0.0
      %1811 = vmatpush1.msra.mxu0 0.0
      %1812 = vmatprep.subr.mxu0 0.0
      %1813 = vmatpush1.msra.mxu0 0.0
      %1814 = vmatprep.subr.mxu0 0.0
      %1815 = vmatpush1.msra.mxu0 0.0
      %1816 = vmatprep.subr.mxu0 0.0
      %1817 = vmatpush1.msra.mxu0 0.0
      %1818 = vmatprep.subr.mxu0 0.0
      %1819 = vmatpush1.msra.mxu0 0.0
      %1820 = vmatprep.subr.mxu0 0.0
      %1821 = vmatpush1.msra.mxu0 0.0
      %1822 = vmatprep.subr.mxu0 0.0
      %1823 = vmatpush1.msra.mxu0 0.0
      %1824 = vmatprep.subr.mxu0 0.0
      %1825 = vmatpush1.msra.mxu0 0.0
      %1826 = vmatprep.subr.mxu0 0.0
      %1827 = vmatpush1.msra.mxu0 0.0
      %1828 = vmatprep.subr.mxu0 0.0
      %1829 = vmatpush1.msra.mxu0 0.0
      %1830 = vmatprep.subr.mxu0 0.0
      %1831 = vmatpush1.msra.mxu0 0.0
      %1832 = vmatprep.subr.mxu0 0.0
      %1833 = vmatpush1.msra.mxu0 0.0
      %1834 = vmatprep.subr.mxu0 0.0
      %1835 = vmatpush1.msra.mxu0 0.0
      %1836 = vmatprep.subr.mxu0 0.0
      %1837 = vmatpush1.msra.mxu0 0.0
      %1838 = vmatprep.subr.mxu0 0.0
      %1839 = vmatpush1.msra.mxu0 0.0
      %1840 = vmatprep.subr.mxu0 0.0
      %1841 = vmatpush1.msra.mxu0 0.0
      %1842 = vmatprep.subr.mxu0 0.0
      %1843 = vmatpush1.msra.mxu0 0.0
      %1844 = vmatprep.subr.mxu0 0.0
      %1845 = vmatpush1.msra.mxu0 0.0
      %1846 = vmatprep.mubr.f32.mxu0 0.0
      %1847 = vmatmul.mubr.f32.gmra.mrb[0].mxu0 %v1780
      %v1848 = vpop.f32.mrb[0].mxu0
      %v1849 = vadd.f32 %v414, %v1848
      %v1850 = vpop.f32.mrb[0].mxu0
      %1851 = vdwg.mxu0
      %1853 = vrot.lane.b32.xlu0 %v1679, 116
      %v1854 = vpop.permute.xlu0 %1853
      %v1855 = vsel %vm490, %v1854, 0
      %1857 = vmatprep.subr.mxu0 0.0
      %1858 = vmatpush1.msra.mxu0 %v495
      %1859 = vmatprep.subr.mxu0 0.0
      %1860 = vmatpush1.msra.mxu0 0.0
      %1861 = vmatprep.subr.mxu0 0.0
      %1862 = vmatpush1.msra.mxu0 0.0
      %1863 = vmatprep.subr.mxu0 0.0
      %1864 = vmatpush1.msra.mxu0 0.0
      %1865 = vmatprep.subr.mxu0 0.0
      %1866 = vmatpush1.msra.mxu0 0.0
      %1867 = vmatprep.subr.mxu0 0.0
      %1868 = vmatpush1.msra.mxu0 0.0
      %1869 = vmatprep.subr.mxu0 0.0
      %1870 = vmatpush1.msra.mxu0 0.0
      %1871 = vmatprep.subr.mxu0 0.0
      %1872 = vmatpush1.msra.mxu0 0.0
      %1873 = vmatprep.subr.mxu0 0.0
      %1874 = vmatpush1.msra.mxu0 0.0
      %1875 = vmatprep.subr.mxu0 0.0
      %1876 = vmatpush1.msra.mxu0 0.0
      %1877 = vmatprep.subr.mxu0 0.0
      %1878 = vmatpush1.msra.mxu0 0.0
      %1879 = vmatprep.subr.mxu0 0.0
      %1880 = vmatpush1.msra.mxu0 0.0
      %1881 = vmatprep.subr.mxu0 0.0
      %1882 = vmatpush1.msra.mxu0 0.0
      %1883 = vmatprep.subr.mxu0 0.0
      %1884 = vmatpush1.msra.mxu0 0.0
      %1885 = vmatprep.subr.mxu0 0.0
      %1886 = vmatpush1.msra.mxu0 0.0
      %1887 = vmatprep.subr.mxu0 0.0
      %1888 = vmatpush1.msra.mxu0 0.0
      %1889 = vmatprep.subr.mxu0 0.0
      %1890 = vmatpush1.msra.mxu0 0.0
      %1891 = vmatprep.subr.mxu0 0.0
      %1892 = vmatpush1.msra.mxu0 0.0
      %1893 = vmatprep.subr.mxu0 0.0
      %1894 = vmatpush1.msra.mxu0 0.0
      %1895 = vmatprep.subr.mxu0 0.0
      %1896 = vmatpush1.msra.mxu0 0.0
      %1897 = vmatprep.subr.mxu0 0.0
      %1898 = vmatpush1.msra.mxu0 0.0
      %1899 = vmatprep.subr.mxu0 0.0
      %1900 = vmatpush1.msra.mxu0 0.0
      %1901 = vmatprep.subr.mxu0 0.0
      %1902 = vmatpush1.msra.mxu0 0.0
      %1903 = vmatprep.subr.mxu0 0.0
      %1904 = vmatpush1.msra.mxu0 0.0
      %1905 = vmatprep.subr.mxu0 0.0
      %1906 = vmatpush1.msra.mxu0 0.0
      %1907 = vmatprep.subr.mxu0 0.0
      %1908 = vmatpush1.msra.mxu0 0.0
      %1909 = vmatprep.subr.mxu0 0.0
      %1910 = vmatpush1.msra.mxu0 0.0
      %1911 = vmatprep.subr.mxu0 0.0
      %1912 = vmatpush1.msra.mxu0 0.0
      %1913 = vmatprep.subr.mxu0 0.0
      %1914 = vmatpush1.msra.mxu0 0.0
      %1915 = vmatprep.subr.mxu0 0.0
      %1916 = vmatpush1.msra.mxu0 0.0
      %1917 = vmatprep.subr.mxu0 0.0
      %1918 = vmatpush1.msra.mxu0 0.0
      %1919 = vmatprep.subr.mxu0 0.0
      %1920 = vmatpush1.msra.mxu0 0.0
      %1921 = vmatprep.mubr.f32.mxu0 0.0
      %1922 = vmatmul.mubr.f32.gmra.mrb[0].mxu0 %v1855
      %v1923 = vpop.f32.mrb[0].mxu0
      %v1924 = vadd.f32 0.0, %v1923
      %v1925 = vpop.f32.mrb[0].mxu0
      %1926 = vdwg.mxu0
      %v1927 = vadd.f32 %v1849, %v1924
      %v1928 = vxor.u32 %v1927, 2147483648
      %v1929 = vmul.f32 %v1928, 1.442695
      %v1930 = vpow.pop %v1929
      %v1931 = vadd.f32 %v1930, 1.0
      %v1932 = vrcp.pop %v1931
      %v1933 = vmul.f32 1.0, %v1932
      %v1934 = vtanh.pop %v1927
      %v1935 = vmul.f32 %v1933, %v1673
      %1937 = vrot.lane.b32.xlu0 %v1934, 120
      %v1938 = vpop.permute.xlu0 %1937
      %v1940 = vmul.f32 %v1933, %v1938
      %1942 = vrot.lane.b32.xlu0 %v1940, 4
      %v1943 = vpop.permute.xlu0 %1942
      %v1945 = vadd.f32 %v1935, %v1943
      %v1946 = vtanh.pop %v1945
      %1948 = vrot.lane.b32.xlu0 %v1946, 8
      %v1949 = vpop.permute.xlu0 %1948
      %v1951 = vmul.f32 %v1933, %v1949
      %s1952 = scalar_lea.vmem [#allocation2], 48
      %v1953 = vld [vmem:[%s1952] sm:$0xff]
      %1954 = vmatprep.subr.mxu0 0.0
      %1955 = vmatpush1.msra.mxu0 %v178
      %1956 = vmatprep.subr.mxu0 0.0
      %1957 = vmatpush1.msra.mxu0 0.0
      %1958 = vmatprep.subr.mxu0 0.0
      %1959 = vmatpush1.msra.mxu0 0.0
      %1960 = vmatprep.subr.mxu0 0.0
      %1961 = vmatpush1.msra.mxu0 0.0
      %1962 = vmatprep.subr.mxu0 0.0
      %1963 = vmatpush1.msra.mxu0 0.0
      %1964 = vmatprep.subr.mxu0 0.0
      %1965 = vmatpush1.msra.mxu0 0.0
      %1966 = vmatprep.subr.mxu0 0.0
      %1967 = vmatpush1.msra.mxu0 0.0
      %1968 = vmatprep.subr.mxu0 0.0
      %1969 = vmatpush1.msra.mxu0 0.0
      %1970 = vmatprep.subr.mxu0 0.0
      %1971 = vmatpush1.msra.mxu0 0.0
      %1972 = vmatprep.subr.mxu0 0.0
      %1973 = vmatpush1.msra.mxu0 0.0
      %1974 = vmatprep.subr.mxu0 0.0
      %1975 = vmatpush1.msra.mxu0 0.0
      %1976 = vmatprep.subr.mxu0 0.0
      %1977 = vmatpush1.msra.mxu0 0.0
      %1978 = vmatprep.subr.mxu0 0.0
      %1979 = vmatpush1.msra.mxu0 0.0
      %1980 = vmatprep.subr.mxu0 0.0
      %1981 = vmatpush1.msra.mxu0 0.0
      %1982 = vmatprep.subr.mxu0 0.0
      %1983 = vmatpush1.msra.mxu0 0.0
      %1984 = vmatprep.subr.mxu0 0.0
      %1985 = vmatpush1.msra.mxu0 0.0
      %1986 = vmatprep.subr.mxu0 0.0
      %1987 = vmatpush1.msra.mxu0 0.0
      %1988 = vmatprep.subr.mxu0 0.0
      %1989 = vmatpush1.msra.mxu0 0.0
      %1990 = vmatprep.subr.mxu0 0.0
      %1991 = vmatpush1.msra.mxu0 0.0
      %1992 = vmatprep.subr.mxu0 0.0
      %1993 = vmatpush1.msra.mxu0 0.0
      %1994 = vmatprep.subr.mxu0 0.0
      %1995 = vmatpush1.msra.mxu0 0.0
      %1996 = vmatprep.subr.mxu0 0.0
      %1997 = vmatpush1.msra.mxu0 0.0
      %1998 = vmatprep.subr.mxu0 0.0
      %1999 = vmatpush1.msra.mxu0 0.0
      %2000 = vmatprep.subr.mxu0 0.0
      %2001 = vmatpush1.msra.mxu0 0.0
      %2002 = vmatprep.subr.mxu0 0.0
      %2003 = vmatpush1.msra.mxu0 0.0
      %2004 = vmatprep.subr.mxu0 0.0
      %2005 = vmatpush1.msra.mxu0 0.0
      %2006 = vmatprep.subr.mxu0 0.0
      %2007 = vmatpush1.msra.mxu0 0.0
      %2008 = vmatprep.subr.mxu0 0.0
      %2009 = vmatpush1.msra.mxu0 0.0
      %2010 = vmatprep.subr.mxu0 0.0
      %2011 = vmatpush1.msra.mxu0 0.0
      %2012 = vmatprep.subr.mxu0 0.0
      %2013 = vmatpush1.msra.mxu0 0.0
      %2014 = vmatprep.subr.mxu0 0.0
      %2015 = vmatpush1.msra.mxu0 0.0
      %2016 = vmatprep.subr.mxu0 0.0
      %2017 = vmatpush1.msra.mxu0 0.0
      %2018 = vmatprep.mubr.f32.mxu0 0.0
      %2019 = vmatmul.mubr.f32.gmra.mrb[0].mxu0 %v1780
      %v2020 = vpop.f32.mrb[0].mxu0
      %v2021 = vadd.f32 0.0, %v2020
      %v2022 = vpop.f32.mrb[0].mxu0
      %2023 = vdwg.mxu0
      %v2024 = vadd.f32 %v1953, %v2021
      %v2025 = vxor.u32 %v2024, 2147483648
      %v2026 = vmul.f32 %v2025, 1.442695
      %v2027 = vpow.pop %v2026
      %v2028 = vadd.f32 %v2027, 1.0
      %v2029 = vrcp.pop %v2028
      %v2030 = vmul.f32 1.0, %v2029
      %v2031 = vtanh.pop %v2024
      %v2032 = vmul.f32 %v2030, %v1770
      %2034 = vrot.lane.b32.xlu0 %v2031, 112
      %v2035 = vpop.permute.xlu0 %2034
      %v2037 = vmul.f32 %v2030, %v2035
      %2039 = vrot.lane.b32.xlu0 %v2037, 8
      %v2040 = vpop.permute.xlu0 %2039
      %v2042 = vadd.f32 %v2032, %v2040
      %v2043 = vtanh.pop %v2042
      %2045 = vrot.lane.b32.xlu0 %v2043, 16
      %v2046 = vpop.permute.xlu0 %2045
      %v2048 = vmul.f32 %v2030, %v2046
      %2050 = vrot.lane.b32.xlu0 %v2048, 104
      %v2051 = vpop.permute.xlu0 %2050
      %v2052 = vsel %vm312, %v2051, 0
      %2054 = vmatprep.subr.mxu0 0.0
      %2055 = vmatpush1.msra.mxu0 %v180
      %2056 = vmatprep.subr.mxu0 0.0
      %2057 = vmatpush1.msra.mxu0 0.0
      %2058 = vmatprep.subr.mxu0 0.0
      %2059 = vmatpush1.msra.mxu0 0.0
      %2060 = vmatprep.subr.mxu0 0.0
      %2061 = vmatpush1.msra.mxu0 0.0
      %2062 = vmatprep.subr.mxu0 0.0
      %2063 = vmatpush1.msra.mxu0 0.0
      %2064 = vmatprep.subr.mxu0 0.0
      %2065 = vmatpush1.msra.mxu0 0.0
      %2066 = vmatprep.subr.mxu0 0.0
      %2067 = vmatpush1.msra.mxu0 0.0
      %2068 = vmatprep.subr.mxu0 0.0
      %2069 = vmatpush1.msra.mxu0 0.0
      %2070 = vmatprep.subr.mxu0 0.0
      %2071 = vmatpush1.msra.mxu0 0.0
      %2072 = vmatprep.subr.mxu0 0.0
      %2073 = vmatpush1.msra.mxu0 0.0
      %2074 = vmatprep.subr.mxu0 0.0
      %2075 = vmatpush1.msra.mxu0 0.0
      %2076 = vmatprep.subr.mxu0 0.0
      %2077 = vmatpush1.msra.mxu0 0.0
      %2078 = vmatprep.subr.mxu0 0.0
      %2079 = vmatpush1.msra.mxu0 0.0
      %2080 = vmatprep.subr.mxu0 0.0
      %2081 = vmatpush1.msra.mxu0 0.0
      %2082 = vmatprep.subr.mxu0 0.0
      %2083 = vmatpush1.msra.mxu0 0.0
      %2084 = vmatprep.subr.mxu0 0.0
      %2085 = vmatpush1.msra.mxu0 0.0
      %2086 = vmatprep.subr.mxu0 0.0
      %2087 = vmatpush1.msra.mxu0 0.0
      %2088 = vmatprep.subr.mxu0 0.0
      %2089 = vmatpush1.msra.mxu0 0.0
      %2090 = vmatprep.subr.mxu0 0.0
      %2091 = vmatpush1.msra.mxu0 0.0
      %2092 = vmatprep.subr.mxu0 0.0
      %2093 = vmatpush1.msra.mxu0 0.0
      %2094 = vmatprep.subr.mxu0 0.0
      %2095 = vmatpush1.msra.mxu0 0.0
      %2096 = vmatprep.subr.mxu0 0.0
      %2097 = vmatpush1.msra.mxu0 0.0
      %2098 = vmatprep.subr.mxu0 0.0
      %2099 = vmatpush1.msra.mxu0 0.0
      %2100 = vmatprep.subr.mxu0 0.0
      %2101 = vmatpush1.msra.mxu0 0.0
      %2102 = vmatprep.subr.mxu0 0.0
      %2103 = vmatpush1.msra.mxu0 0.0
      %2104 = vmatprep.subr.mxu0 0.0
      %2105 = vmatpush1.msra.mxu0 0.0
      %2106 = vmatprep.subr.mxu0 0.0
      %2107 = vmatpush1.msra.mxu0 0.0
      %2108 = vmatprep.subr.mxu0 0.0
      %2109 = vmatpush1.msra.mxu0 0.0
      %2110 = vmatprep.subr.mxu0 0.0
      %2111 = vmatpush1.msra.mxu0 0.0
      %2112 = vmatprep.subr.mxu0 0.0
      %2113 = vmatpush1.msra.mxu0 0.0
      %2114 = vmatprep.subr.mxu0 0.0
      %2115 = vmatpush1.msra.mxu0 0.0
      %2116 = vmatprep.subr.mxu0 0.0
      %2117 = vmatpush1.msra.mxu0 0.0
      %2118 = vmatprep.mubr.f32.mxu0 0.0
      %2119 = vmatmul.mubr.f32.gmra.mrb[0].mxu0 %v2052
      %v2120 = vpop.f32.mrb[0].mxu0
      %v2121 = vadd.f32 %v414, %v2120
      %v2122 = vpop.f32.mrb[0].mxu0
      %2123 = vdwg.mxu0
      %2125 = vrot.lane.b32.xlu0 %v1951, 116
      %v2126 = vpop.permute.xlu0 %2125
      %v2127 = vsel %vm490, %v2126, 0
      %2129 = vmatprep.subr.mxu0 0.0
      %2130 = vmatpush1.msra.mxu0 %v495
      %2131 = vmatprep.subr.mxu0 0.0
      %2132 = vmatpush1.msra.mxu0 0.0
      %2133 = vmatprep.subr.mxu0 0.0
      %2134 = vmatpush1.msra.mxu0 0.0
      %2135 = vmatprep.subr.mxu0 0.0
      %2136 = vmatpush1.msra.mxu0 0.0
      %2137 = vmatprep.subr.mxu0 0.0
      %2138 = vmatpush1.msra.mxu0 0.0
      %2139 = vmatprep.subr.mxu0 0.0
      %2140 = vmatpush1.msra.mxu0 0.0
      %2141 = vmatprep.subr.mxu0 0.0
      %2142 = vmatpush1.msra.mxu0 0.0
      %2143 = vmatprep.subr.mxu0 0.0
      %2144 = vmatpush1.msra.mxu0 0.0
      %2145 = vmatprep.subr.mxu0 0.0
      %2146 = vmatpush1.msra.mxu0 0.0
      %2147 = vmatprep.subr.mxu0 0.0
      %2148 = vmatpush1.msra.mxu0 0.0
      %2149 = vmatprep.subr.mxu0 0.0
      %2150 = vmatpush1.msra.mxu0 0.0
      %2151 = vmatprep.subr.mxu0 0.0
      %2152 = vmatpush1.msra.mxu0 0.0
      %2153 = vmatprep.subr.mxu0 0.0
      %2154 = vmatpush1.msra.mxu0 0.0
      %2155 = vmatprep.subr.mxu0 0.0
      %2156 = vmatpush1.msra.mxu0 0.0
      %2157 = vmatprep.subr.mxu0 0.0
      %2158 = vmatpush1.msra.mxu0 0.0
      %2159 = vmatprep.subr.mxu0 0.0
      %2160 = vmatpush1.msra.mxu0 0.0
      %2161 = vmatprep.subr.mxu0 0.0
      %2162 = vmatpush1.msra.mxu0 0.0
      %2163 = vmatprep.subr.mxu0 0.0
      %2164 = vmatpush1.msra.mxu0 0.0
      %2165 = vmatprep.subr.mxu0 0.0
      %2166 = vmatpush1.msra.mxu0 0.0
      %2167 = vmatprep.subr.mxu0 0.0
      %2168 = vmatpush1.msra.mxu0 0.0
      %2169 = vmatprep.subr.mxu0 0.0
      %2170 = vmatpush1.msra.mxu0 0.0
      %2171 = vmatprep.subr.mxu0 0.0
      %2172 = vmatpush1.msra.mxu0 0.0
      %2173 = vmatprep.subr.mxu0 0.0
      %2174 = vmatpush1.msra.mxu0 0.0
      %2175 = vmatprep.subr.mxu0 0.0
      %2176 = vmatpush1.msra.mxu0 0.0
      %2177 = vmatprep.subr.mxu0 0.0
      %2178 = vmatpush1.msra.mxu0 0.0
      %2179 = vmatprep.subr.mxu0 0.0
      %2180 = vmatpush1.msra.mxu0 0.0
      %2181 = vmatprep.subr.mxu0 0.0
      %2182 = vmatpush1.msra.mxu0 0.0
      %2183 = vmatprep.subr.mxu0 0.0
      %2184 = vmatpush1.msra.mxu0 0.0
      %2185 = vmatprep.subr.mxu0 0.0
      %2186 = vmatpush1.msra.mxu0 0.0
      %2187 = vmatprep.subr.mxu0 0.0
      %2188 = vmatpush1.msra.mxu0 0.0
      %2189 = vmatprep.subr.mxu0 0.0
      %2190 = vmatpush1.msra.mxu0 0.0
      %2191 = vmatprep.subr.mxu0 0.0
      %2192 = vmatpush1.msra.mxu0 0.0
      %2193 = vmatprep.mubr.f32.mxu0 0.0
      %2194 = vmatmul.mubr.f32.gmra.mrb[0].mxu0 %v2127
      %v2195 = vpop.f32.mrb[0].mxu0
      %v2196 = vadd.f32 0.0, %v2195
      %v2197 = vpop.f32.mrb[0].mxu0
      %2198 = vdwg.mxu0
      %v2199 = vadd.f32 %v2121, %v2196
      %v2200 = vxor.u32 %v2199, 2147483648
      %v2201 = vmul.f32 %v2200, 1.442695
      %v2202 = vpow.pop %v2201
      %v2203 = vadd.f32 %v2202, 1.0
      %v2204 = vrcp.pop %v2203
      %v2205 = vmul.f32 1.0, %v2204
      %v2206 = vtanh.pop %v2199
      %v2207 = vmul.f32 %v2205, %v1945
      %2209 = vrot.lane.b32.xlu0 %v2206, 120
      %v2210 = vpop.permute.xlu0 %2209
      %v2212 = vmul.f32 %v2205, %v2210
      %2214 = vrot.lane.b32.xlu0 %v2212, 4
      %v2215 = vpop.permute.xlu0 %2214
      %v2217 = vadd.f32 %v2207, %v2215
      %v2218 = vtanh.pop %v2217
      %2220 = vrot.lane.b32.xlu0 %v2218, 8
      %v2221 = vpop.permute.xlu0 %2220
      %v2223 = vmul.f32 %v2205, %v2221
      %s2224 = scalar_lea.vmem [#allocation2], 56
      %v2225 = vld [vmem:[%s2224] sm:$0xff]
      %2226 = vmatprep.subr.mxu0 0.0
      %2227 = vmatpush1.msra.mxu0 %v178
      %2228 = vmatprep.subr.mxu0 0.0
      %2229 = vmatpush1.msra.mxu0 0.0
      %2230 = vmatprep.subr.mxu0 0.0
      %2231 = vmatpush1.msra.mxu0 0.0
      %2232 = vmatprep.subr.mxu0 0.0
      %2233 = vmatpush1.msra.mxu0 0.0
      %2234 = vmatprep.subr.mxu0 0.0
      %2235 = vmatpush1.msra.mxu0 0.0
      %2236 = vmatprep.subr.mxu0 0.0
      %2237 = vmatpush1.msra.mxu0 0.0
      %2238 = vmatprep.subr.mxu0 0.0
      %2239 = vmatpush1.msra.mxu0 0.0
      %2240 = vmatprep.subr.mxu0 0.0
      %2241 = vmatpush1.msra.mxu0 0.0
      %2242 = vmatprep.subr.mxu0 0.0
      %2243 = vmatpush1.msra.mxu0 0.0
      %2244 = vmatprep.subr.mxu0 0.0
      %2245 = vmatpush1.msra.mxu0 0.0
      %2246 = vmatprep.subr.mxu0 0.0
      %2247 = vmatpush1.msra.mxu0 0.0
      %2248 = vmatprep.subr.mxu0 0.0
      %2249 = vmatpush1.msra.mxu0 0.0
      %2250 = vmatprep.subr.mxu0 0.0
      %2251 = vmatpush1.msra.mxu0 0.0
      %2252 = vmatprep.subr.mxu0 0.0
      %2253 = vmatpush1.msra.mxu0 0.0
      %2254 = vmatprep.subr.mxu0 0.0
      %2255 = vmatpush1.msra.mxu0 0.0
      %2256 = vmatprep.subr.mxu0 0.0
      %2257 = vmatpush1.msra.mxu0 0.0
      %2258 = vmatprep.subr.mxu0 0.0
      %2259 = vmatpush1.msra.mxu0 0.0
      %2260 = vmatprep.subr.mxu0 0.0
      %2261 = vmatpush1.msra.mxu0 0.0
      %2262 = vmatprep.subr.mxu0 0.0
      %2263 = vmatpush1.msra.mxu0 0.0
      %2264 = vmatprep.subr.mxu0 0.0
      %2265 = vmatpush1.msra.mxu0 0.0
      %2266 = vmatprep.subr.mxu0 0.0
      %2267 = vmatpush1.msra.mxu0 0.0
      %2268 = vmatprep.subr.mxu0 0.0
      %2269 = vmatpush1.msra.mxu0 0.0
      %2270 = vmatprep.subr.mxu0 0.0
      %2271 = vmatpush1.msra.mxu0 0.0
      %2272 = vmatprep.subr.mxu0 0.0
      %2273 = vmatpush1.msra.mxu0 0.0
      %2274 = vmatprep.subr.mxu0 0.0
      %2275 = vmatpush1.msra.mxu0 0.0
      %2276 = vmatprep.subr.mxu0 0.0
      %2277 = vmatpush1.msra.mxu0 0.0
      %2278 = vmatprep.subr.mxu0 0.0
      %2279 = vmatpush1.msra.mxu0 0.0
      %2280 = vmatprep.subr.mxu0 0.0
      %2281 = vmatpush1.msra.mxu0 0.0
      %2282 = vmatprep.subr.mxu0 0.0
      %2283 = vmatpush1.msra.mxu0 0.0
      %2284 = vmatprep.subr.mxu0 0.0
      %2285 = vmatpush1.msra.mxu0 0.0
      %2286 = vmatprep.subr.mxu0 0.0
      %2287 = vmatpush1.msra.mxu0 0.0
      %2288 = vmatprep.subr.mxu0 0.0
      %2289 = vmatpush1.msra.mxu0 0.0
      %2290 = vmatprep.mubr.f32.mxu0 0.0
      %2291 = vmatmul.mubr.f32.gmra.mrb[0].mxu0 %v2052
      %v2292 = vpop.f32.mrb[0].mxu0
      %v2293 = vadd.f32 0.0, %v2292
      %v2294 = vpop.f32.mrb[0].mxu0
      %2295 = vdwg.mxu0
      %v2296 = vadd.f32 %v2225, %v2293
      %v2297 = vxor.u32 %v2296, 2147483648
      %v2298 = vmul.f32 %v2297, 1.442695
      %v2299 = vpow.pop %v2298
      %v2300 = vadd.f32 %v2299, 1.0
      %v2301 = vrcp.pop %v2300
      %v2302 = vmul.f32 1.0, %v2301
      %v2303 = vtanh.pop %v2296
      %v2304 = vmul.f32 %v2302, %v2042
      %2306 = vrot.lane.b32.xlu0 %v2303, 112
      %v2307 = vpop.permute.xlu0 %2306
      %v2309 = vmul.f32 %v2302, %v2307
      %2311 = vrot.lane.b32.xlu0 %v2309, 8
      %v2312 = vpop.permute.xlu0 %2311
      %v2314 = vadd.f32 %v2304, %v2312
      %v2315 = vtanh.pop %v2314
      %2317 = vrot.lane.b32.xlu0 %v2315, 16
      %v2318 = vpop.permute.xlu0 %2317
      %v2320 = vmul.f32 %v2302, %v2318
      %2322 = vrot.lane.b32.xlu0 %v2320, 104
      %v2323 = vpop.permute.xlu0 %2322
      %v2324 = vsel %vm312, %v2323, 0
      %2326 = vmatprep.subr.mxu0 0.0
      %2327 = vmatpush1.msra.mxu0 %v180
      %2328 = vmatprep.subr.mxu0 0.0
      %2329 = vmatpush1.msra.mxu0 0.0
      %2330 = vmatprep.subr.mxu0 0.0
      %2331 = vmatpush1.msra.mxu0 0.0
      %2332 = vmatprep.subr.mxu0 0.0
      %2333 = vmatpush1.msra.mxu0 0.0
      %2334 = vmatprep.subr.mxu0 0.0
      %2335 = vmatpush1.msra.mxu0 0.0
      %2336 = vmatprep.subr.mxu0 0.0
      %2337 = vmatpush1.msra.mxu0 0.0
      %2338 = vmatprep.subr.mxu0 0.0
      %2339 = vmatpush1.msra.mxu0 0.0
      %2340 = vmatprep.subr.mxu0 0.0
      %2341 = vmatpush1.msra.mxu0 0.0
      %2342 = vmatprep.subr.mxu0 0.0
      %2343 = vmatpush1.msra.mxu0 0.0
      %2344 = vmatprep.subr.mxu0 0.0
      %2345 = vmatpush1.msra.mxu0 0.0
      %2346 = vmatprep.subr.mxu0 0.0
      %2347 = vmatpush1.msra.mxu0 0.0
      %2348 = vmatprep.subr.mxu0 0.0
      %2349 = vmatpush1.msra.mxu0 0.0
      %2350 = vmatprep.subr.mxu0 0.0
      %2351 = vmatpush1.msra.mxu0 0.0
      %2352 = vmatprep.subr.mxu0 0.0
      %2353 = vmatpush1.msra.mxu0 0.0
      %2354 = vmatprep.subr.mxu0 0.0
      %2355 = vmatpush1.msra.mxu0 0.0
      %2356 = vmatprep.subr.mxu0 0.0
      %2357 = vmatpush1.msra.mxu0 0.0
      %2358 = vmatprep.subr.mxu0 0.0
      %2359 = vmatpush1.msra.mxu0 0.0
      %2360 = vmatprep.subr.mxu0 0.0
      %2361 = vmatpush1.msra.mxu0 0.0
      %2362 = vmatprep.subr.mxu0 0.0
      %2363 = vmatpush1.msra.mxu0 0.0
      %2364 = vmatprep.subr.mxu0 0.0
      %2365 = vmatpush1.msra.mxu0 0.0
      %2366 = vmatprep.subr.mxu0 0.0
      %2367 = vmatpush1.msra.mxu0 0.0
      %2368 = vmatprep.subr.mxu0 0.0
      %2369 = vmatpush1.msra.mxu0 0.0
      %2370 = vmatprep.subr.mxu0 0.0
      %2371 = vmatpush1.msra.mxu0 0.0
      %2372 = vmatprep.subr.mxu0 0.0
      %2373 = vmatpush1.msra.mxu0 0.0
      %2374 = vmatprep.subr.mxu0 0.0
      %2375 = vmatpush1.msra.mxu0 0.0
      %2376 = vmatprep.subr.mxu0 0.0
      %2377 = vmatpush1.msra.mxu0 0.0
      %2378 = vmatprep.subr.mxu0 0.0
      %2379 = vmatpush1.msra.mxu0 0.0
      %2380 = vmatprep.subr.mxu0 0.0
      %2381 = vmatpush1.msra.mxu0 0.0
      %2382 = vmatprep.subr.mxu0 0.0
      %2383 = vmatpush1.msra.mxu0 0.0
      %2384 = vmatprep.subr.mxu0 0.0
      %2385 = vmatpush1.msra.mxu0 0.0
      %2386 = vmatprep.subr.mxu0 0.0
      %2387 = vmatpush1.msra.mxu0 0.0
      %2388 = vmatprep.subr.mxu0 0.0
      %2389 = vmatpush1.msra.mxu0 0.0
      %2390 = vmatprep.mubr.f32.mxu0 0.0
      %2391 = vmatmul.mubr.f32.gmra.mrb[0].mxu0 %v2324
      %v2392 = vpop.f32.mrb[0].mxu0
      %v2393 = vadd.f32 %v414, %v2392
      %v2394 = vpop.f32.mrb[0].mxu0
      %2395 = vdwg.mxu0
      %2397 = vrot.lane.b32.xlu0 %v2223, 116
      %v2398 = vpop.permute.xlu0 %2397
      %v2399 = vsel %vm490, %v2398, 0
      %2401 = vmatprep.subr.mxu0 0.0
      %2402 = vmatpush1.msra.mxu0 %v495
      %2403 = vmatprep.subr.mxu0 0.0
      %2404 = vmatpush1.msra.mxu0 0.0
      %2405 = vmatprep.subr.mxu0 0.0
      %2406 = vmatpush1.msra.mxu0 0.0
      %2407 = vmatprep.subr.mxu0 0.0
      %2408 = vmatpush1.msra.mxu0 0.0
      %2409 = vmatprep.subr.mxu0 0.0
      %2410 = vmatpush1.msra.mxu0 0.0
      %2411 = vmatprep.subr.mxu0 0.0
      %2412 = vmatpush1.msra.mxu0 0.0
      %2413 = vmatprep.subr.mxu0 0.0
      %2414 = vmatpush1.msra.mxu0 0.0
      %2415 = vmatprep.subr.mxu0 0.0
      %2416 = vmatpush1.msra.mxu0 0.0
      %2417 = vmatprep.subr.mxu0 0.0
      %2418 = vmatpush1.msra.mxu0 0.0
      %2419 = vmatprep.subr.mxu0 0.0
      %2420 = vmatpush1.msra.mxu0 0.0
      %2421 = vmatprep.subr.mxu0 0.0
      %2422 = vmatpush1.msra.mxu0 0.0
      %2423 = vmatprep.subr.mxu0 0.0
      %2424 = vmatpush1.msra.mxu0 0.0
      %2425 = vmatprep.subr.mxu0 0.0
      %2426 = vmatpush1.msra.mxu0 0.0
      %2427 = vmatprep.subr.mxu0 0.0
      %2428 = vmatpush1.msra.mxu0 0.0
      %2429 = vmatprep.subr.mxu0 0.0
      %2430 = vmatpush1.msra.mxu0 0.0
      %2431 = vmatprep.subr.mxu0 0.0
      %2432 = vmatpush1.msra.mxu0 0.0
      %2433 = vmatprep.subr.mxu0 0.0
      %2434 = vmatpush1.msra.mxu0 0.0
      %2435 = vmatprep.subr.mxu0 0.0
      %2436 = vmatpush1.msra.mxu0 0.0
      %2437 = vmatprep.subr.mxu0 0.0
      %2438 = vmatpush1.msra.mxu0 0.0
      %2439 = vmatprep.subr.mxu0 0.0
      %2440 = vmatpush1.msra.mxu0 0.0
      %2441 = vmatprep.subr.mxu0 0.0
      %2442 = vmatpush1.msra.mxu0 0.0
      %2443 = vmatprep.subr.mxu0 0.0
      %2444 = vmatpush1.msra.mxu0 0.0
      %2445 = vmatprep.subr.mxu0 0.0
      %2446 = vmatpush1.msra.mxu0 0.0
      %2447 = vmatprep.subr.mxu0 0.0
      %2448 = vmatpush1.msra.mxu0 0.0
      %2449 = vmatprep.subr.mxu0 0.0
      %2450 = vmatpush1.msra.mxu0 0.0
      %2451 = vmatprep.subr.mxu0 0.0
      %2452 = vmatpush1.msra.mxu0 0.0
      %2453 = vmatprep.subr.mxu0 0.0
      %2454 = vmatpush1.msra.mxu0 0.0
      %2455 = vmatprep.subr.mxu0 0.0
      %2456 = vmatpush1.msra.mxu0 0.0
      %2457 = vmatprep.subr.mxu0 0.0
      %2458 = vmatpush1.msra.mxu0 0.0
      %2459 = vmatprep.subr.mxu0 0.0
      %2460 = vmatpush1.msra.mxu0 0.0
      %2461 = vmatprep.subr.mxu0 0.0
      %2462 = vmatpush1.msra.mxu0 0.0
      %2463 = vmatprep.subr.mxu0 0.0
      %2464 = vmatpush1.msra.mxu0 0.0
      %2465 = vmatprep.mubr.f32.mxu0 0.0
      %2466 = vmatmul.mubr.f32.gmra.mrb[0].mxu0 %v2399
      %v2467 = vpop.f32.mrb[0].mxu0
      %v2468 = vadd.f32 0.0, %v2467
      %v2469 = vpop.f32.mrb[0].mxu0
      %2470 = vdwg.mxu0
      %v2471 = vadd.f32 %v2393, %v2468
      %v2472 = vxor.u32 %v2471, 2147483648
      %v2473 = vmul.f32 %v2472, 1.442695
      %v2474 = vpow.pop %v2473
      %v2475 = vadd.f32 %v2474, 1.0
      %v2476 = vrcp.pop %v2475
      %v2477 = vmul.f32 1.0, %v2476
      %v2478 = vtanh.pop %v2471
      %v2479 = vmul.f32 %v2477, %v2217
      %2481 = vrot.lane.b32.xlu0 %v2478, 120
      %v2482 = vpop.permute.xlu0 %2481
      %v2484 = vmul.f32 %v2477, %v2482
      %2486 = vrot.lane.b32.xlu0 %v2484, 4
      %v2487 = vpop.permute.xlu0 %2486
      %v2489 = vadd.f32 %v2479, %v2487
      %v2490 = vtanh.pop %v2489
      %2492 = vrot.lane.b32.xlu0 %v2490, 8
      %v2493 = vpop.permute.xlu0 %2492
      %v2495 = vmul.f32 %v2477, %v2493
      %2497 = vrot.lane.b32.xlu0 %v2495, 116
      %v2498 = vpop.permute.xlu0 %2497
      %2500 = vst.msk [vmem:[%s176] sm:$0xff] %vm490, %v2498
      %v2501 = vlaneseq
      %v2502 = vshrl.u32 %v2501, 7
      %v2503 = vsub.s32 0, %v2502
      %v2504 = vrot.slane %v185, %v2503
      %v2505 = vsel %vm490, %v2498, 0
      %v2508 = vsel %vm493, %v183, 0
      %2510 = vmatprep.subr.mxu0 0.0
      %2511 = vmatpush1.msra.mxu0 %v2508
      %2512 = vmatprep.subr.mxu0 0.0
      %2513 = vmatpush1.msra.mxu0 0.0
      %2514 = vmatprep.subr.mxu0 0.0
      %2515 = vmatpush1.msra.mxu0 0.0
      %2516 = vmatprep.subr.mxu0 0.0
      %2517 = vmatpush1.msra.mxu0 0.0
      %2518 = vmatprep.subr.mxu0 0.0
      %2519 = vmatpush1.msra.mxu0 0.0
      %2520 = vmatprep.subr.mxu0 0.0
      %2521 = vmatpush1.msra.mxu0 0.0
      %2522 = vmatprep.subr.mxu0 0.0
      %2523 = vmatpush1.msra.mxu0 0.0
      %2524 = vmatprep.subr.mxu0 0.0
      %2525 = vmatpush1.msra.mxu0 0.0
      %2526 = vmatprep.subr.mxu0 0.0
      %2527 = vmatpush1.msra.mxu0 0.0
      %2528 = vmatprep.subr.mxu0 0.0
      %2529 = vmatpush1.msra.mxu0 0.0
      %2530 = vmatprep.subr.mxu0 0.0
      %2531 = vmatpush1.msra.mxu0 0.0
      %2532 = vmatprep.subr.mxu0 0.0
      %2533 = vmatpush1.msra.mxu0 0.0
      %2534 = vmatprep.subr.mxu0 0.0
      %2535 = vmatpush1.msra.mxu0 0.0
      %2536 = vmatprep.subr.mxu0 0.0
      %2537 = vmatpush1.msra.mxu0 0.0
      %2538 = vmatprep.subr.mxu0 0.0
      %2539 = vmatpush1.msra.mxu0 0.0
      %2540 = vmatprep.subr.mxu0 0.0
      %2541 = vmatpush1.msra.mxu0 0.0
      %2542 = vmatprep.subr.mxu0 0.0
      %2543 = vmatpush1.msra.mxu0 0.0
      %2544 = vmatprep.subr.mxu0 0.0
      %2545 = vmatpush1.msra.mxu0 0.0
      %2546 = vmatprep.subr.mxu0 0.0
      %2547 = vmatpush1.msra.mxu0 0.0
      %2548 = vmatprep.subr.mxu0 0.0
      %2549 = vmatpush1.msra.mxu0 0.0
      %2550 = vmatprep.subr.mxu0 0.0
      %2551 = vmatpush1.msra.mxu0 0.0
      %2552 = vmatprep.subr.mxu0 0.0
      %2553 = vmatpush1.msra.mxu0 0.0
      %2554 = vmatprep.subr.mxu0 0.0
      %2555 = vmatpush1.msra.mxu0 0.0
      %2556 = vmatprep.subr.mxu0 0.0
      %2557 = vmatpush1.msra.mxu0 0.0
      %2558 = vmatprep.subr.mxu0 0.0
      %2559 = vmatpush1.msra.mxu0 0.0
      %2560 = vmatprep.subr.mxu0 0.0
      %2561 = vmatpush1.msra.mxu0 0.0
      %2562 = vmatprep.subr.mxu0 0.0
      %2563 = vmatpush1.msra.mxu0 0.0
      %2564 = vmatprep.subr.mxu0 0.0
      %2565 = vmatpush1.msra.mxu0 0.0
      %2566 = vmatprep.subr.mxu0 0.0
      %2567 = vmatpush1.msra.mxu0 0.0
      %2568 = vmatprep.subr.mxu0 0.0
      %2569 = vmatpush1.msra.mxu0 0.0
      %2570 = vmatprep.subr.mxu0 0.0
      %2571 = vmatpush1.msra.mxu0 0.0
      %2572 = vmatprep.subr.mxu0 0.0
      %2573 = vmatpush1.msra.mxu0 0.0
      %2574 = vmatprep.mubr.f32.mxu0 0.0
      %2575 = vmatmul.mubr.f32.gmra.mrb[0].mxu0 %v2505
      %v2576 = vpop.f32.mrb[0].mxu0
      %v2577 = vadd.f32 %v2504, %v2576
      %v2578 = vpop.f32.mrb[0].mxu0
      %2579 = vdwg.mxu0
      %v2581 = vsel %vm493, %v184, 0
      %2583 = vmatprep.subr.mxu0 0.0
      %2584 = vmatpush1.msra.mxu0 %v2581
      %2585 = vmatprep.subr.mxu0 0.0
      %2586 = vmatpush1.msra.mxu0 0.0
      %2587 = vmatprep.subr.mxu0 0.0
      %2588 = vmatpush1.msra.mxu0 0.0
      %2589 = vmatprep.subr.mxu0 0.0
      %2590 = vmatpush1.msra.mxu0 0.0
      %2591 = vmatprep.subr.mxu0 0.0
      %2592 = vmatpush1.msra.mxu0 0.0
      %2593 = vmatprep.subr.mxu0 0.0
      %2594 = vmatpush1.msra.mxu0 0.0
      %2595 = vmatprep.subr.mxu0 0.0
      %2596 = vmatpush1.msra.mxu0 0.0
      %2597 = vmatprep.subr.mxu0 0.0
      %2598 = vmatpush1.msra.mxu0 0.0
      %2599 = vmatprep.subr.mxu0 0.0
      %2600 = vmatpush1.msra.mxu0 0.0
      %2601 = vmatprep.subr.mxu0 0.0
      %2602 = vmatpush1.msra.mxu0 0.0
      %2603 = vmatprep.subr.mxu0 0.0
      %2604 = vmatpush1.msra.mxu0 0.0
      %2605 = vmatprep.subr.mxu0 0.0
      %2606 = vmatpush1.msra.mxu0 0.0
      %2607 = vmatprep.subr.mxu0 0.0
      %2608 = vmatpush1.msra.mxu0 0.0
      %2609 = vmatprep.subr.mxu0 0.0
      %2610 = vmatpush1.msra.mxu0 0.0
      %2611 = vmatprep.subr.mxu0 0.0
      %2612 = vmatpush1.msra.mxu0 0.0
      %2613 = vmatprep.subr.mxu0 0.0
      %2614 = vmatpush1.msra.mxu0 0.0
      %2615 = vmatprep.subr.mxu0 0.0
      %2616 = vmatpush1.msra.mxu0 0.0
      %2617 = vmatprep.subr.mxu0 0.0
      %2618 = vmatpush1.msra.mxu0 0.0
      %2619 = vmatprep.subr.mxu0 0.0
      %2620 = vmatpush1.msra.mxu0 0.0
      %2621 = vmatprep.subr.mxu0 0.0
      %2622 = vmatpush1.msra.mxu0 0.0
      %2623 = vmatprep.subr.mxu0 0.0
      %2624 = vmatpush1.msra.mxu0 0.0
      %2625 = vmatprep.subr.mxu0 0.0
      %2626 = vmatpush1.msra.mxu0 0.0
      %2627 = vmatprep.subr.mxu0 0.0
      %2628 = vmatpush1.msra.mxu0 0.0
      %2629 = vmatprep.subr.mxu0 0.0
      %2630 = vmatpush1.msra.mxu0 0.0
      %2631 = vmatprep.subr.mxu0 0.0
      %2632 = vmatpush1.msra.mxu0 0.0
      %2633 = vmatprep.subr.mxu0 0.0
      %2634 = vmatpush1.msra.mxu0 0.0
      %2635 = vmatprep.subr.mxu0 0.0
      %2636 = vmatpush1.msra.mxu0 0.0
      %2637 = vmatprep.subr.mxu0 0.0
      %2638 = vmatpush1.msra.mxu0 0.0
      %2639 = vmatprep.subr.mxu0 0.0
      %2640 = vmatpush1.msra.mxu0 0.0
      %2641 = vmatprep.subr.mxu0 0.0
      %2642 = vmatpush1.msra.mxu0 0.0
      %2643 = vmatprep.subr.mxu0 0.0
      %2644 = vmatpush1.msra.mxu0 0.0
      %2645 = vmatprep.subr.mxu0 0.0
      %2646 = vmatpush1.msra.mxu0 0.0
      %2647 = vmatprep.mubr.f32.mxu0 0.0
      %2648 = vmatmul.mubr.f32.gmra.mrb[0].mxu0 %v491
      %v2649 = vpop.f32.mrb[0].mxu0
      %v2650 = vadd.f32 0.0, %v2649
      %v2651 = vpop.f32.mrb[0].mxu0
      %2652 = vdwg.mxu0
      %v2653 = vadd.f32 %v2577, %v2650
      %v2654 = vxor.u32 %v2653, 2147483648
      %v2655 = vmul.f32 %v2654, 1.442695
      %v2656 = vpow.pop %v2655
      %v2657 = vadd.f32 %v2656, 1.0
      %v2658 = vrcp.pop %v2657
      %v2659 = vmul.f32 1.0, %v2658
      %v2660 = vtanh.pop %v2653
      %v2661 = vmul.f32 %v2659, 0.0
      %2663 = vrot.lane.b32.xlu0 %v2660, 120
      %v2664 = vpop.permute.xlu0 %2663
      %v2666 = vmul.f32 %v2659, %v2664
      %2668 = vrot.lane.b32.xlu0 %v2666, 4
      %v2669 = vpop.permute.xlu0 %2668
      %v2671 = vadd.f32 %v2661, %v2669
      %v2672 = vtanh.pop %v2671
      %2674 = vrot.lane.b32.xlu0 %v2672, 8
      %v2675 = vpop.permute.xlu0 %2674
      %v2677 = vmul.f32 %v2659, %v2675
      %v2678 = vlaneseq
      %v2679 = vshrl.u32 %v2678, 7
      %v2680 = vsub.s32 0, %v2679
      %v2681 = vrot.slane %v188, %v2680
      %2683 = vrot.lane.b32.xlu0 %v2677, 116
      %v2684 = vpop.permute.xlu0 %2683
      %v2685 = vsel %vm490, %v2684, 0
      %v2688 = vsel %vm493, %v186, 0
      %2690 = vmatprep.subr.mxu0 0.0
      %2691 = vmatpush1.msra.mxu0 %v2688
      %2692 = vmatprep.subr.mxu0 0.0
      %2693 = vmatpush1.msra.mxu0 0.0
      %2694 = vmatprep.subr.mxu0 0.0
      %2695 = vmatpush1.msra.mxu0 0.0
      %2696 = vmatprep.subr.mxu0 0.0
      %2697 = vmatpush1.msra.mxu0 0.0
      %2698 = vmatprep.subr.mxu0 0.0
      %2699 = vmatpush1.msra.mxu0 0.0
      %2700 = vmatprep.subr.mxu0 0.0
      %2701 = vmatpush1.msra.mxu0 0.0
      %2702 = vmatprep.subr.mxu0 0.0
      %2703 = vmatpush1.msra.mxu0 0.0
      %2704 = vmatprep.subr.mxu0 0.0
      %2705 = vmatpush1.msra.mxu0 0.0
      %2706 = vmatprep.subr.mxu0 0.0
      %2707 = vmatpush1.msra.mxu0 0.0
      %2708 = vmatprep.subr.mxu0 0.0
      %2709 = vmatpush1.msra.mxu0 0.0
      %2710 = vmatprep.subr.mxu0 0.0
      %2711 = vmatpush1.msra.mxu0 0.0
      %2712 = vmatprep.subr.mxu0 0.0
      %2713 = vmatpush1.msra.mxu0 0.0
      %2714 = vmatprep.subr.mxu0 0.0
      %2715 = vmatpush1.msra.mxu0 0.0
      %2716 = vmatprep.subr.mxu0 0.0
      %2717 = vmatpush1.msra.mxu0 0.0
      %2718 = vmatprep.subr.mxu0 0.0
      %2719 = vmatpush1.msra.mxu0 0.0
      %2720 = vmatprep.subr.mxu0 0.0
      %2721 = vmatpush1.msra.mxu0 0.0
      %2722 = vmatprep.subr.mxu0 0.0
      %2723 = vmatpush1.msra.mxu0 0.0
      %2724 = vmatprep.subr.mxu0 0.0
      %2725 = vmatpush1.msra.mxu0 0.0
      %2726 = vmatprep.subr.mxu0 0.0
      %2727 = vmatpush1.msra.mxu0 0.0
      %2728 = vmatprep.subr.mxu0 0.0
      %2729 = vmatpush1.msra.mxu0 0.0
      %2730 = vmatprep.subr.mxu0 0.0
      %2731 = vmatpush1.msra.mxu0 0.0
      %2732 = vmatprep.subr.mxu0 0.0
      %2733 = vmatpush1.msra.mxu0 0.0
      %2734 = vmatprep.subr.mxu0 0.0
      %2735 = vmatpush1.msra.mxu0 0.0
      %2736 = vmatprep.subr.mxu0 0.0
      %2737 = vmatpush1.msra.mxu0 0.0
      %2738 = vmatprep.subr.mxu0 0.0
      %2739 = vmatpush1.msra.mxu0 0.0
      %2740 = vmatprep.subr.mxu0 0.0
      %2741 = vmatpush1.msra.mxu0 0.0
      %2742 = vmatprep.subr.mxu0 0.0
      %2743 = vmatpush1.msra.mxu0 0.0
      %2744 = vmatprep.subr.mxu0 0.0
      %2745 = vmatpush1.msra.mxu0 0.0
      %2746 = vmatprep.subr.mxu0 0.0
      %2747 = vmatpush1.msra.mxu0 0.0
      %2748 = vmatprep.subr.mxu0 0.0
      %2749 = vmatpush1.msra.mxu0 0.0
      %2750 = vmatprep.subr.mxu0 0.0
      %2751 = vmatpush1.msra.mxu0 0.0
      %2752 = vmatprep.subr.mxu0 0.0
      %2753 = vmatpush1.msra.mxu0 0.0
      %2754 = vmatprep.mubr.f32.mxu0 0.0
      %2755 = vmatmul.mubr.f32.gmra.mrb[0].mxu0 %v2685
      %v2756 = vpop.f32.mrb[0].mxu0
      %v2757 = vadd.f32 %v2681, %v2756
      %v2758 = vpop.f32.mrb[0].mxu0
      %2759 = vdwg.mxu0
      %2760 = vmatprep.subr.mxu0 0.0
      %2761 = vmatpush1.msra.mxu0 %v187
      %2762 = vmatprep.subr.mxu0 0.0
      %2763 = vmatpush1.msra.mxu0 0.0
      %2764 = vmatprep.subr.mxu0 0.0
      %2765 = vmatpush1.msra.mxu0 0.0
      %2766 = vmatprep.subr.mxu0 0.0
      %2767 = vmatpush1.msra.mxu0 0.0
      %2768 = vmatprep.subr.mxu0 0.0
      %2769 = vmatpush1.msra.mxu0 0.0
      %2770 = vmatprep.subr.mxu0 0.0
      %2771 = vmatpush1.msra.mxu0 0.0
      %2772 = vmatprep.subr.mxu0 0.0
      %2773 = vmatpush1.msra.mxu0 0.0
      %2774 = vmatprep.subr.mxu0 0.0
      %2775 = vmatpush1.msra.mxu0 0.0
      %2776 = vmatprep.subr.mxu0 0.0
      %2777 = vmatpush1.msra.mxu0 0.0
      %2778 = vmatprep.subr.mxu0 0.0
      %2779 = vmatpush1.msra.mxu0 0.0
      %2780 = vmatprep.subr.mxu0 0.0
      %2781 = vmatpush1.msra.mxu0 0.0
      %2782 = vmatprep.subr.mxu0 0.0
      %2783 = vmatpush1.msra.mxu0 0.0
      %2784 = vmatprep.subr.mxu0 0.0
      %2785 = vmatpush1.msra.mxu0 0.0
      %2786 = vmatprep.subr.mxu0 0.0
      %2787 = vmatpush1.msra.mxu0 0.0
      %2788 = vmatprep.subr.mxu0 0.0
      %2789 = vmatpush1.msra.mxu0 0.0
      %2790 = vmatprep.subr.mxu0 0.0
      %2791 = vmatpush1.msra.mxu0 0.0
      %2792 = vmatprep.subr.mxu0 0.0
      %2793 = vmatpush1.msra.mxu0 0.0
      %2794 = vmatprep.subr.mxu0 0.0
      %2795 = vmatpush1.msra.mxu0 0.0
      %2796 = vmatprep.subr.mxu0 0.0
      %2797 = vmatpush1.msra.mxu0 0.0
      %2798 = vmatprep.subr.mxu0 0.0
      %2799 = vmatpush1.msra.mxu0 0.0
      %2800 = vmatprep.subr.mxu0 0.0
      %2801 = vmatpush1.msra.mxu0 0.0
      %2802 = vmatprep.subr.mxu0 0.0
      %2803 = vmatpush1.msra.mxu0 0.0
      %2804 = vmatprep.subr.mxu0 0.0
      %2805 = vmatpush1.msra.mxu0 0.0
      %2806 = vmatprep.subr.mxu0 0.0
      %2807 = vmatpush1.msra.mxu0 0.0
      %2808 = vmatprep.subr.mxu0 0.0
      %2809 = vmatpush1.msra.mxu0 0.0
      %2810 = vmatprep.subr.mxu0 0.0
      %2811 = vmatpush1.msra.mxu0 0.0
      %2812 = vmatprep.subr.mxu0 0.0
      %2813 = vmatpush1.msra.mxu0 0.0
      %2814 = vmatprep.subr.mxu0 0.0
      %2815 = vmatpush1.msra.mxu0 0.0
      %2816 = vmatprep.subr.mxu0 0.0
      %2817 = vmatpush1.msra.mxu0 0.0
      %2818 = vmatprep.subr.mxu0 0.0
      %2819 = vmatpush1.msra.mxu0 0.0
      %2820 = vmatprep.subr.mxu0 0.0
      %2821 = vmatpush1.msra.mxu0 0.0
      %2822 = vmatprep.subr.mxu0 0.0
      %2823 = vmatpush1.msra.mxu0 0.0
      %2824 = vmatprep.mubr.f32.mxu0 0.0
      %2825 = vmatmul.mubr.f32.gmra.mrb[0].mxu0 %v314
      %v2826 = vpop.f32.mrb[0].mxu0
      %v2827 = vadd.f32 0.0, %v2826
      %v2828 = vpop.f32.mrb[0].mxu0
      %2829 = vdwg.mxu0
      %v2830 = vadd.f32 %v2757, %v2827
      %v2831 = vxor.u32 %v2830, 2147483648
      %v2832 = vmul.f32 %v2831, 1.442695
      %v2833 = vpow.pop %v2832
      %v2834 = vadd.f32 %v2833, 1.0
      %v2835 = vrcp.pop %v2834
      %v2836 = vmul.f32 1.0, %v2835
      %v2837 = vtanh.pop %v2830
      %v2838 = vmul.f32 %v2836, 0.0
      %2840 = vrot.lane.b32.xlu0 %v2837, 112
      %v2841 = vpop.permute.xlu0 %2840
      %v2843 = vmul.f32 %v2836, %v2841
      %2845 = vrot.lane.b32.xlu0 %v2843, 8
      %v2846 = vpop.permute.xlu0 %2845
      %v2848 = vadd.f32 %v2838, %v2846
      %v2849 = vtanh.pop %v2848
      %2851 = vrot.lane.b32.xlu0 %v2849, 16
      %v2852 = vpop.permute.xlu0 %2851
      %v2854 = vmul.f32 %v2836, %v2852
      %2856 = vrot.lane.b32.xlu0 %v2854, 104
      %v2857 = vpop.permute.xlu0 %2856
      %2859 = vst.msk [vmem:[#allocation3] sm:$0xff] %vm312, %v2857
      %2860 = vmatprep.subr.mxu0 0.0
      %2861 = vmatpush1.msra.mxu0 %v2581
      %2862 = vmatprep.subr.mxu0 0.0
      %2863 = vmatpush1.msra.mxu0 0.0
      %2864 = vmatprep.subr.mxu0 0.0
      %2865 = vmatpush1.msra.mxu0 0.0
      %2866 = vmatprep.subr.mxu0 0.0
      %2867 = vmatpush1.msra.mxu0 0.0
      %2868 = vmatprep.subr.mxu0 0.0
      %2869 = vmatpush1.msra.mxu0 0.0
      %2870 = vmatprep.subr.mxu0 0.0
      %2871 = vmatpush1.msra.mxu0 0.0
      %2872 = vmatprep.subr.mxu0 0.0
      %2873 = vmatpush1.msra.mxu0 0.0
      %2874 = vmatprep.subr.mxu0 0.0
      %2875 = vmatpush1.msra.mxu0 0.0
      %2876 = vmatprep.subr.mxu0 0.0
      %2877 = vmatpush1.msra.mxu0 0.0
      %2878 = vmatprep.subr.mxu0 0.0
      %2879 = vmatpush1.msra.mxu0 0.0
      %2880 = vmatprep.subr.mxu0 0.0
      %2881 = vmatpush1.msra.mxu0 0.0
      %2882 = vmatprep.subr.mxu0 0.0
      %2883 = vmatpush1.msra.mxu0 0.0
      %2884 = vmatprep.subr.mxu0 0.0
      %2885 = vmatpush1.msra.mxu0 0.0
      %2886 = vmatprep.subr.mxu0 0.0
      %2887 = vmatpush1.msra.mxu0 0.0
      %2888 = vmatprep.subr.mxu0 0.0
      %2889 = vmatpush1.msra.mxu0 0.0
      %2890 = vmatprep.subr.mxu0 0.0
      %2891 = vmatpush1.msra.mxu0 0.0
      %2892 = vmatprep.subr.mxu0 0.0
      %2893 = vmatpush1.msra.mxu0 0.0
      %2894 = vmatprep.subr.mxu0 0.0
      %2895 = vmatpush1.msra.mxu0 0.0
      %2896 = vmatprep.subr.mxu0 0.0
      %2897 = vmatpush1.msra.mxu0 0.0
      %2898 = vmatprep.subr.mxu0 0.0
      %2899 = vmatpush1.msra.mxu0 0.0
      %2900 = vmatprep.subr.mxu0 0.0
      %2901 = vmatpush1.msra.mxu0 0.0
      %2902 = vmatprep.subr.mxu0 0.0
      %2903 = vmatpush1.msra.mxu0 0.0
      %2904 = vmatprep.subr.mxu0 0.0
      %2905 = vmatpush1.msra.mxu0 0.0
      %2906 = vmatprep.subr.mxu0 0.0
      %2907 = vmatpush1.msra.mxu0 0.0
      %2908 = vmatprep.subr.mxu0 0.0
      %2909 = vmatpush1.msra.mxu0 0.0
      %2910 = vmatprep.subr.mxu0 0.0
      %2911 = vmatpush1.msra.mxu0 0.0
      %2912 = vmatprep.subr.mxu0 0.0
      %2913 = vmatpush1.msra.mxu0 0.0
      %2914 = vmatprep.subr.mxu0 0.0
      %2915 = vmatpush1.msra.mxu0 0.0
      %2916 = vmatprep.subr.mxu0 0.0
      %2917 = vmatpush1.msra.mxu0 0.0
      %2918 = vmatprep.subr.mxu0 0.0
      %2919 = vmatpush1.msra.mxu0 0.0
      %2920 = vmatprep.subr.mxu0 0.0
      %2921 = vmatpush1.msra.mxu0 0.0
      %2922 = vmatprep.subr.mxu0 0.0
      %2923 = vmatpush1.msra.mxu0 0.0
      %2924 = vmatprep.mubr.f32.mxu0 0.0
      %2925 = vmatmul.mubr.f32.gmra.mrb[0].mxu0 %v2685
      %v2926 = vpop.f32.mrb[0].mxu0
      %v2927 = vadd.f32 0.0, %v2926
      %v2928 = vpop.f32.mrb[0].mxu0
      %2929 = vdwg.mxu0
      %v2930 = vadd.f32 %v2577, %v2927
      %v2931 = vxor.u32 %v2930, 2147483648
      %v2932 = vmul.f32 %v2931, 1.442695
      %v2933 = vpow.pop %v2932
      %v2934 = vadd.f32 %v2933, 1.0
      %v2935 = vrcp.pop %v2934
      %v2936 = vmul.f32 1.0, %v2935
      %v2937 = vtanh.pop %v2930
      %v2938 = vmul.f32 %v2936, %v2671
      %2940 = vrot.lane.b32.xlu0 %v2937, 120
      %v2941 = vpop.permute.xlu0 %2940
      %v2943 = vmul.f32 %v2936, %v2941
      %2945 = vrot.lane.b32.xlu0 %v2943, 4
      %v2946 = vpop.permute.xlu0 %2945
      %v2948 = vadd.f32 %v2938, %v2946
      %v2949 = vtanh.pop %v2948
      %2951 = vrot.lane.b32.xlu0 %v2949, 8
      %v2952 = vpop.permute.xlu0 %2951
      %v2954 = vmul.f32 %v2936, %v2952
      %2956 = vrot.lane.b32.xlu0 %v2954, 116
      %v2957 = vpop.permute.xlu0 %2956
      %v2958 = vsel %vm490, %v2957, 0
      %2960 = vmatprep.subr.mxu0 0.0
      %2961 = vmatpush1.msra.mxu0 %v2688
      %2962 = vmatprep.subr.mxu0 0.0
      %2963 = vmatpush1.msra.mxu0 0.0
      %2964 = vmatprep.subr.mxu0 0.0
      %2965 = vmatpush1.msra.mxu0 0.0
      %2966 = vmatprep.subr.mxu0 0.0
      %2967 = vmatpush1.msra.mxu0 0.0
      %2968 = vmatprep.subr.mxu0 0.0
      %2969 = vmatpush1.msra.mxu0 0.0
      %2970 = vmatprep.subr.mxu0 0.0
      %2971 = vmatpush1.msra.mxu0 0.0
      %2972 = vmatprep.subr.mxu0 0.0
      %2973 = vmatpush1.msra.mxu0 0.0
      %2974 = vmatprep.subr.mxu0 0.0
      %2975 = vmatpush1.msra.mxu0 0.0
      %2976 = vmatprep.subr.mxu0 0.0
      %2977 = vmatpush1.msra.mxu0 0.0
      %2978 = vmatprep.subr.mxu0 0.0
      %2979 = vmatpush1.msra.mxu0 0.0
      %2980 = vmatprep.subr.mxu0 0.0
      %2981 = vmatpush1.msra.mxu0 0.0
      %2982 = vmatprep.subr.mxu0 0.0
      %2983 = vmatpush1.msra.mxu0 0.0
      %2984 = vmatprep.subr.mxu0 0.0
      %2985 = vmatpush1.msra.mxu0 0.0
      %2986 = vmatprep.subr.mxu0 0.0
      %2987 = vmatpush1.msra.mxu0 0.0
      %2988 = vmatprep.subr.mxu0 0.0
      %2989 = vmatpush1.msra.mxu0 0.0
      %2990 = vmatprep.subr.mxu0 0.0
      %2991 = vmatpush1.msra.mxu0 0.0
      %2992 = vmatprep.subr.mxu0 0.0
      %2993 = vmatpush1.msra.mxu0 0.0
      %2994 = vmatprep.subr.mxu0 0.0
      %2995 = vmatpush1.msra.mxu0 0.0
      %2996 = vmatprep.subr.mxu0 0.0
      %2997 = vmatpush1.msra.mxu0 0.0
      %2998 = vmatprep.subr.mxu0 0.0
      %2999 = vmatpush1.msra.mxu0 0.0
      %3000 = vmatprep.subr.mxu0 0.0
      %3001 = vmatpush1.msra.mxu0 0.0
      %3002 = vmatprep.subr.mxu0 0.0
      %3003 = vmatpush1.msra.mxu0 0.0
      %3004 = vmatprep.subr.mxu0 0.0
      %3005 = vmatpush1.msra.mxu0 0.0
      %3006 = vmatprep.subr.mxu0 0.0
      %3007 = vmatpush1.msra.mxu0 0.0
      %3008 = vmatprep.subr.mxu0 0.0
      %3009 = vmatpush1.msra.mxu0 0.0
      %3010 = vmatprep.subr.mxu0 0.0
      %3011 = vmatpush1.msra.mxu0 0.0
      %3012 = vmatprep.subr.mxu0 0.0
      %3013 = vmatpush1.msra.mxu0 0.0
      %3014 = vmatprep.subr.mxu0 0.0
      %3015 = vmatpush1.msra.mxu0 0.0
      %3016 = vmatprep.subr.mxu0 0.0
      %3017 = vmatpush1.msra.mxu0 0.0
      %3018 = vmatprep.subr.mxu0 0.0
      %3019 = vmatpush1.msra.mxu0 0.0
      %3020 = vmatprep.subr.mxu0 0.0
      %3021 = vmatpush1.msra.mxu0 0.0
      %3022 = vmatprep.subr.mxu0 0.0
      %3023 = vmatpush1.msra.mxu0 0.0
      %3024 = vmatprep.mubr.f32.mxu0 0.0
      %3025 = vmatmul.mubr.f32.gmra.mrb[0].mxu0 %v2958
      %v3026 = vpop.f32.mrb[0].mxu0
      %v3027 = vadd.f32 %v2681, %v3026
      %v3028 = vpop.f32.mrb[0].mxu0
      %3029 = vdwg.mxu0
      %v3030 = vsel %vm312, %v2857, 0
      %3032 = vmatprep.subr.mxu0 0.0
      %3033 = vmatpush1.msra.mxu0 %v187
      %3034 = vmatprep.subr.mxu0 0.0
      %3035 = vmatpush1.msra.mxu0 0.0
      %3036 = vmatprep.subr.mxu0 0.0
      %3037 = vmatpush1.msra.mxu0 0.0
      %3038 = vmatprep.subr.mxu0 0.0
      %3039 = vmatpush1.msra.mxu0 0.0
      %3040 = vmatprep.subr.mxu0 0.0
      %3041 = vmatpush1.msra.mxu0 0.0
      %3042 = vmatprep.subr.mxu0 0.0
      %3043 = vmatpush1.msra.mxu0 0.0
      %3044 = vmatprep.subr.mxu0 0.0
      %3045 = vmatpush1.msra.mxu0 0.0
      %3046 = vmatprep.subr.mxu0 0.0
      %3047 = vmatpush1.msra.mxu0 0.0
      %3048 = vmatprep.subr.mxu0 0.0
      %3049 = vmatpush1.msra.mxu0 0.0
      %3050 = vmatprep.subr.mxu0 0.0
      %3051 = vmatpush1.msra.mxu0 0.0
      %3052 = vmatprep.subr.mxu0 0.0
      %3053 = vmatpush1.msra.mxu0 0.0
      %3054 = vmatprep.subr.mxu0 0.0
      %3055 = vmatpush1.msra.mxu0 0.0
      %3056 = vmatprep.subr.mxu0 0.0
      %3057 = vmatpush1.msra.mxu0 0.0
      %3058 = vmatprep.subr.mxu0 0.0
      %3059 = vmatpush1.msra.mxu0 0.0
      %3060 = vmatprep.subr.mxu0 0.0
      %3061 = vmatpush1.msra.mxu0 0.0
      %3062 = vmatprep.subr.mxu0 0.0
      %3063 = vmatpush1.msra.mxu0 0.0
      %3064 = vmatprep.subr.mxu0 0.0
      %3065 = vmatpush1.msra.mxu0 0.0
      %3066 = vmatprep.subr.mxu0 0.0
      %3067 = vmatpush1.msra.mxu0 0.0
      %3068 = vmatprep.subr.mxu0 0.0
      %3069 = vmatpush1.msra.mxu0 0.0
      %3070 = vmatprep.subr.mxu0 0.0
      %3071 = vmatpush1.msra.mxu0 0.0
      %3072 = vmatprep.subr.mxu0 0.0
      %3073 = vmatpush1.msra.mxu0 0.0
      %3074 = vmatprep.subr.mxu0 0.0
      %3075 = vmatpush1.msra.mxu0 0.0
      %3076 = vmatprep.subr.mxu0 0.0
      %3077 = vmatpush1.msra.mxu0 0.0
      %3078 = vmatprep.subr.mxu0 0.0
      %3079 = vmatpush1.msra.mxu0 0.0
      %3080 = vmatprep.subr.mxu0 0.0
      %3081 = vmatpush1.msra.mxu0 0.0
      %3082 = vmatprep.subr.mxu0 0.0
      %3083 = vmatpush1.msra.mxu0 0.0
      %3084 = vmatprep.subr.mxu0 0.0
      %3085 = vmatpush1.msra.mxu0 0.0
      %3086 = vmatprep.subr.mxu0 0.0
      %3087 = vmatpush1.msra.mxu0 0.0
      %3088 = vmatprep.subr.mxu0 0.0
      %3089 = vmatpush1.msra.mxu0 0.0
      %3090 = vmatprep.subr.mxu0 0.0
      %3091 = vmatpush1.msra.mxu0 0.0
      %3092 = vmatprep.subr.mxu0 0.0
      %3093 = vmatpush1.msra.mxu0 0.0
      %3094 = vmatprep.subr.mxu0 0.0
      %3095 = vmatpush1.msra.mxu0 0.0
      %3096 = vmatprep.mubr.f32.mxu0 0.0
      %3097 = vmatmul.mubr.f32.gmra.mrb[0].mxu0 %v3030
      %v3098 = vpop.f32.mrb[0].mxu0
      %v3099 = vadd.f32 0.0, %v3098
      %v3100 = vpop.f32.mrb[0].mxu0
      %3101 = vdwg.mxu0
      %v3102 = vadd.f32 %v3027, %v3099
      %v3103 = vxor.u32 %v3102, 2147483648
      %v3104 = vmul.f32 %v3103, 1.442695
      %v3105 = vpow.pop %v3104
      %v3106 = vadd.f32 %v3105, 1.0
      %v3107 = vrcp.pop %v3106
      %v3108 = vmul.f32 1.0, %v3107
      %v3109 = vtanh.pop %v3102
      %v3110 = vmul.f32 %v3108, %v2848
      %3112 = vrot.lane.b32.xlu0 %v3109, 112
      %v3113 = vpop.permute.xlu0 %3112
      %v3115 = vmul.f32 %v3108, %v3113
      %3117 = vrot.lane.b32.xlu0 %v3115, 8
      %v3118 = vpop.permute.xlu0 %3117
      %v3120 = vadd.f32 %v3110, %v3118
      %v3121 = vtanh.pop %v3120
      %3123 = vrot.lane.b32.xlu0 %v3121, 16
      %v3124 = vpop.permute.xlu0 %3123
      %v3126 = vmul.f32 %v3108, %v3124
      %3128 = vrot.lane.b32.xlu0 %v3126, 104
      %v3129 = vpop.permute.xlu0 %3128
      %s3131 = scalar_lea.vmem [#allocation3], 8
      %3132 = vst.msk [vmem:[%s3131] sm:$0xff] %vm312, %v3129
      %3133 = vmatprep.subr.mxu0 0.0
      %3134 = vmatpush1.msra.mxu0 %v2581
      %3135 = vmatprep.subr.mxu0 0.0
      %3136 = vmatpush1.msra.mxu0 0.0
      %3137 = vmatprep.subr.mxu0 0.0
      %3138 = vmatpush1.msra.mxu0 0.0
      %3139 = vmatprep.subr.mxu0 0.0
      %3140 = vmatpush1.msra.mxu0 0.0
      %3141 = vmatprep.subr.mxu0 0.0
      %3142 = vmatpush1.msra.mxu0 0.0
      %3143 = vmatprep.subr.mxu0 0.0
      %3144 = vmatpush1.msra.mxu0 0.0
      %3145 = vmatprep.subr.mxu0 0.0
      %3146 = vmatpush1.msra.mxu0 0.0
      %3147 = vmatprep.subr.mxu0 0.0
      %3148 = vmatpush1.msra.mxu0 0.0
      %3149 = vmatprep.subr.mxu0 0.0
      %3150 = vmatpush1.msra.mxu0 0.0
      %3151 = vmatprep.subr.mxu0 0.0
      %3152 = vmatpush1.msra.mxu0 0.0
      %3153 = vmatprep.subr.mxu0 0.0
      %3154 = vmatpush1.msra.mxu0 0.0
      %3155 = vmatprep.subr.mxu0 0.0
      %3156 = vmatpush1.msra.mxu0 0.0
      %3157 = vmatprep.subr.mxu0 0.0
      %3158 = vmatpush1.msra.mxu0 0.0
      %3159 = vmatprep.subr.mxu0 0.0
      %3160 = vmatpush1.msra.mxu0 0.0
      %3161 = vmatprep.subr.mxu0 0.0
      %3162 = vmatpush1.msra.mxu0 0.0
      %3163 = vmatprep.subr.mxu0 0.0
      %3164 = vmatpush1.msra.mxu0 0.0
      %3165 = vmatprep.subr.mxu0 0.0
      %3166 = vmatpush1.msra.mxu0 0.0
      %3167 = vmatprep.subr.mxu0 0.0
      %3168 = vmatpush1.msra.mxu0 0.0
      %3169 = vmatprep.subr.mxu0 0.0
      %3170 = vmatpush1.msra.mxu0 0.0
      %3171 = vmatprep.subr.mxu0 0.0
      %3172 = vmatpush1.msra.mxu0 0.0
      %3173 = vmatprep.subr.mxu0 0.0
      %3174 = vmatpush1.msra.mxu0 0.0
      %3175 = vmatprep.subr.mxu0 0.0
      %3176 = vmatpush1.msra.mxu0 0.0
      %3177 = vmatprep.subr.mxu0 0.0
      %3178 = vmatpush1.msra.mxu0 0.0
      %3179 = vmatprep.subr.mxu0 0.0
      %3180 = vmatpush1.msra.mxu0 0.0
      %3181 = vmatprep.subr.mxu0 0.0
      %3182 = vmatpush1.msra.mxu0 0.0
      %3183 = vmatprep.subr.mxu0 0.0
      %3184 = vmatpush1.msra.mxu0 0.0
      %3185 = vmatprep.subr.mxu0 0.0
      %3186 = vmatpush1.msra.mxu0 0.0
      %3187 = vmatprep.subr.mxu0 0.0
      %3188 = vmatpush1.msra.mxu0 0.0
      %3189 = vmatprep.subr.mxu0 0.0
      %3190 = vmatpush1.msra.mxu0 0.0
      %3191 = vmatprep.subr.mxu0 0.0
      %3192 = vmatpush1.msra.mxu0 0.0
      %3193 = vmatprep.subr.mxu0 0.0
      %3194 = vmatpush1.msra.mxu0 0.0
      %3195 = vmatprep.subr.mxu0 0.0
      %3196 = vmatpush1.msra.mxu0 0.0
      %3197 = vmatprep.mubr.f32.mxu0 0.0
      %3198 = vmatmul.mubr.f32.gmra.mrb[0].mxu0 %v2958
      %v3199 = vpop.f32.mrb[0].mxu0
      %v3200 = vadd.f32 0.0, %v3199
      %v3201 = vpop.f32.mrb[0].mxu0
      %3202 = vdwg.mxu0
      %v3203 = vadd.f32 %v2577, %v3200
      %v3204 = vxor.u32 %v3203, 2147483648
      %v3205 = vmul.f32 %v3204, 1.442695
      %v3206 = vpow.pop %v3205
      %v3207 = vadd.f32 %v3206, 1.0
      %v3208 = vrcp.pop %v3207
      %v3209 = vmul.f32 1.0, %v3208
      %v3210 = vtanh.pop %v3203
      %v3211 = vmul.f32 %v3209, %v2948
      %3213 = vrot.lane.b32.xlu0 %v3210, 120
      %v3214 = vpop.permute.xlu0 %3213
      %v3216 = vmul.f32 %v3209, %v3214
      %3218 = vrot.lane.b32.xlu0 %v3216, 4
      %v3219 = vpop.permute.xlu0 %3218
      %v3221 = vadd.f32 %v3211, %v3219
      %v3222 = vtanh.pop %v3221
      %3224 = vrot.lane.b32.xlu0 %v3222, 8
      %v3225 = vpop.permute.xlu0 %3224
      %v3227 = vmul.f32 %v3209, %v3225
      %3229 = vrot.lane.b32.xlu0 %v3227, 116
      %v3230 = vpop.permute.xlu0 %3229
      %v3231 = vsel %vm490, %v3230, 0
      %3233 = vmatprep.subr.mxu0 0.0
      %3234 = vmatpush1.msra.mxu0 %v2688
      %3235 = vmatprep.subr.mxu0 0.0
      %3236 = vmatpush1.msra.mxu0 0.0
      %3237 = vmatprep.subr.mxu0 0.0
      %3238 = vmatpush1.msra.mxu0 0.0
      %3239 = vmatprep.subr.mxu0 0.0
      %3240 = vmatpush1.msra.mxu0 0.0
      %3241 = vmatprep.subr.mxu0 0.0
      %3242 = vmatpush1.msra.mxu0 0.0
      %3243 = vmatprep.subr.mxu0 0.0
      %3244 = vmatpush1.msra.mxu0 0.0
      %3245 = vmatprep.subr.mxu0 0.0
      %3246 = vmatpush1.msra.mxu0 0.0
      %3247 = vmatprep.subr.mxu0 0.0
      %3248 = vmatpush1.msra.mxu0 0.0
      %3249 = vmatprep.subr.mxu0 0.0
      %3250 = vmatpush1.msra.mxu0 0.0
      %3251 = vmatprep.subr.mxu0 0.0
      %3252 = vmatpush1.msra.mxu0 0.0
      %3253 = vmatprep.subr.mxu0 0.0
      %3254 = vmatpush1.msra.mxu0 0.0
      %3255 = vmatprep.subr.mxu0 0.0
      %3256 = vmatpush1.msra.mxu0 0.0
      %3257 = vmatprep.subr.mxu0 0.0
      %3258 = vmatpush1.msra.mxu0 0.0
      %3259 = vmatprep.subr.mxu0 0.0
      %3260 = vmatpush1.msra.mxu0 0.0
      %3261 = vmatprep.subr.mxu0 0.0
      %3262 = vmatpush1.msra.mxu0 0.0
      %3263 = vmatprep.subr.mxu0 0.0
      %3264 = vmatpush1.msra.mxu0 0.0
      %3265 = vmatprep.subr.mxu0 0.0
      %3266 = vmatpush1.msra.mxu0 0.0
      %3267 = vmatprep.subr.mxu0 0.0
      %3268 = vmatpush1.msra.mxu0 0.0
      %3269 = vmatprep.subr.mxu0 0.0
      %3270 = vmatpush1.msra.mxu0 0.0
      %3271 = vmatprep.subr.mxu0 0.0
      %3272 = vmatpush1.msra.mxu0 0.0
      %3273 = vmatprep.subr.mxu0 0.0
      %3274 = vmatpush1.msra.mxu0 0.0
      %3275 = vmatprep.subr.mxu0 0.0
      %3276 = vmatpush1.msra.mxu0 0.0
      %3277 = vmatprep.subr.mxu0 0.0
      %3278 = vmatpush1.msra.mxu0 0.0
      %3279 = vmatprep.subr.mxu0 0.0
      %3280 = vmatpush1.msra.mxu0 0.0
      %3281 = vmatprep.subr.mxu0 0.0
      %3282 = vmatpush1.msra.mxu0 0.0
      %3283 = vmatprep.subr.mxu0 0.0
      %3284 = vmatpush1.msra.mxu0 0.0
      %3285 = vmatprep.subr.mxu0 0.0
      %3286 = vmatpush1.msra.mxu0 0.0
      %3287 = vmatprep.subr.mxu0 0.0
      %3288 = vmatpush1.msra.mxu0 0.0
      %3289 = vmatprep.subr.mxu0 0.0
      %3290 = vmatpush1.msra.mxu0 0.0
      %3291 = vmatprep.subr.mxu0 0.0
      %3292 = vmatpush1.msra.mxu0 0.0
      %3293 = vmatprep.subr.mxu0 0.0
      %3294 = vmatpush1.msra.mxu0 0.0
      %3295 = vmatprep.subr.mxu0 0.0
      %3296 = vmatpush1.msra.mxu0 0.0
      %3297 = vmatprep.mubr.f32.mxu0 0.0
      %3298 = vmatmul.mubr.f32.gmra.mrb[0].mxu0 %v3231
      %v3299 = vpop.f32.mrb[0].mxu0
      %v3300 = vadd.f32 %v2681, %v3299
      %v3301 = vpop.f32.mrb[0].mxu0
      %3302 = vdwg.mxu0
      %v3303 = vsel %vm312, %v3129, 0
      %3305 = vmatprep.subr.mxu0 0.0
      %3306 = vmatpush1.msra.mxu0 %v187
      %3307 = vmatprep.subr.mxu0 0.0
      %3308 = vmatpush1.msra.mxu0 0.0
      %3309 = vmatprep.subr.mxu0 0.0
      %3310 = vmatpush1.msra.mxu0 0.0
      %3311 = vmatprep.subr.mxu0 0.0
      %3312 = vmatpush1.msra.mxu0 0.0
      %3313 = vmatprep.subr.mxu0 0.0
      %3314 = vmatpush1.msra.mxu0 0.0
      %3315 = vmatprep.subr.mxu0 0.0
      %3316 = vmatpush1.msra.mxu0 0.0
      %3317 = vmatprep.subr.mxu0 0.0
      %3318 = vmatpush1.msra.mxu0 0.0
      %3319 = vmatprep.subr.mxu0 0.0
      %3320 = vmatpush1.msra.mxu0 0.0
      %3321 = vmatprep.subr.mxu0 0.0
      %3322 = vmatpush1.msra.mxu0 0.0
      %3323 = vmatprep.subr.mxu0 0.0
      %3324 = vmatpush1.msra.mxu0 0.0
      %3325 = vmatprep.subr.mxu0 0.0
      %3326 = vmatpush1.msra.mxu0 0.0
      %3327 = vmatprep.subr.mxu0 0.0
      %3328 = vmatpush1.msra.mxu0 0.0
      %3329 = vmatprep.subr.mxu0 0.0
      %3330 = vmatpush1.msra.mxu0 0.0
      %3331 = vmatprep.subr.mxu0 0.0
      %3332 = vmatpush1.msra.mxu0 0.0
      %3333 = vmatprep.subr.mxu0 0.0
      %3334 = vmatpush1.msra.mxu0 0.0
      %3335 = vmatprep.subr.mxu0 0.0
      %3336 = vmatpush1.msra.mxu0 0.0
      %3337 = vmatprep.subr.mxu0 0.0
      %3338 = vmatpush1.msra.mxu0 0.0
      %3339 = vmatprep.subr.mxu0 0.0
      %3340 = vmatpush1.msra.mxu0 0.0
      %3341 = vmatprep.subr.mxu0 0.0
      %3342 = vmatpush1.msra.mxu0 0.0
      %3343 = vmatprep.subr.mxu0 0.0
      %3344 = vmatpush1.msra.mxu0 0.0
      %3345 = vmatprep.subr.mxu0 0.0
      %3346 = vmatpush1.msra.mxu0 0.0
      %3347 = vmatprep.subr.mxu0 0.0
      %3348 = vmatpush1.msra.mxu0 0.0
      %3349 = vmatprep.subr.mxu0 0.0
      %3350 = vmatpush1.msra.mxu0 0.0
      %3351 = vmatprep.subr.mxu0 0.0
      %3352 = vmatpush1.msra.mxu0 0.0
      %3353 = vmatprep.subr.mxu0 0.0
      %3354 = vmatpush1.msra.mxu0 0.0
      %3355 = vmatprep.subr.mxu0 0.0
      %3356 = vmatpush1.msra.mxu0 0.0
      %3357 = vmatprep.subr.mxu0 0.0
      %3358 = vmatpush1.msra.mxu0 0.0
      %3359 = vmatprep.subr.mxu0 0.0
      %3360 = vmatpush1.msra.mxu0 0.0
      %3361 = vmatprep.subr.mxu0 0.0
      %3362 = vmatpush1.msra.mxu0 0.0
      %3363 = vmatprep.subr.mxu0 0.0
      %3364 = vmatpush1.msra.mxu0 0.0
      %3365 = vmatprep.subr.mxu0 0.0
      %3366 = vmatpush1.msra.mxu0 0.0
      %3367 = vmatprep.subr.mxu0 0.0
      %3368 = vmatpush1.msra.mxu0 0.0
      %3369 = vmatprep.mubr.f32.mxu0 0.0
      %3370 = vmatmul.mubr.f32.gmra.mrb[0].mxu0 %v3303
      %v3371 = vpop.f32.mrb[0].mxu0
      %v3372 = vadd.f32 0.0, %v3371
      %v3373 = vpop.f32.mrb[0].mxu0
      %3374 = vdwg.mxu0
      %v3375 = vadd.f32 %v3300, %v3372
      %v3376 = vxor.u32 %v3375, 2147483648
      %v3377 = vmul.f32 %v3376, 1.442695
      %v3378 = vpow.pop %v3377
      %v3379 = vadd.f32 %v3378, 1.0
      %v3380 = vrcp.pop %v3379
      %v3381 = vmul.f32 1.0, %v3380
      %v3382 = vtanh.pop %v3375
      %v3383 = vmul.f32 %v3381, %v3120
      %3385 = vrot.lane.b32.xlu0 %v3382, 112
      %v3386 = vpop.permute.xlu0 %3385
      %v3388 = vmul.f32 %v3381, %v3386
      %3390 = vrot.lane.b32.xlu0 %v3388, 8
      %v3391 = vpop.permute.xlu0 %3390
      %v3393 = vadd.f32 %v3383, %v3391
      %v3394 = vtanh.pop %v3393
      %3396 = vrot.lane.b32.xlu0 %v3394, 16
      %v3397 = vpop.permute.xlu0 %3396
      %v3399 = vmul.f32 %v3381, %v3397
      %3401 = vrot.lane.b32.xlu0 %v3399, 104
      %v3402 = vpop.permute.xlu0 %3401
      %s3404 = scalar_lea.vmem [#allocation3], 16
      %3405 = vst.msk [vmem:[%s3404] sm:$0xff] %vm312, %v3402
      %3406 = vmatprep.subr.mxu0 0.0
      %3407 = vmatpush1.msra.mxu0 %v2581
      %3408 = vmatprep.subr.mxu0 0.0
      %3409 = vmatpush1.msra.mxu0 0.0
      %3410 = vmatprep.subr.mxu0 0.0
      %3411 = vmatpush1.msra.mxu0 0.0
      %3412 = vmatprep.subr.mxu0 0.0
      %3413 = vmatpush1.msra.mxu0 0.0
      %3414 = vmatprep.subr.mxu0 0.0
      %3415 = vmatpush1.msra.mxu0 0.0
      %3416 = vmatprep.subr.mxu0 0.0
      %3417 = vmatpush1.msra.mxu0 0.0
      %3418 = vmatprep.subr.mxu0 0.0
      %3419 = vmatpush1.msra.mxu0 0.0
      %3420 = vmatprep.subr.mxu0 0.0
      %3421 = vmatpush1.msra.mxu0 0.0
      %3422 = vmatprep.subr.mxu0 0.0
      %3423 = vmatpush1.msra.mxu0 0.0
      %3424 = vmatprep.subr.mxu0 0.0
      %3425 = vmatpush1.msra.mxu0 0.0
      %3426 = vmatprep.subr.mxu0 0.0
      %3427 = vmatpush1.msra.mxu0 0.0
      %3428 = vmatprep.subr.mxu0 0.0
      %3429 = vmatpush1.msra.mxu0 0.0
      %3430 = vmatprep.subr.mxu0 0.0
      %3431 = vmatpush1.msra.mxu0 0.0
      %3432 = vmatprep.subr.mxu0 0.0
      %3433 = vmatpush1.msra.mxu0 0.0
      %3434 = vmatprep.subr.mxu0 0.0
      %3435 = vmatpush1.msra.mxu0 0.0
      %3436 = vmatprep.subr.mxu0 0.0
      %3437 = vmatpush1.msra.mxu0 0.0
      %3438 = vmatprep.subr.mxu0 0.0
      %3439 = vmatpush1.msra.mxu0 0.0
      %3440 = vmatprep.subr.mxu0 0.0
      %3441 = vmatpush1.msra.mxu0 0.0
      %3442 = vmatprep.subr.mxu0 0.0
      %3443 = vmatpush1.msra.mxu0 0.0
      %3444 = vmatprep.subr.mxu0 0.0
      %3445 = vmatpush1.msra.mxu0 0.0
      %3446 = vmatprep.subr.mxu0 0.0
      %3447 = vmatpush1.msra.mxu0 0.0
      %3448 = vmatprep.subr.mxu0 0.0
      %3449 = vmatpush1.msra.mxu0 0.0
      %3450 = vmatprep.subr.mxu0 0.0
      %3451 = vmatpush1.msra.mxu0 0.0
      %3452 = vmatprep.subr.mxu0 0.0
      %3453 = vmatpush1.msra.mxu0 0.0
      %3454 = vmatprep.subr.mxu0 0.0
      %3455 = vmatpush1.msra.mxu0 0.0
      %3456 = vmatprep.subr.mxu0 0.0
      %3457 = vmatpush1.msra.mxu0 0.0
      %3458 = vmatprep.subr.mxu0 0.0
      %3459 = vmatpush1.msra.mxu0 0.0
      %3460 = vmatprep.subr.mxu0 0.0
      %3461 = vmatpush1.msra.mxu0 0.0
      %3462 = vmatprep.subr.mxu0 0.0
      %3463 = vmatpush1.msra.mxu0 0.0
      %3464 = vmatprep.subr.mxu0 0.0
      %3465 = vmatpush1.msra.mxu0 0.0
      %3466 = vmatprep.subr.mxu0 0.0
      %3467 = vmatpush1.msra.mxu0 0.0
      %3468 = vmatprep.subr.mxu0 0.0
      %3469 = vmatpush1.msra.mxu0 0.0
      %3470 = vmatprep.mubr.f32.mxu0 0.0
      %3471 = vmatmul.mubr.f32.gmra.mrb[0].mxu0 %v3231
      %v3472 = vpop.f32.mrb[0].mxu0
      %v3473 = vadd.f32 0.0, %v3472
      %v3474 = vpop.f32.mrb[0].mxu0
      %3475 = vdwg.mxu0
      %v3476 = vadd.f32 %v2577, %v3473
      %v3477 = vxor.u32 %v3476, 2147483648
      %v3478 = vmul.f32 %v3477, 1.442695
      %v3479 = vpow.pop %v3478
      %v3480 = vadd.f32 %v3479, 1.0
      %v3481 = vrcp.pop %v3480
      %v3482 = vmul.f32 1.0, %v3481
      %v3483 = vtanh.pop %v3476
      %v3484 = vmul.f32 %v3482, %v3221
      %3486 = vrot.lane.b32.xlu0 %v3483, 120
      %v3487 = vpop.permute.xlu0 %3486
      %v3489 = vmul.f32 %v3482, %v3487
      %3491 = vrot.lane.b32.xlu0 %v3489, 4
      %v3492 = vpop.permute.xlu0 %3491
      %v3494 = vadd.f32 %v3484, %v3492
      %v3495 = vtanh.pop %v3494
      %3497 = vrot.lane.b32.xlu0 %v3495, 8
      %v3498 = vpop.permute.xlu0 %3497
      %v3500 = vmul.f32 %v3482, %v3498
      %3502 = vrot.lane.b32.xlu0 %v3500, 116
      %v3503 = vpop.permute.xlu0 %3502
      %v3504 = vsel %vm490, %v3503, 0
      %3506 = vmatprep.subr.mxu0 0.0
      %3507 = vmatpush1.msra.mxu0 %v2688
      %3508 = vmatprep.subr.mxu0 0.0
      %3509 = vmatpush1.msra.mxu0 0.0
      %3510 = vmatprep.subr.mxu0 0.0
      %3511 = vmatpush1.msra.mxu0 0.0
      %3512 = vmatprep.subr.mxu0 0.0
      %3513 = vmatpush1.msra.mxu0 0.0
      %3514 = vmatprep.subr.mxu0 0.0
      %3515 = vmatpush1.msra.mxu0 0.0
      %3516 = vmatprep.subr.mxu0 0.0
      %3517 = vmatpush1.msra.mxu0 0.0
      %3518 = vmatprep.subr.mxu0 0.0
      %3519 = vmatpush1.msra.mxu0 0.0
      %3520 = vmatprep.subr.mxu0 0.0
      %3521 = vmatpush1.msra.mxu0 0.0
      %3522 = vmatprep.subr.mxu0 0.0
      %3523 = vmatpush1.msra.mxu0 0.0
      %3524 = vmatprep.subr.mxu0 0.0
      %3525 = vmatpush1.msra.mxu0 0.0
      %3526 = vmatprep.subr.mxu0 0.0
      %3527 = vmatpush1.msra.mxu0 0.0
      %3528 = vmatprep.subr.mxu0 0.0
      %3529 = vmatpush1.msra.mxu0 0.0
      %3530 = vmatprep.subr.mxu0 0.0
      %3531 = vmatpush1.msra.mxu0 0.0
      %3532 = vmatprep.subr.mxu0 0.0
      %3533 = vmatpush1.msra.mxu0 0.0
      %3534 = vmatprep.subr.mxu0 0.0
      %3535 = vmatpush1.msra.mxu0 0.0
      %3536 = vmatprep.subr.mxu0 0.0
      %3537 = vmatpush1.msra.mxu0 0.0
      %3538 = vmatprep.subr.mxu0 0.0
      %3539 = vmatpush1.msra.mxu0 0.0
      %3540 = vmatprep.subr.mxu0 0.0
      %3541 = vmatpush1.msra.mxu0 0.0
      %3542 = vmatprep.subr.mxu0 0.0
      %3543 = vmatpush1.msra.mxu0 0.0
      %3544 = vmatprep.subr.mxu0 0.0
      %3545 = vmatpush1.msra.mxu0 0.0
      %3546 = vmatprep.subr.mxu0 0.0
      %3547 = vmatpush1.msra.mxu0 0.0
      %3548 = vmatprep.subr.mxu0 0.0
      %3549 = vmatpush1.msra.mxu0 0.0
      %3550 = vmatprep.subr.mxu0 0.0
      %3551 = vmatpush1.msra.mxu0 0.0
      %3552 = vmatprep.subr.mxu0 0.0
      %3553 = vmatpush1.msra.mxu0 0.0
      %3554 = vmatprep.subr.mxu0 0.0
      %3555 = vmatpush1.msra.mxu0 0.0
      %3556 = vmatprep.subr.mxu0 0.0
      %3557 = vmatpush1.msra.mxu0 0.0
      %3558 = vmatprep.subr.mxu0 0.0
      %3559 = vmatpush1.msra.mxu0 0.0
      %3560 = vmatprep.subr.mxu0 0.0
      %3561 = vmatpush1.msra.mxu0 0.0
      %3562 = vmatprep.subr.mxu0 0.0
      %3563 = vmatpush1.msra.mxu0 0.0
      %3564 = vmatprep.subr.mxu0 0.0
      %3565 = vmatpush1.msra.mxu0 0.0
      %3566 = vmatprep.subr.mxu0 0.0
      %3567 = vmatpush1.msra.mxu0 0.0
      %3568 = vmatprep.subr.mxu0 0.0
      %3569 = vmatpush1.msra.mxu0 0.0
      %3570 = vmatprep.mubr.f32.mxu0 0.0
      %3571 = vmatmul.mubr.f32.gmra.mrb[0].mxu0 %v3504
      %v3572 = vpop.f32.mrb[0].mxu0
      %v3573 = vadd.f32 %v2681, %v3572
      %v3574 = vpop.f32.mrb[0].mxu0
      %3575 = vdwg.mxu0
      %v3576 = vsel %vm312, %v3402, 0
      %3578 = vmatprep.subr.mxu0 0.0
      %3579 = vmatpush1.msra.mxu0 %v187
      %3580 = vmatprep.subr.mxu0 0.0
      %3581 = vmatpush1.msra.mxu0 0.0
      %3582 = vmatprep.subr.mxu0 0.0
      %3583 = vmatpush1.msra.mxu0 0.0
      %3584 = vmatprep.subr.mxu0 0.0
      %3585 = vmatpush1.msra.mxu0 0.0
      %3586 = vmatprep.subr.mxu0 0.0
      %3587 = vmatpush1.msra.mxu0 0.0
      %3588 = vmatprep.subr.mxu0 0.0
      %3589 = vmatpush1.msra.mxu0 0.0
      %3590 = vmatprep.subr.mxu0 0.0
      %3591 = vmatpush1.msra.mxu0 0.0
      %3592 = vmatprep.subr.mxu0 0.0
      %3593 = vmatpush1.msra.mxu0 0.0
      %3594 = vmatprep.subr.mxu0 0.0
      %3595 = vmatpush1.msra.mxu0 0.0
      %3596 = vmatprep.subr.mxu0 0.0
      %3597 = vmatpush1.msra.mxu0 0.0
      %3598 = vmatprep.subr.mxu0 0.0
      %3599 = vmatpush1.msra.mxu0 0.0
      %3600 = vmatprep.subr.mxu0 0.0
      %3601 = vmatpush1.msra.mxu0 0.0
      %3602 = vmatprep.subr.mxu0 0.0
      %3603 = vmatpush1.msra.mxu0 0.0
      %3604 = vmatprep.subr.mxu0 0.0
      %3605 = vmatpush1.msra.mxu0 0.0
      %3606 = vmatprep.subr.mxu0 0.0
      %3607 = vmatpush1.msra.mxu0 0.0
      %3608 = vmatprep.subr.mxu0 0.0
      %3609 = vmatpush1.msra.mxu0 0.0
      %3610 = vmatprep.subr.mxu0 0.0
      %3611 = vmatpush1.msra.mxu0 0.0
      %3612 = vmatprep.subr.mxu0 0.0
      %3613 = vmatpush1.msra.mxu0 0.0
      %3614 = vmatprep.subr.mxu0 0.0
      %3615 = vmatpush1.msra.mxu0 0.0
      %3616 = vmatprep.subr.mxu0 0.0
      %3617 = vmatpush1.msra.mxu0 0.0
      %3618 = vmatprep.subr.mxu0 0.0
      %3619 = vmatpush1.msra.mxu0 0.0
      %3620 = vmatprep.subr.mxu0 0.0
      %3621 = vmatpush1.msra.mxu0 0.0
      %3622 = vmatprep.subr.mxu0 0.0
      %3623 = vmatpush1.msra.mxu0 0.0
      %3624 = vmatprep.subr.mxu0 0.0
      %3625 = vmatpush1.msra.mxu0 0.0
      %3626 = vmatprep.subr.mxu0 0.0
      %3627 = vmatpush1.msra.mxu0 0.0
      %3628 = vmatprep.subr.mxu0 0.0
      %3629 = vmatpush1.msra.mxu0 0.0
      %3630 = vmatprep.subr.mxu0 0.0
      %3631 = vmatpush1.msra.mxu0 0.0
      %3632 = vmatprep.subr.mxu0 0.0
      %3633 = vmatpush1.msra.mxu0 0.0
      %3634 = vmatprep.subr.mxu0 0.0
      %3635 = vmatpush1.msra.mxu0 0.0
      %3636 = vmatprep.subr.mxu0 0.0
      %3637 = vmatpush1.msra.mxu0 0.0
      %3638 = vmatprep.subr.mxu0 0.0
      %3639 = vmatpush1.msra.mxu0 0.0
      %3640 = vmatprep.subr.mxu0 0.0
      %3641 = vmatpush1.msra.mxu0 0.0
      %3642 = vmatprep.mubr.f32.mxu0 0.0
      %3643 = vmatmul.mubr.f32.gmra.mrb[0].mxu0 %v3576
      %v3644 = vpop.f32.mrb[0].mxu0
      %v3645 = vadd.f32 0.0, %v3644
      %v3646 = vpop.f32.mrb[0].mxu0
      %3647 = vdwg.mxu0
      %v3648 = vadd.f32 %v3573, %v3645
      %v3649 = vxor.u32 %v3648, 2147483648
      %v3650 = vmul.f32 %v3649, 1.442695
      %v3651 = vpow.pop %v3650
      %v3652 = vadd.f32 %v3651, 1.0
      %v3653 = vrcp.pop %v3652
      %v3654 = vmul.f32 1.0, %v3653
      %v3655 = vtanh.pop %v3648
      %v3656 = vmul.f32 %v3654, %v3393
      %3658 = vrot.lane.b32.xlu0 %v3655, 112
      %v3659 = vpop.permute.xlu0 %3658
      %v3661 = vmul.f32 %v3654, %v3659
      %3663 = vrot.lane.b32.xlu0 %v3661, 8
      %v3664 = vpop.permute.xlu0 %3663
      %v3666 = vadd.f32 %v3656, %v3664
      %v3667 = vtanh.pop %v3666
      %3669 = vrot.lane.b32.xlu0 %v3667, 16
      %v3670 = vpop.permute.xlu0 %3669
      %v3672 = vmul.f32 %v3654, %v3670
      %3674 = vrot.lane.b32.xlu0 %v3672, 104
      %v3675 = vpop.permute.xlu0 %3674
      %s3677 = scalar_lea.vmem [#allocation3], 24
      %3678 = vst.msk [vmem:[%s3677] sm:$0xff] %vm312, %v3675
      %3679 = vmatprep.subr.mxu0 0.0
      %3680 = vmatpush1.msra.mxu0 %v2581
      %3681 = vmatprep.subr.mxu0 0.0
      %3682 = vmatpush1.msra.mxu0 0.0
      %3683 = vmatprep.subr.mxu0 0.0
      %3684 = vmatpush1.msra.mxu0 0.0
      %3685 = vmatprep.subr.mxu0 0.0
      %3686 = vmatpush1.msra.mxu0 0.0
      %3687 = vmatprep.subr.mxu0 0.0
      %3688 = vmatpush1.msra.mxu0 0.0
      %3689 = vmatprep.subr.mxu0 0.0
      %3690 = vmatpush1.msra.mxu0 0.0
      %3691 = vmatprep.subr.mxu0 0.0
      %3692 = vmatpush1.msra.mxu0 0.0
      %3693 = vmatprep.subr.mxu0 0.0
      %3694 = vmatpush1.msra.mxu0 0.0
      %3695 = vmatprep.subr.mxu0 0.0
      %3696 = vmatpush1.msra.mxu0 0.0
      %3697 = vmatprep.subr.mxu0 0.0
      %3698 = vmatpush1.msra.mxu0 0.0
      %3699 = vmatprep.subr.mxu0 0.0
      %3700 = vmatpush1.msra.mxu0 0.0
      %3701 = vmatprep.subr.mxu0 0.0
      %3702 = vmatpush1.msra.mxu0 0.0
      %3703 = vmatprep.subr.mxu0 0.0
      %3704 = vmatpush1.msra.mxu0 0.0
      %3705 = vmatprep.subr.mxu0 0.0
      %3706 = vmatpush1.msra.mxu0 0.0
      %3707 = vmatprep.subr.mxu0 0.0
      %3708 = vmatpush1.msra.mxu0 0.0
      %3709 = vmatprep.subr.mxu0 0.0
      %3710 = vmatpush1.msra.mxu0 0.0
      %3711 = vmatprep.subr.mxu0 0.0
      %3712 = vmatpush1.msra.mxu0 0.0
      %3713 = vmatprep.subr.mxu0 0.0
      %3714 = vmatpush1.msra.mxu0 0.0
      %3715 = vmatprep.subr.mxu0 0.0
      %3716 = vmatpush1.msra.mxu0 0.0
      %3717 = vmatprep.subr.mxu0 0.0
      %3718 = vmatpush1.msra.mxu0 0.0
      %3719 = vmatprep.subr.mxu0 0.0
      %3720 = vmatpush1.msra.mxu0 0.0
      %3721 = vmatprep.subr.mxu0 0.0
      %3722 = vmatpush1.msra.mxu0 0.0
      %3723 = vmatprep.subr.mxu0 0.0
      %3724 = vmatpush1.msra.mxu0 0.0
      %3725 = vmatprep.subr.mxu0 0.0
      %3726 = vmatpush1.msra.mxu0 0.0
      %3727 = vmatprep.subr.mxu0 0.0
      %3728 = vmatpush1.msra.mxu0 0.0
      %3729 = vmatprep.subr.mxu0 0.0
      %3730 = vmatpush1.msra.mxu0 0.0
      %3731 = vmatprep.subr.mxu0 0.0
      %3732 = vmatpush1.msra.mxu0 0.0
      %3733 = vmatprep.subr.mxu0 0.0
      %3734 = vmatpush1.msra.mxu0 0.0
      %3735 = vmatprep.subr.mxu0 0.0
      %3736 = vmatpush1.msra.mxu0 0.0
      %3737 = vmatprep.subr.mxu0 0.0
      %3738 = vmatpush1.msra.mxu0 0.0
      %3739 = vmatprep.subr.mxu0 0.0
      %3740 = vmatpush1.msra.mxu0 0.0
      %3741 = vmatprep.subr.mxu0 0.0
      %3742 = vmatpush1.msra.mxu0 0.0
      %3743 = vmatprep.mubr.f32.mxu0 0.0
      %3744 = vmatmul.mubr.f32.gmra.mrb[0].mxu0 %v3504
      %v3745 = vpop.f32.mrb[0].mxu0
      %v3746 = vadd.f32 0.0, %v3745
      %v3747 = vpop.f32.mrb[0].mxu0
      %3748 = vdwg.mxu0
      %v3749 = vadd.f32 %v2577, %v3746
      %v3750 = vxor.u32 %v3749, 2147483648
      %v3751 = vmul.f32 %v3750, 1.442695
      %v3752 = vpow.pop %v3751
      %v3753 = vadd.f32 %v3752, 1.0
      %v3754 = vrcp.pop %v3753
      %v3755 = vmul.f32 1.0, %v3754
      %v3756 = vtanh.pop %v3749
      %v3757 = vmul.f32 %v3755, %v3494
      %3759 = vrot.lane.b32.xlu0 %v3756, 120
      %v3760 = vpop.permute.xlu0 %3759
      %v3762 = vmul.f32 %v3755, %v3760
      %3764 = vrot.lane.b32.xlu0 %v3762, 4
      %v3765 = vpop.permute.xlu0 %3764
      %v3767 = vadd.f32 %v3757, %v3765
      %v3768 = vtanh.pop %v3767
      %3770 = vrot.lane.b32.xlu0 %v3768, 8
      %v3771 = vpop.permute.xlu0 %3770
      %v3773 = vmul.f32 %v3755, %v3771
      %3775 = vrot.lane.b32.xlu0 %v3773, 116
      %v3776 = vpop.permute.xlu0 %3775
      %v3777 = vsel %vm490, %v3776, 0
      %3779 = vmatprep.subr.mxu0 0.0
      %3780 = vmatpush1.msra.mxu0 %v2688
      %3781 = vmatprep.subr.mxu0 0.0
      %3782 = vmatpush1.msra.mxu0 0.0
      %3783 = vmatprep.subr.mxu0 0.0
      %3784 = vmatpush1.msra.mxu0 0.0
      %3785 = vmatprep.subr.mxu0 0.0
      %3786 = vmatpush1.msra.mxu0 0.0
      %3787 = vmatprep.subr.mxu0 0.0
      %3788 = vmatpush1.msra.mxu0 0.0
      %3789 = vmatprep.subr.mxu0 0.0
      %3790 = vmatpush1.msra.mxu0 0.0
      %3791 = vmatprep.subr.mxu0 0.0
      %3792 = vmatpush1.msra.mxu0 0.0
      %3793 = vmatprep.subr.mxu0 0.0
      %3794 = vmatpush1.msra.mxu0 0.0
      %3795 = vmatprep.subr.mxu0 0.0
      %3796 = vmatpush1.msra.mxu0 0.0
      %3797 = vmatprep.subr.mxu0 0.0
      %3798 = vmatpush1.msra.mxu0 0.0
      %3799 = vmatprep.subr.mxu0 0.0
      %3800 = vmatpush1.msra.mxu0 0.0
      %3801 = vmatprep.subr.mxu0 0.0
      %3802 = vmatpush1.msra.mxu0 0.0
      %3803 = vmatprep.subr.mxu0 0.0
      %3804 = vmatpush1.msra.mxu0 0.0
      %3805 = vmatprep.subr.mxu0 0.0
      %3806 = vmatpush1.msra.mxu0 0.0
      %3807 = vmatprep.subr.mxu0 0.0
      %3808 = vmatpush1.msra.mxu0 0.0
      %3809 = vmatprep.subr.mxu0 0.0
      %3810 = vmatpush1.msra.mxu0 0.0
      %3811 = vmatprep.subr.mxu0 0.0
      %3812 = vmatpush1.msra.mxu0 0.0
      %3813 = vmatprep.subr.mxu0 0.0
      %3814 = vmatpush1.msra.mxu0 0.0
      %3815 = vmatprep.subr.mxu0 0.0
      %3816 = vmatpush1.msra.mxu0 0.0
      %3817 = vmatprep.subr.mxu0 0.0
      %3818 = vmatpush1.msra.mxu0 0.0
      %3819 = vmatprep.subr.mxu0 0.0
      %3820 = vmatpush1.msra.mxu0 0.0
      %3821 = vmatprep.subr.mxu0 0.0
      %3822 = vmatpush1.msra.mxu0 0.0
      %3823 = vmatprep.subr.mxu0 0.0
      %3824 = vmatpush1.msra.mxu0 0.0
      %3825 = vmatprep.subr.mxu0 0.0
      %3826 = vmatpush1.msra.mxu0 0.0
      %3827 = vmatprep.subr.mxu0 0.0
      %3828 = vmatpush1.msra.mxu0 0.0
      %3829 = vmatprep.subr.mxu0 0.0
      %3830 = vmatpush1.msra.mxu0 0.0
      %3831 = vmatprep.subr.mxu0 0.0
      %3832 = vmatpush1.msra.mxu0 0.0
      %3833 = vmatprep.subr.mxu0 0.0
      %3834 = vmatpush1.msra.mxu0 0.0
      %3835 = vmatprep.subr.mxu0 0.0
      %3836 = vmatpush1.msra.mxu0 0.0
      %3837 = vmatprep.subr.mxu0 0.0
      %3838 = vmatpush1.msra.mxu0 0.0
      %3839 = vmatprep.subr.mxu0 0.0
      %3840 = vmatpush1.msra.mxu0 0.0
      %3841 = vmatprep.subr.mxu0 0.0
      %3842 = vmatpush1.msra.mxu0 0.0
      %3843 = vmatprep.mubr.f32.mxu0 0.0
      %3844 = vmatmul.mubr.f32.gmra.mrb[0].mxu0 %v3777
      %v3845 = vpop.f32.mrb[0].mxu0
      %v3846 = vadd.f32 %v2681, %v3845
      %v3847 = vpop.f32.mrb[0].mxu0
      %3848 = vdwg.mxu0
      %v3849 = vsel %vm312, %v3675, 0
      %3851 = vmatprep.subr.mxu0 0.0
      %3852 = vmatpush1.msra.mxu0 %v187
      %3853 = vmatprep.subr.mxu0 0.0
      %3854 = vmatpush1.msra.mxu0 0.0
      %3855 = vmatprep.subr.mxu0 0.0
      %3856 = vmatpush1.msra.mxu0 0.0
      %3857 = vmatprep.subr.mxu0 0.0
      %3858 = vmatpush1.msra.mxu0 0.0
      %3859 = vmatprep.subr.mxu0 0.0
      %3860 = vmatpush1.msra.mxu0 0.0
      %3861 = vmatprep.subr.mxu0 0.0
      %3862 = vmatpush1.msra.mxu0 0.0
      %3863 = vmatprep.subr.mxu0 0.0
      %3864 = vmatpush1.msra.mxu0 0.0
      %3865 = vmatprep.subr.mxu0 0.0
      %3866 = vmatpush1.msra.mxu0 0.0
      %3867 = vmatprep.subr.mxu0 0.0
      %3868 = vmatpush1.msra.mxu0 0.0
      %3869 = vmatprep.subr.mxu0 0.0
      %3870 = vmatpush1.msra.mxu0 0.0
      %3871 = vmatprep.subr.mxu0 0.0
      %3872 = vmatpush1.msra.mxu0 0.0
      %3873 = vmatprep.subr.mxu0 0.0
      %3874 = vmatpush1.msra.mxu0 0.0
      %3875 = vmatprep.subr.mxu0 0.0
      %3876 = vmatpush1.msra.mxu0 0.0
      %3877 = vmatprep.subr.mxu0 0.0
      %3878 = vmatpush1.msra.mxu0 0.0
      %3879 = vmatprep.subr.mxu0 0.0
      %3880 = vmatpush1.msra.mxu0 0.0
      %3881 = vmatprep.subr.mxu0 0.0
      %3882 = vmatpush1.msra.mxu0 0.0
      %3883 = vmatprep.subr.mxu0 0.0
      %3884 = vmatpush1.msra.mxu0 0.0
      %3885 = vmatprep.subr.mxu0 0.0
      %3886 = vmatpush1.msra.mxu0 0.0
      %3887 = vmatprep.subr.mxu0 0.0
      %3888 = vmatpush1.msra.mxu0 0.0
      %3889 = vmatprep.subr.mxu0 0.0
      %3890 = vmatpush1.msra.mxu0 0.0
      %3891 = vmatprep.subr.mxu0 0.0
      %3892 = vmatpush1.msra.mxu0 0.0
      %3893 = vmatprep.subr.mxu0 0.0
      %3894 = vmatpush1.msra.mxu0 0.0
      %3895 = vmatprep.subr.mxu0 0.0
      %3896 = vmatpush1.msra.mxu0 0.0
      %3897 = vmatprep.subr.mxu0 0.0
      %3898 = vmatpush1.msra.mxu0 0.0
      %3899 = vmatprep.subr.mxu0 0.0
      %3900 = vmatpush1.msra.mxu0 0.0
      %3901 = vmatprep.subr.mxu0 0.0
      %3902 = vmatpush1.msra.mxu0 0.0
      %3903 = vmatprep.subr.mxu0 0.0
      %3904 = vmatpush1.msra.mxu0 0.0
      %3905 = vmatprep.subr.mxu0 0.0
      %3906 = vmatpush1.msra.mxu0 0.0
      %3907 = vmatprep.subr.mxu0 0.0
      %3908 = vmatpush1.msra.mxu0 0.0
      %3909 = vmatprep.subr.mxu0 0.0
      %3910 = vmatpush1.msra.mxu0 0.0
      %3911 = vmatprep.subr.mxu0 0.0
      %3912 = vmatpush1.msra.mxu0 0.0
      %3913 = vmatprep.subr.mxu0 0.0
      %3914 = vmatpush1.msra.mxu0 0.0
      %3915 = vmatprep.mubr.f32.mxu0 0.0
      %3916 = vmatmul.mubr.f32.gmra.mrb[0].mxu0 %v3849
      %v3917 = vpop.f32.mrb[0].mxu0
      %v3918 = vadd.f32 0.0, %v3917
      %v3919 = vpop.f32.mrb[0].mxu0
      %3920 = vdwg.mxu0
      %v3921 = vadd.f32 %v3846, %v3918
      %v3922 = vxor.u32 %v3921, 2147483648
      %v3923 = vmul.f32 %v3922, 1.442695
      %v3924 = vpow.pop %v3923
      %v3925 = vadd.f32 %v3924, 1.0
      %v3926 = vrcp.pop %v3925
      %v3927 = vmul.f32 1.0, %v3926
      %v3928 = vtanh.pop %v3921
      %v3929 = vmul.f32 %v3927, %v3666
      %3931 = vrot.lane.b32.xlu0 %v3928, 112
      %v3932 = vpop.permute.xlu0 %3931
      %v3934 = vmul.f32 %v3927, %v3932
      %3936 = vrot.lane.b32.xlu0 %v3934, 8
      %v3937 = vpop.permute.xlu0 %3936
      %v3939 = vadd.f32 %v3929, %v3937
      %v3940 = vtanh.pop %v3939
      %3942 = vrot.lane.b32.xlu0 %v3940, 16
      %v3943 = vpop.permute.xlu0 %3942
      %v3945 = vmul.f32 %v3927, %v3943
      %3947 = vrot.lane.b32.xlu0 %v3945, 104
      %v3948 = vpop.permute.xlu0 %3947
      %s3950 = scalar_lea.vmem [#allocation3], 32
      %3951 = vst.msk [vmem:[%s3950] sm:$0xff] %vm312, %v3948
      %3952 = vmatprep.subr.mxu0 0.0
      %3953 = vmatpush1.msra.mxu0 %v2581
      %3954 = vmatprep.subr.mxu0 0.0
      %3955 = vmatpush1.msra.mxu0 0.0
      %3956 = vmatprep.subr.mxu0 0.0
      %3957 = vmatpush1.msra.mxu0 0.0
      %3958 = vmatprep.subr.mxu0 0.0
      %3959 = vmatpush1.msra.mxu0 0.0
      %3960 = vmatprep.subr.mxu0 0.0
      %3961 = vmatpush1.msra.mxu0 0.0
      %3962 = vmatprep.subr.mxu0 0.0
      %3963 = vmatpush1.msra.mxu0 0.0
      %3964 = vmatprep.subr.mxu0 0.0
      %3965 = vmatpush1.msra.mxu0 0.0
      %3966 = vmatprep.subr.mxu0 0.0
      %3967 = vmatpush1.msra.mxu0 0.0
      %3968 = vmatprep.subr.mxu0 0.0
      %3969 = vmatpush1.msra.mxu0 0.0
      %3970 = vmatprep.subr.mxu0 0.0
      %3971 = vmatpush1.msra.mxu0 0.0
      %3972 = vmatprep.subr.mxu0 0.0
      %3973 = vmatpush1.msra.mxu0 0.0
      %3974 = vmatprep.subr.mxu0 0.0
      %3975 = vmatpush1.msra.mxu0 0.0
      %3976 = vmatprep.subr.mxu0 0.0
      %3977 = vmatpush1.msra.mxu0 0.0
      %3978 = vmatprep.subr.mxu0 0.0
      %3979 = vmatpush1.msra.mxu0 0.0
      %3980 = vmatprep.subr.mxu0 0.0
      %3981 = vmatpush1.msra.mxu0 0.0
      %3982 = vmatprep.subr.mxu0 0.0
      %3983 = vmatpush1.msra.mxu0 0.0
      %3984 = vmatprep.subr.mxu0 0.0
      %3985 = vmatpush1.msra.mxu0 0.0
      %3986 = vmatprep.subr.mxu0 0.0
      %3987 = vmatpush1.msra.mxu0 0.0
      %3988 = vmatprep.subr.mxu0 0.0
      %3989 = vmatpush1.msra.mxu0 0.0
      %3990 = vmatprep.subr.mxu0 0.0
      %3991 = vmatpush1.msra.mxu0 0.0
      %3992 = vmatprep.subr.mxu0 0.0
      %3993 = vmatpush1.msra.mxu0 0.0
      %3994 = vmatprep.subr.mxu0 0.0
      %3995 = vmatpush1.msra.mxu0 0.0
      %3996 = vmatprep.subr.mxu0 0.0
      %3997 = vmatpush1.msra.mxu0 0.0
      %3998 = vmatprep.subr.mxu0 0.0
      %3999 = vmatpush1.msra.mxu0 0.0
      %4000 = vmatprep.subr.mxu0 0.0
      %4001 = vmatpush1.msra.mxu0 0.0
      %4002 = vmatprep.subr.mxu0 0.0
      %4003 = vmatpush1.msra.mxu0 0.0
      %4004 = vmatprep.subr.mxu0 0.0
      %4005 = vmatpush1.msra.mxu0 0.0
      %4006 = vmatprep.subr.mxu0 0.0
      %4007 = vmatpush1.msra.mxu0 0.0
      %4008 = vmatprep.subr.mxu0 0.0
      %4009 = vmatpush1.msra.mxu0 0.0
      %4010 = vmatprep.subr.mxu0 0.0
      %4011 = vmatpush1.msra.mxu0 0.0
      %4012 = vmatprep.subr.mxu0 0.0
      %4013 = vmatpush1.msra.mxu0 0.0
      %4014 = vmatprep.subr.mxu0 0.0
      %4015 = vmatpush1.msra.mxu0 0.0
      %4016 = vmatprep.mubr.f32.mxu0 0.0
      %4017 = vmatmul.mubr.f32.gmra.mrb[0].mxu0 %v3777
      %v4018 = vpop.f32.mrb[0].mxu0
      %v4019 = vadd.f32 0.0, %v4018
      %v4020 = vpop.f32.mrb[0].mxu0
      %4021 = vdwg.mxu0
      %v4022 = vadd.f32 %v2577, %v4019
      %v4023 = vxor.u32 %v4022, 2147483648
      %v4024 = vmul.f32 %v4023, 1.442695
      %v4025 = vpow.pop %v4024
      %v4026 = vadd.f32 %v4025, 1.0
      %v4027 = vrcp.pop %v4026
      %v4028 = vmul.f32 1.0, %v4027
      %v4029 = vtanh.pop %v4022
      %v4030 = vmul.f32 %v4028, %v3767
      %4032 = vrot.lane.b32.xlu0 %v4029, 120
      %v4033 = vpop.permute.xlu0 %4032
      %v4035 = vmul.f32 %v4028, %v4033
      %4037 = vrot.lane.b32.xlu0 %v4035, 4
      %v4038 = vpop.permute.xlu0 %4037
      %v4040 = vadd.f32 %v4030, %v4038
      %v4041 = vtanh.pop %v4040
      %4043 = vrot.lane.b32.xlu0 %v4041, 8
      %v4044 = vpop.permute.xlu0 %4043
      %v4046 = vmul.f32 %v4028, %v4044
      %4048 = vrot.lane.b32.xlu0 %v4046, 116
      %v4049 = vpop.permute.xlu0 %4048
      %v4050 = vsel %vm490, %v4049, 0
      %4052 = vmatprep.subr.mxu0 0.0
      %4053 = vmatpush1.msra.mxu0 %v2688
      %4054 = vmatprep.subr.mxu0 0.0
      %4055 = vmatpush1.msra.mxu0 0.0
      %4056 = vmatprep.subr.mxu0 0.0
      %4057 = vmatpush1.msra.mxu0 0.0
      %4058 = vmatprep.subr.mxu0 0.0
      %4059 = vmatpush1.msra.mxu0 0.0
      %4060 = vmatprep.subr.mxu0 0.0
      %4061 = vmatpush1.msra.mxu0 0.0
      %4062 = vmatprep.subr.mxu0 0.0
      %4063 = vmatpush1.msra.mxu0 0.0
      %4064 = vmatprep.subr.mxu0 0.0
      %4065 = vmatpush1.msra.mxu0 0.0
      %4066 = vmatprep.subr.mxu0 0.0
      %4067 = vmatpush1.msra.mxu0 0.0
      %4068 = vmatprep.subr.mxu0 0.0
      %4069 = vmatpush1.msra.mxu0 0.0
      %4070 = vmatprep.subr.mxu0 0.0
      %4071 = vmatpush1.msra.mxu0 0.0
      %4072 = vmatprep.subr.mxu0 0.0
      %4073 = vmatpush1.msra.mxu0 0.0
      %4074 = vmatprep.subr.mxu0 0.0
      %4075 = vmatpush1.msra.mxu0 0.0
      %4076 = vmatprep.subr.mxu0 0.0
      %4077 = vmatpush1.msra.mxu0 0.0
      %4078 = vmatprep.subr.mxu0 0.0
      %4079 = vmatpush1.msra.mxu0 0.0
      %4080 = vmatprep.subr.mxu0 0.0
      %4081 = vmatpush1.msra.mxu0 0.0
      %4082 = vmatprep.subr.mxu0 0.0
      %4083 = vmatpush1.msra.mxu0 0.0
      %4084 = vmatprep.subr.mxu0 0.0
      %4085 = vmatpush1.msra.mxu0 0.0
      %4086 = vmatprep.subr.mxu0 0.0
      %4087 = vmatpush1.msra.mxu0 0.0
      %4088 = vmatprep.subr.mxu0 0.0
      %4089 = vmatpush1.msra.mxu0 0.0
      %4090 = vmatprep.subr.mxu0 0.0
      %4091 = vmatpush1.msra.mxu0 0.0
      %4092 = vmatprep.subr.mxu0 0.0
      %4093 = vmatpush1.msra.mxu0 0.0
      %4094 = vmatprep.subr.mxu0 0.0
      %4095 = vmatpush1.msra.mxu0 0.0
      %4096 = vmatprep.subr.mxu0 0.0
      %4097 = vmatpush1.msra.mxu0 0.0
      %4098 = vmatprep.subr.mxu0 0.0
      %4099 = vmatpush1.msra.mxu0 0.0
      %4100 = vmatprep.subr.mxu0 0.0
      %4101 = vmatpush1.msra.mxu0 0.0
      %4102 = vmatprep.subr.mxu0 0.0
      %4103 = vmatpush1.msra.mxu0 0.0
      %4104 = vmatprep.subr.mxu0 0.0
      %4105 = vmatpush1.msra.mxu0 0.0
      %4106 = vmatprep.subr.mxu0 0.0
      %4107 = vmatpush1.msra.mxu0 0.0
      %4108 = vmatprep.subr.mxu0 0.0
      %4109 = vmatpush1.msra.mxu0 0.0
      %4110 = vmatprep.subr.mxu0 0.0
      %4111 = vmatpush1.msra.mxu0 0.0
      %4112 = vmatprep.subr.mxu0 0.0
      %4113 = vmatpush1.msra.mxu0 0.0
      %4114 = vmatprep.subr.mxu0 0.0
      %4115 = vmatpush1.msra.mxu0 0.0
      %4116 = vmatprep.mubr.f32.mxu0 0.0
      %4117 = vmatmul.mubr.f32.gmra.mrb[0].mxu0 %v4050
      %v4118 = vpop.f32.mrb[0].mxu0
      %v4119 = vadd.f32 %v2681, %v4118
      %v4120 = vpop.f32.mrb[0].mxu0
      %4121 = vdwg.mxu0
      %v4122 = vsel %vm312, %v3948, 0
      %4124 = vmatprep.subr.mxu0 0.0
      %4125 = vmatpush1.msra.mxu0 %v187
      %4126 = vmatprep.subr.mxu0 0.0
      %4127 = vmatpush1.msra.mxu0 0.0
      %4128 = vmatprep.subr.mxu0 0.0
      %4129 = vmatpush1.msra.mxu0 0.0
      %4130 = vmatprep.subr.mxu0 0.0
      %4131 = vmatpush1.msra.mxu0 0.0
      %4132 = vmatprep.subr.mxu0 0.0
      %4133 = vmatpush1.msra.mxu0 0.0
      %4134 = vmatprep.subr.mxu0 0.0
      %4135 = vmatpush1.msra.mxu0 0.0
      %4136 = vmatprep.subr.mxu0 0.0
      %4137 = vmatpush1.msra.mxu0 0.0
      %4138 = vmatprep.subr.mxu0 0.0
      %4139 = vmatpush1.msra.mxu0 0.0
      %4140 = vmatprep.subr.mxu0 0.0
      %4141 = vmatpush1.msra.mxu0 0.0
      %4142 = vmatprep.subr.mxu0 0.0
      %4143 = vmatpush1.msra.mxu0 0.0
      %4144 = vmatprep.subr.mxu0 0.0
      %4145 = vmatpush1.msra.mxu0 0.0
      %4146 = vmatprep.subr.mxu0 0.0
      %4147 = vmatpush1.msra.mxu0 0.0
      %4148 = vmatprep.subr.mxu0 0.0
      %4149 = vmatpush1.msra.mxu0 0.0
      %4150 = vmatprep.subr.mxu0 0.0
      %4151 = vmatpush1.msra.mxu0 0.0
      %4152 = vmatprep.subr.mxu0 0.0
      %4153 = vmatpush1.msra.mxu0 0.0
      %4154 = vmatprep.subr.mxu0 0.0
      %4155 = vmatpush1.msra.mxu0 0.0
      %4156 = vmatprep.subr.mxu0 0.0
      %4157 = vmatpush1.msra.mxu0 0.0
      %4158 = vmatprep.subr.mxu0 0.0
      %4159 = vmatpush1.msra.mxu0 0.0
      %4160 = vmatprep.subr.mxu0 0.0
      %4161 = vmatpush1.msra.mxu0 0.0
      %4162 = vmatprep.subr.mxu0 0.0
      %4163 = vmatpush1.msra.mxu0 0.0
      %4164 = vmatprep.subr.mxu0 0.0
      %4165 = vmatpush1.msra.mxu0 0.0
      %4166 = vmatprep.subr.mxu0 0.0
      %4167 = vmatpush1.msra.mxu0 0.0
      %4168 = vmatprep.subr.mxu0 0.0
      %4169 = vmatpush1.msra.mxu0 0.0
      %4170 = vmatprep.subr.mxu0 0.0
      %4171 = vmatpush1.msra.mxu0 0.0
      %4172 = vmatprep.subr.mxu0 0.0
      %4173 = vmatpush1.msra.mxu0 0.0
      %4174 = vmatprep.subr.mxu0 0.0
      %4175 = vmatpush1.msra.mxu0 0.0
      %4176 = vmatprep.subr.mxu0 0.0
      %4177 = vmatpush1.msra.mxu0 0.0
      %4178 = vmatprep.subr.mxu0 0.0
      %4179 = vmatpush1.msra.mxu0 0.0
      %4180 = vmatprep.subr.mxu0 0.0
      %4181 = vmatpush1.msra.mxu0 0.0
      %4182 = vmatprep.subr.mxu0 0.0
      %4183 = vmatpush1.msra.mxu0 0.0
      %4184 = vmatprep.subr.mxu0 0.0
      %4185 = vmatpush1.msra.mxu0 0.0
      %4186 = vmatprep.subr.mxu0 0.0
      %4187 = vmatpush1.msra.mxu0 0.0
      %4188 = vmatprep.mubr.f32.mxu0 0.0
      %4189 = vmatmul.mubr.f32.gmra.mrb[0].mxu0 %v4122
      %v4190 = vpop.f32.mrb[0].mxu0
      %v4191 = vadd.f32 0.0, %v4190
      %v4192 = vpop.f32.mrb[0].mxu0
      %4193 = vdwg.mxu0
      %v4194 = vadd.f32 %v4119, %v4191
      %v4195 = vxor.u32 %v4194, 2147483648
      %v4196 = vmul.f32 %v4195, 1.442695
      %v4197 = vpow.pop %v4196
      %v4198 = vadd.f32 %v4197, 1.0
      %v4199 = vrcp.pop %v4198
      %v4200 = vmul.f32 1.0, %v4199
      %v4201 = vtanh.pop %v4194
      %v4202 = vmul.f32 %v4200, %v3939
      %4204 = vrot.lane.b32.xlu0 %v4201, 112
      %v4205 = vpop.permute.xlu0 %4204
      %v4207 = vmul.f32 %v4200, %v4205
      %4209 = vrot.lane.b32.xlu0 %v4207, 8
      %v4210 = vpop.permute.xlu0 %4209
      %v4212 = vadd.f32 %v4202, %v4210
      %v4213 = vtanh.pop %v4212
      %4215 = vrot.lane.b32.xlu0 %v4213, 16
      %v4216 = vpop.permute.xlu0 %4215
      %v4218 = vmul.f32 %v4200, %v4216
      %4220 = vrot.lane.b32.xlu0 %v4218, 104
      %v4221 = vpop.permute.xlu0 %4220
      %s4223 = scalar_lea.vmem [#allocation3], 40
      %4224 = vst.msk [vmem:[%s4223] sm:$0xff] %vm312, %v4221
      %4225 = vmatprep.subr.mxu0 0.0
      %4226 = vmatpush1.msra.mxu0 %v2581
      %4227 = vmatprep.subr.mxu0 0.0
      %4228 = vmatpush1.msra.mxu0 0.0
      %4229 = vmatprep.subr.mxu0 0.0
      %4230 = vmatpush1.msra.mxu0 0.0
      %4231 = vmatprep.subr.mxu0 0.0
      %4232 = vmatpush1.msra.mxu0 0.0
      %4233 = vmatprep.subr.mxu0 0.0
      %4234 = vmatpush1.msra.mxu0 0.0
      %4235 = vmatprep.subr.mxu0 0.0
      %4236 = vmatpush1.msra.mxu0 0.0
      %4237 = vmatprep.subr.mxu0 0.0
      %4238 = vmatpush1.msra.mxu0 0.0
      %4239 = vmatprep.subr.mxu0 0.0
      %4240 = vmatpush1.msra.mxu0 0.0
      %4241 = vmatprep.subr.mxu0 0.0
      %4242 = vmatpush1.msra.mxu0 0.0
      %4243 = vmatprep.subr.mxu0 0.0
      %4244 = vmatpush1.msra.mxu0 0.0
      %4245 = vmatprep.subr.mxu0 0.0
      %4246 = vmatpush1.msra.mxu0 0.0
      %4247 = vmatprep.subr.mxu0 0.0
      %4248 = vmatpush1.msra.mxu0 0.0
      %4249 = vmatprep.subr.mxu0 0.0
      %4250 = vmatpush1.msra.mxu0 0.0
      %4251 = vmatprep.subr.mxu0 0.0
      %4252 = vmatpush1.msra.mxu0 0.0
      %4253 = vmatprep.subr.mxu0 0.0
      %4254 = vmatpush1.msra.mxu0 0.0
      %4255 = vmatprep.subr.mxu0 0.0
      %4256 = vmatpush1.msra.mxu0 0.0
      %4257 = vmatprep.subr.mxu0 0.0
      %4258 = vmatpush1.msra.mxu0 0.0
      %4259 = vmatprep.subr.mxu0 0.0
      %4260 = vmatpush1.msra.mxu0 0.0
      %4261 = vmatprep.subr.mxu0 0.0
      %4262 = vmatpush1.msra.mxu0 0.0
      %4263 = vmatprep.subr.mxu0 0.0
      %4264 = vmatpush1.msra.mxu0 0.0
      %4265 = vmatprep.subr.mxu0 0.0
      %4266 = vmatpush1.msra.mxu0 0.0
      %4267 = vmatprep.subr.mxu0 0.0
      %4268 = vmatpush1.msra.mxu0 0.0
      %4269 = vmatprep.subr.mxu0 0.0
      %4270 = vmatpush1.msra.mxu0 0.0
      %4271 = vmatprep.subr.mxu0 0.0
      %4272 = vmatpush1.msra.mxu0 0.0
      %4273 = vmatprep.subr.mxu0 0.0
      %4274 = vmatpush1.msra.mxu0 0.0
      %4275 = vmatprep.subr.mxu0 0.0
      %4276 = vmatpush1.msra.mxu0 0.0
      %4277 = vmatprep.subr.mxu0 0.0
      %4278 = vmatpush1.msra.mxu0 0.0
      %4279 = vmatprep.subr.mxu0 0.0
      %4280 = vmatpush1.msra.mxu0 0.0
      %4281 = vmatprep.subr.mxu0 0.0
      %4282 = vmatpush1.msra.mxu0 0.0
      %4283 = vmatprep.subr.mxu0 0.0
      %4284 = vmatpush1.msra.mxu0 0.0
      %4285 = vmatprep.subr.mxu0 0.0
      %4286 = vmatpush1.msra.mxu0 0.0
      %4287 = vmatprep.subr.mxu0 0.0
      %4288 = vmatpush1.msra.mxu0 0.0
      %4289 = vmatprep.mubr.f32.mxu0 0.0
      %4290 = vmatmul.mubr.f32.gmra.mrb[0].mxu0 %v4050
      %v4291 = vpop.f32.mrb[0].mxu0
      %v4292 = vadd.f32 0.0, %v4291
      %v4293 = vpop.f32.mrb[0].mxu0
      %4294 = vdwg.mxu0
      %v4295 = vadd.f32 %v2577, %v4292
      %v4296 = vxor.u32 %v4295, 2147483648
      %v4297 = vmul.f32 %v4296, 1.442695
      %v4298 = vpow.pop %v4297
      %v4299 = vadd.f32 %v4298, 1.0
      %v4300 = vrcp.pop %v4299
      %v4301 = vmul.f32 1.0, %v4300
      %v4302 = vtanh.pop %v4295
      %v4303 = vmul.f32 %v4301, %v4040
      %4305 = vrot.lane.b32.xlu0 %v4302, 120
      %v4306 = vpop.permute.xlu0 %4305
      %v4308 = vmul.f32 %v4301, %v4306
      %4310 = vrot.lane.b32.xlu0 %v4308, 4
      %v4311 = vpop.permute.xlu0 %4310
      %v4313 = vadd.f32 %v4303, %v4311
      %v4314 = vtanh.pop %v4313
      %4316 = vrot.lane.b32.xlu0 %v4314, 8
      %v4317 = vpop.permute.xlu0 %4316
      %v4319 = vmul.f32 %v4301, %v4317
      %4321 = vrot.lane.b32.xlu0 %v4319, 116
      %v4322 = vpop.permute.xlu0 %4321
      %v4323 = vsel %vm490, %v4322, 0
      %4325 = vmatprep.subr.mxu0 0.0
      %4326 = vmatpush1.msra.mxu0 %v2688
      %4327 = vmatprep.subr.mxu0 0.0
      %4328 = vmatpush1.msra.mxu0 0.0
      %4329 = vmatprep.subr.mxu0 0.0
      %4330 = vmatpush1.msra.mxu0 0.0
      %4331 = vmatprep.subr.mxu0 0.0
      %4332 = vmatpush1.msra.mxu0 0.0
      %4333 = vmatprep.subr.mxu0 0.0
      %4334 = vmatpush1.msra.mxu0 0.0
      %4335 = vmatprep.subr.mxu0 0.0
      %4336 = vmatpush1.msra.mxu0 0.0
      %4337 = vmatprep.subr.mxu0 0.0
      %4338 = vmatpush1.msra.mxu0 0.0
      %4339 = vmatprep.subr.mxu0 0.0
      %4340 = vmatpush1.msra.mxu0 0.0
      %4341 = vmatprep.subr.mxu0 0.0
      %4342 = vmatpush1.msra.mxu0 0.0
      %4343 = vmatprep.subr.mxu0 0.0
      %4344 = vmatpush1.msra.mxu0 0.0
      %4345 = vmatprep.subr.mxu0 0.0
      %4346 = vmatpush1.msra.mxu0 0.0
      %4347 = vmatprep.subr.mxu0 0.0
      %4348 = vmatpush1.msra.mxu0 0.0
      %4349 = vmatprep.subr.mxu0 0.0
      %4350 = vmatpush1.msra.mxu0 0.0
      %4351 = vmatprep.subr.mxu0 0.0
      %4352 = vmatpush1.msra.mxu0 0.0
      %4353 = vmatprep.subr.mxu0 0.0
      %4354 = vmatpush1.msra.mxu0 0.0
      %4355 = vmatprep.subr.mxu0 0.0
      %4356 = vmatpush1.msra.mxu0 0.0
      %4357 = vmatprep.subr.mxu0 0.0
      %4358 = vmatpush1.msra.mxu0 0.0
      %4359 = vmatprep.subr.mxu0 0.0
      %4360 = vmatpush1.msra.mxu0 0.0
      %4361 = vmatprep.subr.mxu0 0.0
      %4362 = vmatpush1.msra.mxu0 0.0
      %4363 = vmatprep.subr.mxu0 0.0
      %4364 = vmatpush1.msra.mxu0 0.0
      %4365 = vmatprep.subr.mxu0 0.0
      %4366 = vmatpush1.msra.mxu0 0.0
      %4367 = vmatprep.subr.mxu0 0.0
      %4368 = vmatpush1.msra.mxu0 0.0
      %4369 = vmatprep.subr.mxu0 0.0
      %4370 = vmatpush1.msra.mxu0 0.0
      %4371 = vmatprep.subr.mxu0 0.0
      %4372 = vmatpush1.msra.mxu0 0.0
      %4373 = vmatprep.subr.mxu0 0.0
      %4374 = vmatpush1.msra.mxu0 0.0
      %4375 = vmatprep.subr.mxu0 0.0
      %4376 = vmatpush1.msra.mxu0 0.0
      %4377 = vmatprep.subr.mxu0 0.0
      %4378 = vmatpush1.msra.mxu0 0.0
      %4379 = vmatprep.subr.mxu0 0.0
      %4380 = vmatpush1.msra.mxu0 0.0
      %4381 = vmatprep.subr.mxu0 0.0
      %4382 = vmatpush1.msra.mxu0 0.0
      %4383 = vmatprep.subr.mxu0 0.0
      %4384 = vmatpush1.msra.mxu0 0.0
      %4385 = vmatprep.subr.mxu0 0.0
      %4386 = vmatpush1.msra.mxu0 0.0
      %4387 = vmatprep.subr.mxu0 0.0
      %4388 = vmatpush1.msra.mxu0 0.0
      %4389 = vmatprep.mubr.f32.mxu0 0.0
      %4390 = vmatmul.mubr.f32.gmra.mrb[0].mxu0 %v4323
      %v4391 = vpop.f32.mrb[0].mxu0
      %v4392 = vadd.f32 %v2681, %v4391
      %v4393 = vpop.f32.mrb[0].mxu0
      %4394 = vdwg.mxu0
      %v4395 = vsel %vm312, %v4221, 0
      %4397 = vmatprep.subr.mxu0 0.0
      %4398 = vmatpush1.msra.mxu0 %v187
      %4399 = vmatprep.subr.mxu0 0.0
      %4400 = vmatpush1.msra.mxu0 0.0
      %4401 = vmatprep.subr.mxu0 0.0
      %4402 = vmatpush1.msra.mxu0 0.0
      %4403 = vmatprep.subr.mxu0 0.0
      %4404 = vmatpush1.msra.mxu0 0.0
      %4405 = vmatprep.subr.mxu0 0.0
      %4406 = vmatpush1.msra.mxu0 0.0
      %4407 = vmatprep.subr.mxu0 0.0
      %4408 = vmatpush1.msra.mxu0 0.0
      %4409 = vmatprep.subr.mxu0 0.0
      %4410 = vmatpush1.msra.mxu0 0.0
      %4411 = vmatprep.subr.mxu0 0.0
      %4412 = vmatpush1.msra.mxu0 0.0
      %4413 = vmatprep.subr.mxu0 0.0
      %4414 = vmatpush1.msra.mxu0 0.0
      %4415 = vmatprep.subr.mxu0 0.0
      %4416 = vmatpush1.msra.mxu0 0.0
      %4417 = vmatprep.subr.mxu0 0.0
      %4418 = vmatpush1.msra.mxu0 0.0
      %4419 = vmatprep.subr.mxu0 0.0
      %4420 = vmatpush1.msra.mxu0 0.0
      %4421 = vmatprep.subr.mxu0 0.0
      %4422 = vmatpush1.msra.mxu0 0.0
      %4423 = vmatprep.subr.mxu0 0.0
      %4424 = vmatpush1.msra.mxu0 0.0
      %4425 = vmatprep.subr.mxu0 0.0
      %4426 = vmatpush1.msra.mxu0 0.0
      %4427 = vmatprep.subr.mxu0 0.0
      %4428 = vmatpush1.msra.mxu0 0.0
      %4429 = vmatprep.subr.mxu0 0.0
      %4430 = vmatpush1.msra.mxu0 0.0
      %4431 = vmatprep.subr.mxu0 0.0
      %4432 = vmatpush1.msra.mxu0 0.0
      %4433 = vmatprep.subr.mxu0 0.0
      %4434 = vmatpush1.msra.mxu0 0.0
      %4435 = vmatprep.subr.mxu0 0.0
      %4436 = vmatpush1.msra.mxu0 0.0
      %4437 = vmatprep.subr.mxu0 0.0
      %4438 = vmatpush1.msra.mxu0 0.0
      %4439 = vmatprep.subr.mxu0 0.0
      %4440 = vmatpush1.msra.mxu0 0.0
      %4441 = vmatprep.subr.mxu0 0.0
      %4442 = vmatpush1.msra.mxu0 0.0
      %4443 = vmatprep.subr.mxu0 0.0
      %4444 = vmatpush1.msra.mxu0 0.0
      %4445 = vmatprep.subr.mxu0 0.0
      %4446 = vmatpush1.msra.mxu0 0.0
      %4447 = vmatprep.subr.mxu0 0.0
      %4448 = vmatpush1.msra.mxu0 0.0
      %4449 = vmatprep.subr.mxu0 0.0
      %4450 = vmatpush1.msra.mxu0 0.0
      %4451 = vmatprep.subr.mxu0 0.0
      %4452 = vmatpush1.msra.mxu0 0.0
      %4453 = vmatprep.subr.mxu0 0.0
      %4454 = vmatpush1.msra.mxu0 0.0
      %4455 = vmatprep.subr.mxu0 0.0
      %4456 = vmatpush1.msra.mxu0 0.0
      %4457 = vmatprep.subr.mxu0 0.0
      %4458 = vmatpush1.msra.mxu0 0.0
      %4459 = vmatprep.subr.mxu0 0.0
      %4460 = vmatpush1.msra.mxu0 0.0
      %4461 = vmatprep.mubr.f32.mxu0 0.0
      %4462 = vmatmul.mubr.f32.gmra.mrb[0].mxu0 %v4395
      %v4463 = vpop.f32.mrb[0].mxu0
      %v4464 = vadd.f32 0.0, %v4463
      %v4465 = vpop.f32.mrb[0].mxu0
      %4466 = vdwg.mxu0
      %v4467 = vadd.f32 %v4392, %v4464
      %v4468 = vxor.u32 %v4467, 2147483648
      %v4469 = vmul.f32 %v4468, 1.442695
      %v4470 = vpow.pop %v4469
      %v4471 = vadd.f32 %v4470, 1.0
      %v4472 = vrcp.pop %v4471
      %v4473 = vmul.f32 1.0, %v4472
      %v4474 = vtanh.pop %v4467
      %v4475 = vmul.f32 %v4473, %v4212
      %4477 = vrot.lane.b32.xlu0 %v4474, 112
      %v4478 = vpop.permute.xlu0 %4477
      %v4480 = vmul.f32 %v4473, %v4478
      %4482 = vrot.lane.b32.xlu0 %v4480, 8
      %v4483 = vpop.permute.xlu0 %4482
      %v4485 = vadd.f32 %v4475, %v4483
      %v4486 = vtanh.pop %v4485
      %4488 = vrot.lane.b32.xlu0 %v4486, 16
      %v4489 = vpop.permute.xlu0 %4488
      %v4491 = vmul.f32 %v4473, %v4489
      %4493 = vrot.lane.b32.xlu0 %v4491, 104
      %v4494 = vpop.permute.xlu0 %4493
      %s4496 = scalar_lea.vmem [#allocation3], 48
      %4497 = vst.msk [vmem:[%s4496] sm:$0xff] %vm312, %v4494
      %4498 = vmatprep.subr.mxu0 0.0
      %4499 = vmatpush1.msra.mxu0 %v2581
      %4500 = vmatprep.subr.mxu0 0.0
      %4501 = vmatpush1.msra.mxu0 0.0
      %4502 = vmatprep.subr.mxu0 0.0
      %4503 = vmatpush1.msra.mxu0 0.0
      %4504 = vmatprep.subr.mxu0 0.0
      %4505 = vmatpush1.msra.mxu0 0.0
      %4506 = vmatprep.subr.mxu0 0.0
      %4507 = vmatpush1.msra.mxu0 0.0
      %4508 = vmatprep.subr.mxu0 0.0
      %4509 = vmatpush1.msra.mxu0 0.0
      %4510 = vmatprep.subr.mxu0 0.0
      %4511 = vmatpush1.msra.mxu0 0.0
      %4512 = vmatprep.subr.mxu0 0.0
      %4513 = vmatpush1.msra.mxu0 0.0
      %4514 = vmatprep.subr.mxu0 0.0
      %4515 = vmatpush1.msra.mxu0 0.0
      %4516 = vmatprep.subr.mxu0 0.0
      %4517 = vmatpush1.msra.mxu0 0.0
      %4518 = vmatprep.subr.mxu0 0.0
      %4519 = vmatpush1.msra.mxu0 0.0
      %4520 = vmatprep.subr.mxu0 0.0
      %4521 = vmatpush1.msra.mxu0 0.0
      %4522 = vmatprep.subr.mxu0 0.0
      %4523 = vmatpush1.msra.mxu0 0.0
      %4524 = vmatprep.subr.mxu0 0.0
      %4525 = vmatpush1.msra.mxu0 0.0
      %4526 = vmatprep.subr.mxu0 0.0
      %4527 = vmatpush1.msra.mxu0 0.0
      %4528 = vmatprep.subr.mxu0 0.0
      %4529 = vmatpush1.msra.mxu0 0.0
      %4530 = vmatprep.subr.mxu0 0.0
      %4531 = vmatpush1.msra.mxu0 0.0
      %4532 = vmatprep.subr.mxu0 0.0
      %4533 = vmatpush1.msra.mxu0 0.0
      %4534 = vmatprep.subr.mxu0 0.0
      %4535 = vmatpush1.msra.mxu0 0.0
      %4536 = vmatprep.subr.mxu0 0.0
      %4537 = vmatpush1.msra.mxu0 0.0
      %4538 = vmatprep.subr.mxu0 0.0
      %4539 = vmatpush1.msra.mxu0 0.0
      %4540 = vmatprep.subr.mxu0 0.0
      %4541 = vmatpush1.msra.mxu0 0.0
      %4542 = vmatprep.subr.mxu0 0.0
      %4543 = vmatpush1.msra.mxu0 0.0
      %4544 = vmatprep.subr.mxu0 0.0
      %4545 = vmatpush1.msra.mxu0 0.0
      %4546 = vmatprep.subr.mxu0 0.0
      %4547 = vmatpush1.msra.mxu0 0.0
      %4548 = vmatprep.subr.mxu0 0.0
      %4549 = vmatpush1.msra.mxu0 0.0
      %4550 = vmatprep.subr.mxu0 0.0
      %4551 = vmatpush1.msra.mxu0 0.0
      %4552 = vmatprep.subr.mxu0 0.0
      %4553 = vmatpush1.msra.mxu0 0.0
      %4554 = vmatprep.subr.mxu0 0.0
      %4555 = vmatpush1.msra.mxu0 0.0
      %4556 = vmatprep.subr.mxu0 0.0
      %4557 = vmatpush1.msra.mxu0 0.0
      %4558 = vmatprep.subr.mxu0 0.0
      %4559 = vmatpush1.msra.mxu0 0.0
      %4560 = vmatprep.subr.mxu0 0.0
      %4561 = vmatpush1.msra.mxu0 0.0
      %4562 = vmatprep.mubr.f32.mxu0 0.0
      %4563 = vmatmul.mubr.f32.gmra.mrb[0].mxu0 %v4323
      %v4564 = vpop.f32.mrb[0].mxu0
      %v4565 = vadd.f32 0.0, %v4564
      %v4566 = vpop.f32.mrb[0].mxu0
      %4567 = vdwg.mxu0
      %v4568 = vadd.f32 %v2577, %v4565
      %v4569 = vxor.u32 %v4568, 2147483648
      %v4570 = vmul.f32 %v4569, 1.442695
      %v4571 = vpow.pop %v4570
      %v4572 = vadd.f32 %v4571, 1.0
      %v4573 = vrcp.pop %v4572
      %v4574 = vmul.f32 1.0, %v4573
      %v4575 = vtanh.pop %v4568
      %v4576 = vmul.f32 %v4574, %v4313
      %4578 = vrot.lane.b32.xlu0 %v4575, 120
      %v4579 = vpop.permute.xlu0 %4578
      %v4581 = vmul.f32 %v4574, %v4579
      %4583 = vrot.lane.b32.xlu0 %v4581, 4
      %v4584 = vpop.permute.xlu0 %4583
      %v4586 = vadd.f32 %v4576, %v4584
      %v4587 = vtanh.pop %v4586
      %4589 = vrot.lane.b32.xlu0 %v4587, 8
      %v4590 = vpop.permute.xlu0 %4589
      %v4592 = vmul.f32 %v4574, %v4590
      %4594 = vrot.lane.b32.xlu0 %v4592, 116
      %v4595 = vpop.permute.xlu0 %4594
      %v4596 = vsel %vm490, %v4595, 0
      %4598 = vmatprep.subr.mxu0 0.0
      %4599 = vmatpush1.msra.mxu0 %v2688
      %4600 = vmatprep.subr.mxu0 0.0
      %4601 = vmatpush1.msra.mxu0 0.0
      %4602 = vmatprep.subr.mxu0 0.0
      %4603 = vmatpush1.msra.mxu0 0.0
      %4604 = vmatprep.subr.mxu0 0.0
      %4605 = vmatpush1.msra.mxu0 0.0
      %4606 = vmatprep.subr.mxu0 0.0
      %4607 = vmatpush1.msra.mxu0 0.0
      %4608 = vmatprep.subr.mxu0 0.0
      %4609 = vmatpush1.msra.mxu0 0.0
      %4610 = vmatprep.subr.mxu0 0.0
      %4611 = vmatpush1.msra.mxu0 0.0
      %4612 = vmatprep.subr.mxu0 0.0
      %4613 = vmatpush1.msra.mxu0 0.0
      %4614 = vmatprep.subr.mxu0 0.0
      %4615 = vmatpush1.msra.mxu0 0.0
      %4616 = vmatprep.subr.mxu0 0.0
      %4617 = vmatpush1.msra.mxu0 0.0
      %4618 = vmatprep.subr.mxu0 0.0
      %4619 = vmatpush1.msra.mxu0 0.0
      %4620 = vmatprep.subr.mxu0 0.0
      %4621 = vmatpush1.msra.mxu0 0.0
      %4622 = vmatprep.subr.mxu0 0.0
      %4623 = vmatpush1.msra.mxu0 0.0
      %4624 = vmatprep.subr.mxu0 0.0
      %4625 = vmatpush1.msra.mxu0 0.0
      %4626 = vmatprep.subr.mxu0 0.0
      %4627 = vmatpush1.msra.mxu0 0.0
      %4628 = vmatprep.subr.mxu0 0.0
      %4629 = vmatpush1.msra.mxu0 0.0
      %4630 = vmatprep.subr.mxu0 0.0
      %4631 = vmatpush1.msra.mxu0 0.0
      %4632 = vmatprep.subr.mxu0 0.0
      %4633 = vmatpush1.msra.mxu0 0.0
      %4634 = vmatprep.subr.mxu0 0.0
      %4635 = vmatpush1.msra.mxu0 0.0
      %4636 = vmatprep.subr.mxu0 0.0
      %4637 = vmatpush1.msra.mxu0 0.0
      %4638 = vmatprep.subr.mxu0 0.0
      %4639 = vmatpush1.msra.mxu0 0.0
      %4640 = vmatprep.subr.mxu0 0.0
      %4641 = vmatpush1.msra.mxu0 0.0
      %4642 = vmatprep.subr.mxu0 0.0
      %4643 = vmatpush1.msra.mxu0 0.0
      %4644 = vmatprep.subr.mxu0 0.0
      %4645 = vmatpush1.msra.mxu0 0.0
      %4646 = vmatprep.subr.mxu0 0.0
      %4647 = vmatpush1.msra.mxu0 0.0
      %4648 = vmatprep.subr.mxu0 0.0
      %4649 = vmatpush1.msra.mxu0 0.0
      %4650 = vmatprep.subr.mxu0 0.0
      %4651 = vmatpush1.msra.mxu0 0.0
      %4652 = vmatprep.subr.mxu0 0.0
      %4653 = vmatpush1.msra.mxu0 0.0
      %4654 = vmatprep.subr.mxu0 0.0
      %4655 = vmatpush1.msra.mxu0 0.0
      %4656 = vmatprep.subr.mxu0 0.0
      %4657 = vmatpush1.msra.mxu0 0.0
      %4658 = vmatprep.subr.mxu0 0.0
      %4659 = vmatpush1.msra.mxu0 0.0
      %4660 = vmatprep.subr.mxu0 0.0
      %4661 = vmatpush1.msra.mxu0 0.0
      %4662 = vmatprep.mubr.f32.mxu0 0.0
      %4663 = vmatmul.mubr.f32.gmra.mrb[0].mxu0 %v4596
      %v4664 = vpop.f32.mrb[0].mxu0
      %v4665 = vadd.f32 %v2681, %v4664
      %v4666 = vpop.f32.mrb[0].mxu0
      %4667 = vdwg.mxu0
      %v4668 = vsel %vm312, %v4494, 0
      %4670 = vmatprep.subr.mxu0 0.0
      %4671 = vmatpush1.msra.mxu0 %v187
      %4672 = vmatprep.subr.mxu0 0.0
      %4673 = vmatpush1.msra.mxu0 0.0
      %4674 = vmatprep.subr.mxu0 0.0
      %4675 = vmatpush1.msra.mxu0 0.0
      %4676 = vmatprep.subr.mxu0 0.0
      %4677 = vmatpush1.msra.mxu0 0.0
      %4678 = vmatprep.subr.mxu0 0.0
      %4679 = vmatpush1.msra.mxu0 0.0
      %4680 = vmatprep.subr.mxu0 0.0
      %4681 = vmatpush1.msra.mxu0 0.0
      %4682 = vmatprep.subr.mxu0 0.0
      %4683 = vmatpush1.msra.mxu0 0.0
      %4684 = vmatprep.subr.mxu0 0.0
      %4685 = vmatpush1.msra.mxu0 0.0
      %4686 = vmatprep.subr.mxu0 0.0
      %4687 = vmatpush1.msra.mxu0 0.0
      %4688 = vmatprep.subr.mxu0 0.0
      %4689 = vmatpush1.msra.mxu0 0.0
      %4690 = vmatprep.subr.mxu0 0.0
      %4691 = vmatpush1.msra.mxu0 0.0
      %4692 = vmatprep.subr.mxu0 0.0
      %4693 = vmatpush1.msra.mxu0 0.0
      %4694 = vmatprep.subr.mxu0 0.0
      %4695 = vmatpush1.msra.mxu0 0.0
      %4696 = vmatprep.subr.mxu0 0.0
      %4697 = vmatpush1.msra.mxu0 0.0
      %4698 = vmatprep.subr.mxu0 0.0
      %4699 = vmatpush1.msra.mxu0 0.0
      %4700 = vmatprep.subr.mxu0 0.0
      %4701 = vmatpush1.msra.mxu0 0.0
      %4702 = vmatprep.subr.mxu0 0.0
      %4703 = vmatpush1.msra.mxu0 0.0
      %4704 = vmatprep.subr.mxu0 0.0
      %4705 = vmatpush1.msra.mxu0 0.0
      %4706 = vmatprep.subr.mxu0 0.0
      %4707 = vmatpush1.msra.mxu0 0.0
      %4708 = vmatprep.subr.mxu0 0.0
      %4709 = vmatpush1.msra.mxu0 0.0
      %4710 = vmatprep.subr.mxu0 0.0
      %4711 = vmatpush1.msra.mxu0 0.0
      %4712 = vmatprep.subr.mxu0 0.0
      %4713 = vmatpush1.msra.mxu0 0.0
      %4714 = vmatprep.subr.mxu0 0.0
      %4715 = vmatpush1.msra.mxu0 0.0
      %4716 = vmatprep.subr.mxu0 0.0
      %4717 = vmatpush1.msra.mxu0 0.0
      %4718 = vmatprep.subr.mxu0 0.0
      %4719 = vmatpush1.msra.mxu0 0.0
      %4720 = vmatprep.subr.mxu0 0.0
      %4721 = vmatpush1.msra.mxu0 0.0
      %4722 = vmatprep.subr.mxu0 0.0
      %4723 = vmatpush1.msra.mxu0 0.0
      %4724 = vmatprep.subr.mxu0 0.0
      %4725 = vmatpush1.msra.mxu0 0.0
      %4726 = vmatprep.subr.mxu0 0.0
      %4727 = vmatpush1.msra.mxu0 0.0
      %4728 = vmatprep.subr.mxu0 0.0
      %4729 = vmatpush1.msra.mxu0 0.0
      %4730 = vmatprep.subr.mxu0 0.0
      %4731 = vmatpush1.msra.mxu0 0.0
      %4732 = vmatprep.subr.mxu0 0.0
      %4733 = vmatpush1.msra.mxu0 0.0
      %4734 = vmatprep.mubr.f32.mxu0 0.0
      %4735 = vmatmul.mubr.f32.gmra.mrb[0].mxu0 %v4668
      %v4736 = vpop.f32.mrb[0].mxu0
      %v4737 = vadd.f32 0.0, %v4736
      %v4738 = vpop.f32.mrb[0].mxu0
      %4739 = vdwg.mxu0
      %v4740 = vadd.f32 %v4665, %v4737
      %v4741 = vxor.u32 %v4740, 2147483648
      %v4742 = vmul.f32 %v4741, 1.442695
      %v4743 = vpow.pop %v4742
      %v4744 = vadd.f32 %v4743, 1.0
      %v4745 = vrcp.pop %v4744
      %v4746 = vmul.f32 1.0, %v4745
      %v4747 = vtanh.pop %v4740
      %v4748 = vmul.f32 %v4746, %v4485
      %4750 = vrot.lane.b32.xlu0 %v4747, 112
      %v4751 = vpop.permute.xlu0 %4750
      %v4753 = vmul.f32 %v4746, %v4751
      %4755 = vrot.lane.b32.xlu0 %v4753, 8
      %v4756 = vpop.permute.xlu0 %4755
      %v4758 = vadd.f32 %v4748, %v4756
      %v4759 = vtanh.pop %v4758
      %4761 = vrot.lane.b32.xlu0 %v4759, 16
      %v4762 = vpop.permute.xlu0 %4761
      %v4764 = vmul.f32 %v4746, %v4762
      %4766 = vrot.lane.b32.xlu0 %v4764, 104
      %v4767 = vpop.permute.xlu0 %4766
      %s4769 = scalar_lea.vmem [#allocation3], 56
      %4770 = vst.msk [vmem:[%s4769] sm:$0xff] %vm312, %v4767
      %v4771 = vld [vmem:[%s1 + $0x60] sm:$0x1]
      %v4772 = vld [vmem:[#allocation3] sm:$0xff]
      %v4773 = vld [vmem:[#allocation3 + $0x8] sm:$0xff]
      %v4774 = vld [vmem:[#allocation3 + $0x10] sm:$0xff]
      %v4775 = vld [vmem:[#allocation3 + $0x18] sm:$0xff]
      %v4776 = vld [vmem:[#allocation3 + $0x20] sm:$0xff]
      %v4777 = vld [vmem:[#allocation3 + $0x28] sm:$0xff]
      %v4778 = vld [vmem:[#allocation3 + $0x30] sm:$0xff]
      %v4779 = vld [vmem:[#allocation3 + $0x38] sm:$0xff]
      %v4780 = vlaneseq
      %v4781 = vshrl.u32 %v4780, 7
      %v4782 = vsub.s32 0, %v4781
      %v4783 = vrot.slane %v4771, %v4782
      %v4784 = vmul.f32 %v4772, %v4783
      %v4785 = vmul.f32 %v4773, %v4783
      %v4786 = vmul.f32 %v4774, %v4783
      %v4787 = vmul.f32 %v4775, %v4783
      %v4788 = vmul.f32 %v4776, %v4783
      %v4789 = vmul.f32 %v4777, %v4783
      %v4790 = vmul.f32 %v4778, %v4783
      %v4791 = vmul.f32 %v4779, %v4783
      %v4792 = vsel %vm312, %v4784, 0.0
      %4793 = vadd.xlane.f32.xlu0 %v4792
      %v4794 = vpop.xlane.xlu0 %4793
      %v4795 = vsel %vm312, %v4785, 0.0
      %4796 = vadd.xlane.f32.xlu0 %v4795
      %v4797 = vpop.xlane.xlu0 %4796
      %v4798 = vsel %vm312, %v4786, 0.0
      %4799 = vadd.xlane.f32.xlu0 %v4798
      %v4800 = vpop.xlane.xlu0 %4799
      %v4801 = vsel %vm312, %v4787, 0.0
      %4802 = vadd.xlane.f32.xlu0 %v4801
      %v4803 = vpop.xlane.xlu0 %4802
      %v4804 = vsel %vm312, %v4788, 0.0
      %4805 = vadd.xlane.f32.xlu0 %v4804
      %v4806 = vpop.xlane.xlu0 %4805
      %v4807 = vsel %vm312, %v4789, 0.0
      %4808 = vadd.xlane.f32.xlu0 %v4807
      %v4809 = vpop.xlane.xlu0 %4808
      %v4810 = vsel %vm312, %v4790, 0.0
      %4811 = vadd.xlane.f32.xlu0 %v4810
      %v4812 = vpop.xlane.xlu0 %4811
      %v4813 = vsel %vm312, %v4791, 0.0
      %4814 = vadd.xlane.f32.xlu0 %v4813
      %v4815 = vpop.xlane.xlu0 %4814
      %v4824 = vlaneseq
      %v4825 = vand.u32 %v4824, 127
      %v4826 = vlaneseq
      %v4827 = vshrl.u32 %v4826, 7
      %v4828 = vsub.s32 %v4825, %v4827
      %v4829 = vrot.slane %v4794, %v4828
      %v4830 = vlaneseq
      %v4831 = vshrl.u32 %v4830, 7
      %v4832 = vsub.s32 %v4825, %v4831
      %v4833 = vrot.slane %v4797, %v4832
      %v4834 = vlaneseq
      %v4835 = vshrl.u32 %v4834, 7
      %v4836 = vsub.s32 %v4825, %v4835
      %v4837 = vrot.slane %v4800, %v4836
      %v4838 = vlaneseq
      %v4839 = vshrl.u32 %v4838, 7
      %v4840 = vsub.s32 %v4825, %v4839
      %v4841 = vrot.slane %v4803, %v4840
      %v4842 = vlaneseq
      %v4843 = vshrl.u32 %v4842, 7
      %v4844 = vsub.s32 %v4825, %v4843
      %v4845 = vrot.slane %v4806, %v4844
      %v4846 = vlaneseq
      %v4847 = vshrl.u32 %v4846, 7
      %v4848 = vsub.s32 %v4825, %v4847
      %v4849 = vrot.slane %v4809, %v4848
      %v4850 = vlaneseq
      %v4851 = vshrl.u32 %v4850, 7
      %v4852 = vsub.s32 %v4825, %v4851
      %v4853 = vrot.slane %v4812, %v4852
      %v4854 = vlaneseq
      %v4855 = vshrl.u32 %v4854, 7
      %v4856 = vsub.s32 %v4825, %v4855
      %v4857 = vrot.slane %v4815, %v4856
      %vm4858 = vcmask 1041409
      %v4859 = vsel %vm4858, %v4833, %v4829
      %vm4860 = vcmask 1042434
      %v4861 = vsel %vm4860, %v4837, %v4859
      %vm4862 = vcmask 1043459
      %v4863 = vsel %vm4862, %v4841, %v4861
      %vm4864 = vcmask 1044484
      %v4865 = vsel %vm4864, %v4845, %v4863
      %vm4866 = vcmask 1045509
      %v4867 = vsel %vm4866, %v4849, %v4865
      %vm4868 = vcmask 1046534
      %v4869 = vsel %vm4868, %v4853, %v4867
      %vm4870 = vcmask 1047559
      %v4871 = vsel %vm4870, %v4857, %v4869
      %4873 = vxpose.xlu0.b32.start [1/16] %v4871, 128
      %4874 = vxpose.xlu0.b32.cont [2/16] 0.0, 128
      %4875 = vxpose.xlu0.b32.cont [3/16] 0.0, 128
      %4876 = vxpose.xlu0.b32.cont [4/16] 0.0, 128
      %4877 = vxpose.xlu0.b32.cont [5/16] 0.0, 128
      %4878 = vxpose.xlu0.b32.cont [6/16] 0.0, 128
      %4879 = vxpose.xlu0.b32.cont [7/16] 0.0, 128
      %4880 = vxpose.xlu0.b32.cont [8/16] 0.0, 128
      %4881 = vxpose.xlu0.b32.cont [9/16] 0.0, 128
      %4882 = vxpose.xlu0.b32.cont [10/16] 0.0, 128
      %4883 = vxpose.xlu0.b32.cont [11/16] 0.0, 128
      %4884 = vxpose.xlu0.b32.cont [12/16] 0.0, 128
      %4885 = vxpose.xlu0.b32.cont [13/16] 0.0, 128
      %4886 = vxpose.xlu0.b32.cont [14/16] 0.0, 128
      %4887 = vxpose.xlu0.b32.cont [15/16] 0.0, 128
      %4888 = vxpose.xlu0.b32.end [16/16] 0.0, 128
      %v4889 = vpop.trf.xlu0
      %v4890 = vpop.trf.xlu0
      %v4891 = vpop.trf.xlu0
      %v4892 = vpop.trf.xlu0
      %v4893 = vpop.trf.xlu0
      %v4894 = vpop.trf.xlu0
      %v4895 = vpop.trf.xlu0
      %v4896 = vpop.trf.xlu0
      %v4897 = vpop.trf.xlu0
      %v4898 = vpop.trf.xlu0
      %v4899 = vpop.trf.xlu0
      %v4900 = vpop.trf.xlu0
      %v4901 = vpop.trf.xlu0
      %v4902 = vpop.trf.xlu0
      %v4903 = vpop.trf.xlu0
      %v4904 = vpop.trf.xlu0
      %4906 = vrot.lane.b32.xlu0 %v4771, 120
      %v4907 = vpop.permute.xlu0 %4906
      %s4908 = vtos %v4907
      %v4909 = vstv %s4908
      %v4911 = vadd.f32 %v4889, %v4909
      %4912 = vst.msk [vmem:[%s172] sm:$0xff] %vm312, %v4911
      %p4913 = scmp.lt.s32.totalorder %s15, 1
      %s4914 = scalar_select %p4913, %s15, 1
      %s4915 = smul.addr %s4914, 8
      %s4916 = scalar_lea.vmem %s2, %s4915
      %p4917 = scmp.lt.s32.totalorder %s15, 1
      %s4918 = scalar_select %p4917, %s15, 1
      %s4919 = smul.addr %s4918, 8
      %s4920 = scalar_lea.vmem %s3, %s4919
      // Predicated region
      $region29: #{autoencoder_rnn_forward.1} parent=27 // pred_check
        %p4921 = pneg %p80
      $region30: #{autoencoder_rnn_forward.1} parent=27 // pred_check_branch
        %4923 = sbr.rel (%p4921) target = $region32
      $region31: #{autoencoder_rnn_forward.1} parent=27 // pred_region
        _
      $region32: #{autoencoder_rnn_forward.1} parent=27 // pred_fallthru
        _
      // Predicated region
      $region33: #{autoencoder_rnn_forward.1} parent=27 // pred_check
        %p4924 = pneg %p106
      $region34: #{autoencoder_rnn_forward.1} parent=27 // pred_check_branch
        %4926 = sbr.rel (%p4924) target = $region36
      $region35: #{autoencoder_rnn_forward.1} parent=27 // pred_region
        _
      $region36: #{autoencoder_rnn_forward.1} parent=27 // pred_fallthru
        _
    $region28: #{autoencoder_rnn_forward.1} parent=5 // pred_fallthru
      _
    %p4927 = scmp.le.s32.totalorder 2, %s10
    // Predicated region
    $region37: #{autoencoder_rnn_forward.1} parent=5 // pred_check
      %p4928 = pneg %p4927
    $region38: #{autoencoder_rnn_forward.1} parent=5 // pred_check_branch
      %4930 = sbr.rel (%p4928) target = $region40
    $region39: #{autoencoder_rnn_forward.1} parent=5 // pred_region
      %s4931 = ssub.s32 %s10, 2
      // Predicated region
      $region41: #{autoencoder_rnn_forward.1} parent=39 // pred_check
        %p4932 = pneg %p86
      $region42: #{autoencoder_rnn_forward.1} parent=39 // pred_check_branch
        %4934 = sbr.rel (%p4932) target = $region44
      $region43: #{autoencoder_rnn_forward.1} parent=39 // pred_region
        %p4935 = scmp.lt.s32.totalorder %s16, 1
        %s4936 = scalar_select %p4935, %s16, 1
        %s4937 = smul.addr %s4936, 8
        %s4938 = scalar_lea.vmem %s2, %s4937
      $region44: #{autoencoder_rnn_forward.1} parent=39 // pred_fallthru
        _
      // Predicated region
      $region45: #{autoencoder_rnn_forward.1} parent=39 // pred_check
        %p4939 = pneg %p112
      $region46: #{autoencoder_rnn_forward.1} parent=39 // pred_check_branch
        %4941 = sbr.rel (%p4939) target = $region48
      $region47: #{autoencoder_rnn_forward.1} parent=39 // pred_region
        %p4942 = scmp.lt.s32.totalorder %s16, 1
        %s4943 = scalar_select %p4942, %s16, 1
        %s4944 = smul.addr %s4943, 8
        %s4945 = scalar_lea.vmem %s3, %s4944
      $region48: #{autoencoder_rnn_forward.1} parent=39 // pred_fallthru
        _
    $region40: #{autoencoder_rnn_forward.1} parent=5 // pred_fallthru
      _
  $region6: #{autoencoder_rnn_forward.1} parent=0 // loop_footer
    %s14 = sadd.s32 1, %s10
  $region7: #{autoencoder_rnn_forward.1} parent=0 // loop_footer_branch
    %9 = sbr.rel target = $region3
  $region8: #{autoencoder_rnn_forward.1} parent=0 // loop_exit
    _

</llo_original>
